<compile_context>
chip_gen: v7x
topology: tpu7x:2x2x1
jax: 0.10.0
libtpu: 0.0.40
codegen_flags: <defaults>
</compile_context>

<pallas_src>
from functools import partial

import numpy as np

import jax
import jax.numpy as jnp
from jax.experimental import pallas as pl
from jax.experimental.pallas import tpu as pltpu


# ----------------------------------------------------------------------------
# Tiny constant operators (built once, at trace time, with numpy)
# ----------------------------------------------------------------------------
def _tap_masks(H, W):
    """mask[t, h*W+w] = 1 if the 3x3/p1 tap t=(ky*3+kx) reads a valid (non-pad)
    input for output position (h, w)."""
    M = np.zeros((9, H * W), np.float32)
    for ky in range(3):
        for kx in range(3):
            t = ky * 3 + kx
            for h in range(H):
                if not (0 <= h + ky - 1 < H):
                    continue
                for w in range(W):
                    if not (0 <= w + kx - 1 < W):
                        continue
                    M[t, h * W + w] = 1.0
    return M


def _downsample_select(H, W):
    """D (H*W, H*W/4): y_s2 = y_s1 @ D  (keep even rows/cols — exactly the
    stride-2 conv output when y_s1 is the stride-1 conv output)."""
    Ho, Wo = H // 2, W // 2
    D = np.zeros((H * W, Ho * Wo), np.float32)
    for ho in range(Ho):
        for wo in range(Wo):
            D[(2 * ho) * W + 2 * wo, ho * Wo + wo] = 1.0
    return D


def _upsample_select(H, W):
    """U (H*W, 4*H*W): zero-insertion upsample (x at even positions of the
    2H x 2W grid).  ConvT(k3,s2,p1,op1) == conv3x3(s1,p1) of this with the
    spatially flipped kernel."""
    Ho, Wo = 2 * H, 2 * W
    U = np.zeros((H * W, Ho * Wo), np.float32)
    for hi in range(H):
        for wi in range(W):
            U[hi * W + wi, (2 * hi) * Wo + 2 * wi] = 1.0
    return U


# ----------------------------------------------------------------------------
# In-kernel helpers
# ----------------------------------------------------------------------------
def _in_prelu(y, alpha):
    """InstanceNorm (affine=False, eps=1e-5) over lanes + PReLU (two-pass var)."""
    inv_n = 1.0 / y.shape[1]
    mean = jnp.sum(y, axis=1, keepdims=True) * inv_n
    cen = y - mean
    var = jnp.sum(cen * cen, axis=1, keepdims=True) * inv_n
    yn = cen * jax.lax.rsqrt(var + 1e-5)
    return jnp.where(yn >= 0.0, yn, alpha * yn)


def _conv3x3(x, cin, width, pad, xp_ref, x9_ref, mask_ref, w_ref):
    """3x3 / stride-1 / pad-1 conv in channels-major (C, H*W) layout.

    Stages x into a zero-padded buffer, builds the 9-tap K-stacked operand
    X9 (9*Cin, R) with static lane-slice shifts + 0/1 boundary masks, and
    feeds the MXU with ONE (Cout, 9*Cin) @ (9*Cin, R) matmul (bias not added
    here)."""
    r = x.shape[1]
    xp_ref[0:cin, pad:pad + r] = x
    for ky in range(3):
        for kx in range(3):
            t = ky * 3 + kx
            d = (ky - 1) * width + (kx - 1)
            sh = xp_ref[0:cin, pad + d:pad + d + r]          # shifted tap (zeros in halo)
            x9_ref[t * cin:(t + 1) * cin, :] = sh * mask_ref[t:t + 1, :]
    return jnp.dot(w_ref[...], x9_ref[...], preferred_element_type=jnp.float32)


# ----------------------------------------------------------------------------
# Fused Pallas kernel: whole network, one sample per grid step
# ----------------------------------------------------------------------------
def _autoencoder_kernel(H, W,
                        x_ref,
                        m_full_ref, m_half_ref, d1_ref, d2_ref, u1_ref, u2_ref,
                        fw_ref, fb_ref, e0w_ref, e0b_ref, e1w_ref, e1b_ref,
                        d0tw_ref, d0tb_ref, d0rw_ref, d0rb_ref,
                        d1tw_ref, d1tb_ref, d1rw_ref, d1rb_ref,
                        alpha_ref,
                        o_ref,
                        xp_full, xp_half, x9a, x9b, x9c, x9d):
    Wf, Wh = W, W // 2
    pf, ph = W + 1, W // 2 + 1

    # Zero the padded staging buffers so halo lanes are exactly 0 (and never NaN).
    xp_full[...] = jnp.zeros(xp_full.shape, xp_full.dtype)
    xp_half[...] = jnp.zeros(xp_half.shape, xp_half.dtype)

    a0, a1, a2, a3, a4 = (alpha_ref[0], alpha_ref[1], alpha_ref[2],
                          alpha_ref[3], alpha_ref[4])

    x0 = x_ref[0]                                                   # (4, R)

    # first_conv: Conv2d(4->8, 3x3, s=1, p=1)
    # TODO(synk): the reference passes norm=INSTANCE / act='PRELU' kwargs to a
    # raw nn.Conv2d (which does not accept them); treated as a plain conv.
    x1 = _conv3x3(x0, 4, Wf, pf, xp_full, x9a, m_full_ref, fw_ref) + fb_ref[...]

    # encode 0: ResidualUnit(8->8, stride 2) — main & residual convs fused (Cout 16)
    y = _conv3x3(x1, 8, Wf, pf, xp_full, x9b, m_full_ref, e0w_ref)          # (16, R)
    y = jnp.dot(y, d1_ref[...], preferred_element_type=jnp.float32) + e0b_ref[...]
    x2 = _in_prelu(y[0:8], a0) + y[8:16]                                    # (8, R/4)

    # encode 1: ResidualUnit(8->16, stride 2) — fused (Cout 32)
    y = _conv3x3(x2, 8, Wh, ph, xp_half, x9c, m_half_ref, e1w_ref)          # (32, R/4)
    y = jnp.dot(y, d2_ref[...], preferred_element_type=jnp.float32) + e1b_ref[...]
    x3 = _in_prelu(y[0:16], a1) + y[16:32]                                  # (16, R/16)

    # decode 0: ConvT(16->8, s2) + IN + PReLU  (zero-insert upsample, flipped kernel)
    z = jnp.dot(x3, u1_ref[...], preferred_element_type=jnp.float32)        # (16, R/4)
    x4 = _in_prelu(_conv3x3(z, 16, Wh, ph, xp_half, x9d, m_half_ref, d0tw_ref)
                   + d0tb_ref[...], a2)                                     # (8, R/4)
    # decode 0 ResidualUnit(8->8, s1, identity skip)
    x5 = _in_prelu(_conv3x3(x4, 8, Wh, ph, xp_half, x9c, m_half_ref, d0rw_ref)
                   + d0rb_ref[...], a3) + x4

    # decode 1 (last): ConvT(8->4, s2) + IN + PReLU
    z = jnp.dot(x5, u2_ref[...], preferred_element_type=jnp.float32)        # (8, R)
    x6 = _in_prelu(_conv3x3(z, 8, Wf, pf, xp_full, x9b, m_full_ref, d1tw_ref)
                   + d1tb_ref[...], a4)                                     # (4, R)
    # conv-only ResidualUnit(4->4)
    x7 = _conv3x3(x6, 4, Wf, pf, xp_full, x9a, m_full_ref, d1rw_ref) + d1rb_ref[...] + x6

    o_ref[0] = x7.astype(o_ref.dtype)


# ----------------------------------------------------------------------------
# Wrapper (layout plumbing only)
# ----------------------------------------------------------------------------
def _pack_conv_w(w):   # PyTorch (Cout, Cin, 3, 3) -> lane-dense (Cout, 9*Cin), tap-major
    co, ci = w.shape[0], w.shape[1]
    return jnp.transpose(w, (0, 2, 3, 1)).reshape(co, 9 * ci).astype(jnp.float32)


def _pack_tconv_w(w):  # PyTorch (Cin, Cout, 3, 3) -> equivalent fwd-conv (Cout, 9*Cin)
    ci, co = w.shape[0], w.shape[1]
    wf = jnp.flip(w, axis=(2, 3))                      # spatial flip
    return jnp.transpose(wf, (1, 2, 3, 0)).reshape(co, 9 * ci).astype(jnp.float32)


def _bias(b):
    return b.reshape(-1, 1).astype(jnp.float32)


@jax.jit
def custom_autoencoder_forward(x_nchw, p):
    B, Cin, H, W = x_nchw.shape
    assert Cin == 4 and H % 4 == 0 and W % 4 == 0
    R = H * W
    Rh = R // 4

    x = x_nchw.reshape(B, Cin, R).astype(jnp.float32)          # channels-major (C, H*W)

    # f32 constants (no in-kernel casts); all tiny (~170 KiB total).
    m_full = jnp.asarray(_tap_masks(H, W))                     # (9, R)
    m_half = jnp.asarray(_tap_masks(H // 2, W // 2))           # (9, R/4)
    d1 = jnp.asarray(_downsample_select(H, W))                 # (R, R/4)
    d2 = jnp.asarray(_downsample_select(H // 2, W // 2))       # (R/4, R/16)
    u1 = jnp.asarray(_upsample_select(H // 4, W // 4))         # (R/16, R/4)
    u2 = jnp.asarray(_upsample_select(H // 2, W // 2))         # (R/4, R)

    fw, fb = _pack_conv_w(p["first_w"]), _bias(p["first_b"])
    # encoder ResidualUnits: fuse main + residual convs along Cout
    e0w = jnp.concatenate([_pack_conv_w(p["enc0_w"]), _pack_conv_w(p["enc0_rw"])], axis=0)
    e0b = jnp.concatenate([_bias(p["enc0_b"]), _bias(p["enc0_rb"])], axis=0)
    e1w = jnp.concatenate([_pack_conv_w(p["enc1_w"]), _pack_conv_w(p["enc1_rw"])], axis=0)
    e1b = jnp.concatenate([_bias(p["enc1_b"]), _bias(p["enc1_rb"])], axis=0)
    d0tw, d0tb = _pack_tconv_w(p["dec0_tw"]), _bias(p["dec0_tb"])
    d0rw, d0rb = _pack_conv_w(p["dec0_rw"]), _bias(p["dec0_rb"])
    d1tw, d1tb = _pack_tconv_w(p["dec1_tw"]), _bias(p["dec1_tb"])
    d1rw, d1rb = _pack_conv_w(p["dec1_rw"]), _bias(p["dec1_rb"])

    alphas = jnp.stack([p["enc0_a"], p["enc1_a"], p["dec0_ta"],
                        p["dec0_ra"], p["dec1_ta"]]).astype(jnp.float32)

    consts = [m_full, m_half, d1, d2, u1, u2,
              fw, fb, e0w, e0b, e1w, e1b,
              d0tw, d0tb, d0rw, d0rb, d1tw, d1tb, d1rw, d1rb]

    in_specs = ([pl.BlockSpec((1, Cin, R), lambda b: (b, 0, 0))]
                + [pl.BlockSpec(a.shape, lambda b: (0, 0)) for a in consts]
                + [pl.BlockSpec(memory_space=pltpu.MemorySpace.SMEM)])

    out = pl.pallas_call(
        partial(_autoencoder_kernel, H, W),
        out_shape=jax.ShapeDtypeStruct((B, 4, R), jnp.float32),
        grid=(B,),
        in_specs=in_specs,
        out_specs=pl.BlockSpec((1, 4, R), lambda b: (b, 0, 0)),
        scratch_shapes=[
            pltpu.VMEM((8, R + 2 * (W + 1)), jnp.float32),        # padded staging, full res
            pltpu.VMEM((16, Rh + 2 * (W // 2 + 1)), jnp.float32),  # padded staging, half res
            pltpu.VMEM((9 * 4, R), jnp.float32),                  # X9: first / final conv
            pltpu.VMEM((9 * 8, R), jnp.float32),                  # X9: enc0 / dec1-ConvT
            pltpu.VMEM((9 * 8, Rh), jnp.float32),                 # X9: enc1 / dec0-res
            pltpu.VMEM((9 * 16, Rh), jnp.float32),                # X9: dec0-ConvT
        ],
        compiler_params=pltpu.CompilerParams(dimension_semantics=("parallel",)),
    )(x, *consts, alphas)

    return out.reshape(B, 4, H, W)


# ----------------------------------------------------------------------------
# Parameters (deterministic synthetic init, PyTorch shapes)
# ----------------------------------------------------------------------------
def init_params(key):
    keys = jax.random.split(key, 18)

    def cw(k, co, ci):
        return jax.random.normal(k, (co, ci, 3, 3), jnp.float32) * 0.1

    def tw(k, ci, co):
        return jax.random.normal(k, (ci, co, 3, 3), jnp.float32) * 0.1

    def bs(k, c):
        return jax.random.normal(k, (c,), jnp.float32) * 0.01

    a = jnp.float32(0.25)  # nn.PReLU() default init
    return {
        "first_w": cw(keys[0], 8, 4), "first_b": bs(keys[1], 8),
        "enc0_w": cw(keys[2], 8, 8),  "enc0_b": bs(keys[3], 8),  "enc0_a": a,
        "enc0_rw": cw(keys[4], 8, 8), "enc0_rb": bs(keys[5], 8),
        "enc1_w": cw(keys[6], 16, 8), "enc1_b": bs(keys[7], 16), "enc1_a": a,
        "enc1_rw": cw(keys[8], 16, 8), "enc1_rb": bs(keys[9], 16),
        "dec0_tw": tw(keys[10], 16, 8), "dec0_tb": bs(keys[11], 8), "dec0_ta": a,
        "dec0_rw": cw(keys[12], 8, 8),  "dec0_rb": bs(keys[13], 8), "dec0_ra": a,
        "dec1_tw": tw(keys[14], 8, 4),  "dec1_tb": bs(keys[15], 4), "dec1_ta": a,
        "dec1_rw": cw(keys[16], 4, 4),  "dec1_rb": bs(keys[17], 4),
    }


# ----------------------------------------------------------------------------
# Pure-JAX reference (correctness check only)
# ----------------------------------------------------------------------------
def _ref_conv(x, w, b, stride):
    y = jax.lax.conv_general_dilated(
        x, jnp.transpose(w, (2, 3, 1, 0)), (stride, stride), ((1, 1), (1, 1)),
        dimension_numbers=("NHWC", "HWIO", "NHWC"))
    return y + b


def _ref_tconv(x, w, b):
    w_eq = jnp.transpose(jnp.flip(w, axis=(2, 3)), (2, 3, 0, 1))
    y = jax.lax.conv_general_dilated(
        x, w_eq, (1, 1), ((1, 2), (1, 2)), lhs_dilation=(2, 2),
        dimension_numbers=("NHWC", "HWIO", "NHWC"))
    return y + b


def _ref_in(x):
    mean = jnp.mean(x, axis=(1, 2), keepdims=True)
    var = jnp.mean(jnp.square(x - mean), axis=(1, 2), keepdims=True)
    return (x - mean) * jax.lax.rsqrt(var + 1e-5)


def _ref_prelu(x, a):
    return jnp.where(x >= 0, x, a * x)


def reference_forward(x_nchw, p):
    x = jnp.transpose(x_nchw, (0, 2, 3, 1)).astype(jnp.float32)
    x = _ref_conv(x, p["first_w"], p["first_b"], 1)
    r = _ref_conv(x, p["enc0_rw"], p["enc0_rb"], 2)
    x = _ref_prelu(_ref_in(_ref_conv(x, p["enc0_w"], p["enc0_b"], 2)), p["enc0_a"]) + r
    r = _ref_conv(x, p["enc1_rw"], p["enc1_rb"], 2)
    x = _ref_prelu(_ref_in(_ref_conv(x, p["enc1_w"], p["enc1_b"], 2)), p["enc1_a"]) + r
    x = _ref_prelu(_ref_in(_ref_tconv(x, p["dec0_tw"], p["dec0_tb"])), p["dec0_ta"])
    x = _ref_prelu(_ref_in(_ref_conv(x, p["dec0_rw"], p["dec0_rb"], 1)), p["dec0_ra"]) + x
    x = _ref_prelu(_ref_in(_ref_tconv(x, p["dec1_tw"], p["dec1_tb"])), p["dec1_ta"])
    x = _ref_conv(x, p["dec1_rw"], p["dec1_rb"], 1) + x
    return jnp.transpose(x, (0, 3, 1, 2))


# ----------------------------------------------------------------------------
if __name__ == "__main__":
    root = jax.random.PRNGKey(0)
    k_params, k_input = jax.random.split(root)
    params = init_params(k_params)
    x = jax.random.normal(k_input, (2, 4, 16, 16), jnp.float32)  # NCHW

    out = custom_autoencoder_forward(x, params)
    out = jax.block_until_ready(out)
    assert out.shape == (2, 4, 16, 16), out.shape

    ref = jax.block_until_ready(reference_forward(x, params))
    assert jnp.allclose(out, ref, rtol=1e-3, atol=1e-3), float(jnp.max(jnp.abs(out - ref)))

    print("KERNEL_OK")
</pallas_src>

<mosaic_0001>
module attributes {stable_mosaic.version = 11 : i64} {
  func.func @_autoencoder_kernel(%arg0: i32, %arg1: memref<1x4x256xf32, #tpu.memory_space<vmem>>, %arg2: memref<9x256xf32, #tpu.memory_space<vmem>>, %arg3: memref<9x64xf32, #tpu.memory_space<vmem>>, %arg4: memref<256x64xf32, #tpu.memory_space<vmem>>, %arg5: memref<64x16xf32, #tpu.memory_space<vmem>>, %arg6: memref<16x64xf32, #tpu.memory_space<vmem>>, %arg7: memref<64x256xf32, #tpu.memory_space<vmem>>, %arg8: memref<8x36xf32, #tpu.memory_space<vmem>>, %arg9: memref<8x1xf32, #tpu.memory_space<vmem>>, %arg10: memref<16x72xf32, #tpu.memory_space<vmem>>, %arg11: memref<16x1xf32, #tpu.memory_space<vmem>>, %arg12: memref<32x72xf32, #tpu.memory_space<vmem>>, %arg13: memref<32x1xf32, #tpu.memory_space<vmem>>, %arg14: memref<8x144xf32, #tpu.memory_space<vmem>>, %arg15: memref<8x1xf32, #tpu.memory_space<vmem>>, %arg16: memref<8x72xf32, #tpu.memory_space<vmem>>, %arg17: memref<8x1xf32, #tpu.memory_space<vmem>>, %arg18: memref<4x72xf32, #tpu.memory_space<vmem>>, %arg19: memref<4x1xf32, #tpu.memory_space<vmem>>, %arg20: memref<4x36xf32, #tpu.memory_space<vmem>>, %arg21: memref<4x1xf32, #tpu.memory_space<vmem>>, %arg22: memref<5xf32, #tpu.memory_space<smem>>, %arg23: memref<1x4x256xf32, #tpu.memory_space<vmem>>, %arg24: memref<8x290xf32, #tpu.memory_space<vmem>>, %arg25: memref<16x82xf32, #tpu.memory_space<vmem>>, %arg26: memref<36x256xf32, #tpu.memory_space<vmem>>, %arg27: memref<72x256xf32, #tpu.memory_space<vmem>>, %arg28: memref<72x64xf32, #tpu.memory_space<vmem>>, %arg29: memref<144x64xf32, #tpu.memory_space<vmem>>) attributes {dimension_semantics = [#tpu.dimension_semantics<parallel>], iteration_bounds = array<i64: 2>, scalar_prefetch = 0 : i64, scratch_operands = 6 : i64, tpu.core_type = #tpu.core_type<tc>, window_params = [{transform_indices = @transform_0, window_bounds = array<i64: 1, 4, 256>}, {pipeline_mode = #tpu.pipeline_mode<synchronous>, transform_indices = @transform_1, window_bounds = array<i64: 9, 256>}, {pipeline_mode = #tpu.pipeline_mode<synchronous>, transform_indices = @transform_2, window_bounds = array<i64: 9, 64>}, {pipeline_mode = #tpu.pipeline_mode<synchronous>, transform_indices = @transform_3, window_bounds = array<i64: 256, 64>}, {pipeline_mode = #tpu.pipeline_mode<synchronous>, transform_indices = @transform_4, window_bounds = array<i64: 64, 16>}, {pipeline_mode = #tpu.pipeline_mode<synchronous>, transform_indices = @transform_5, window_bounds = array<i64: 16, 64>}, {pipeline_mode = #tpu.pipeline_mode<synchronous>, transform_indices = @transform_6, window_bounds = array<i64: 64, 256>}, {pipeline_mode = #tpu.pipeline_mode<synchronous>, transform_indices = @transform_7, window_bounds = array<i64: 8, 36>}, {pipeline_mode = #tpu.pipeline_mode<synchronous>, transform_indices = @transform_8, window_bounds = array<i64: 8, 1>}, {pipeline_mode = #tpu.pipeline_mode<synchronous>, transform_indices = @transform_9, window_bounds = array<i64: 16, 72>}, {pipeline_mode = #tpu.pipeline_mode<synchronous>, transform_indices = @transform_10, window_bounds = array<i64: 16, 1>}, {pipeline_mode = #tpu.pipeline_mode<synchronous>, transform_indices = @transform_11, window_bounds = array<i64: 32, 72>}, {pipeline_mode = #tpu.pipeline_mode<synchronous>, transform_indices = @transform_12, window_bounds = array<i64: 32, 1>}, {pipeline_mode = #tpu.pipeline_mode<synchronous>, transform_indices = @transform_13, window_bounds = array<i64: 8, 144>}, {pipeline_mode = #tpu.pipeline_mode<synchronous>, transform_indices = @transform_14, window_bounds = array<i64: 8, 1>}, {pipeline_mode = #tpu.pipeline_mode<synchronous>, transform_indices = @transform_15, window_bounds = array<i64: 8, 72>}, {pipeline_mode = #tpu.pipeline_mode<synchronous>, transform_indices = @transform_16, window_bounds = array<i64: 8, 1>}, {pipeline_mode = #tpu.pipeline_mode<synchronous>, transform_indices = @transform_17, window_bounds = array<i64: 4, 72>}, {pipeline_mode = #tpu.pipeline_mode<synchronous>, transform_indices = @transform_18, window_bounds = array<i64: 4, 1>}, {pipeline_mode = #tpu.pipeline_mode<synchronous>, transform_indices = @transform_19, window_bounds = array<i64: 4, 36>}, {pipeline_mode = #tpu.pipeline_mode<synchronous>, transform_indices = @transform_20, window_bounds = array<i64: 4, 1>}, {transform_indices = @transform_21, window_bounds = array<i64: 5>}, {transform_indices = @transform_22, window_bounds = array<i64: 1, 4, 256>}]} {
    %cst = arith.constant 0.000000e+00 : f32
    %0 = vector.broadcast %cst : f32 to vector<8x290xf32>
    %c0 = arith.constant 0 : index
    %c0_0 = arith.constant 0 : index
    %1 = vector.load %arg24[%c0, %c0_0] : memref<8x290xf32, #tpu.memory_space<vmem>>, vector<8x290xf32>
    tpu.vector_store %arg24[%c0, %c0_0], %0 {strides = array<i32>} : memref<8x290xf32, #tpu.memory_space<vmem>>, vector<8x290xf32>,
    %cst_1 = arith.constant 0.000000e+00 : f32
    %2 = vector.broadcast %cst_1 : f32 to vector<16x82xf32>
    %c0_2 = arith.constant 0 : index
    %c0_3 = arith.constant 0 : index
    %3 = vector.load %arg25[%c0_2, %c0_3] : memref<16x82xf32, #tpu.memory_space<vmem>>, vector<16x82xf32>
    tpu.vector_store %arg25[%c0_2, %c0_3], %2 {strides = array<i32>} : memref<16x82xf32, #tpu.memory_space<vmem>>, vector<16x82xf32>,
    %c0_4 = arith.constant 0 : index
    %4 = memref.load %arg22[%c0_4] : memref<5xf32, #tpu.memory_space<smem>>
    %c1 = arith.constant 1 : index
    %5 = memref.load %arg22[%c1] : memref<5xf32, #tpu.memory_space<smem>>
    %c2 = arith.constant 2 : index
    %6 = memref.load %arg22[%c2] : memref<5xf32, #tpu.memory_space<smem>>
    %c3 = arith.constant 3 : index
    %7 = memref.load %arg22[%c3] : memref<5xf32, #tpu.memory_space<smem>>
    %c4 = arith.constant 4 : index
    %8 = memref.load %arg22[%c4] : memref<5xf32, #tpu.memory_space<smem>>
    %c0_5 = arith.constant 0 : index
    %c0_6 = arith.constant 0 : index
    %c0_7 = arith.constant 0 : index
    %9 = vector.load %arg1[%c0_5, %c0_6, %c0_7] : memref<1x4x256xf32, #tpu.memory_space<vmem>>, vector<1x4x256xf32>
    %10 = vector.shape_cast %9 : vector<1x4x256xf32> to vector<4x256xf32>
    %c0_8 = arith.constant 0 : index
    %c17 = arith.constant 17 : index
    %11 = vector.load %arg24[%c0_8, %c17] : memref<8x290xf32, #tpu.memory_space<vmem>>, vector<4x256xf32>
    tpu.vector_store %arg24[%c0_8, %c17], %10 {strides = array<i32>} : memref<8x290xf32, #tpu.memory_space<vmem>>, vector<4x256xf32>,
    %c0_9 = arith.constant 0 : index
    %c0_10 = arith.constant 0 : index
    %12 = vector.load %arg24[%c0_9, %c0_10] : memref<8x290xf32, #tpu.memory_space<vmem>>, vector<4x256xf32>
    %c0_11 = arith.constant 0 : index
    %c0_12 = arith.constant 0 : index
    %13 = vector.load %arg2[%c0_11, %c0_12] : memref<9x256xf32, #tpu.memory_space<vmem>>, vector<1x256xf32>
    %14 = vector.broadcast %13 : vector<1x256xf32> to vector<4x256xf32>
    %15 = arith.mulf %12, %14 : vector<4x256xf32>
    %c0_13 = arith.constant 0 : index
    %c0_14 = arith.constant 0 : index
    %16 = vector.load %arg26[%c0_13, %c0_14] : memref<36x256xf32, #tpu.memory_space<vmem>>, vector<4x256xf32>
    tpu.vector_store %arg26[%c0_13, %c0_14], %15 {strides = array<i32>} : memref<36x256xf32, #tpu.memory_space<vmem>>, vector<4x256xf32>,
    %c0_15 = arith.constant 0 : index
    %c1_16 = arith.constant 1 : index
    %17 = vector.load %arg24[%c0_15, %c1_16] : memref<8x290xf32, #tpu.memory_space<vmem>>, vector<4x256xf32>
    %c1_17 = arith.constant 1 : index
    %c0_18 = arith.constant 0 : index
    %18 = vector.load %arg2[%c1_17, %c0_18] : memref<9x256xf32, #tpu.memory_space<vmem>>, vector<1x256xf32>
    %19 = vector.broadcast %18 : vector<1x256xf32> to vector<4x256xf32>
    %20 = arith.mulf %17, %19 : vector<4x256xf32>
    %c4_19 = arith.constant 4 : index
    %c0_20 = arith.constant 0 : index
    %21 = vector.load %arg26[%c4_19, %c0_20] : memref<36x256xf32, #tpu.memory_space<vmem>>, vector<4x256xf32>
    tpu.vector_store %arg26[%c4_19, %c0_20], %20 {strides = array<i32>} : memref<36x256xf32, #tpu.memory_space<vmem>>, vector<4x256xf32>,
    %c0_21 = arith.constant 0 : index
    %c2_22 = arith.constant 2 : index
    %22 = vector.load %arg24[%c0_21, %c2_22] : memref<8x290xf32, #tpu.memory_space<vmem>>, vector<4x256xf32>
    %c2_23 = arith.constant 2 : index
    %c0_24 = arith.constant 0 : index
    %23 = vector.load %arg2[%c2_23, %c0_24] : memref<9x256xf32, #tpu.memory_space<vmem>>, vector<1x256xf32>
    %24 = vector.broadcast %23 : vector<1x256xf32> to vector<4x256xf32>
    %25 = arith.mulf %22, %24 : vector<4x256xf32>
    %c8 = arith.constant 8 : index
    %c0_25 = arith.constant 0 : index
    %26 = vector.load %arg26[%c8, %c0_25] : memref<36x256xf32, #tpu.memory_space<vmem>>, vector<4x256xf32>
    tpu.vector_store %arg26[%c8, %c0_25], %25 {strides = array<i32>} : memref<36x256xf32, #tpu.memory_space<vmem>>, vector<4x256xf32>,
    %c0_26 = arith.constant 0 : index
    %c16 = arith.constant 16 : index
    %27 = vector.load %arg24[%c0_26, %c16] : memref<8x290xf32, #tpu.memory_space<vmem>>, vector<4x256xf32>
    %c3_27 = arith.constant 3 : index
    %c0_28 = arith.constant 0 : index
    %28 = vector.load %arg2[%c3_27, %c0_28] : memref<9x256xf32, #tpu.memory_space<vmem>>, vector<1x256xf32>
    %29 = vector.broadcast %28 : vector<1x256xf32> to vector<4x256xf32>
    %30 = arith.mulf %27, %29 : vector<4x256xf32>
    %c12 = arith.constant 12 : index
    %c0_29 = arith.constant 0 : index
    %31 = vector.load %arg26[%c12, %c0_29] : memref<36x256xf32, #tpu.memory_space<vmem>>, vector<4x256xf32>
    tpu.vector_store %arg26[%c12, %c0_29], %30 {strides = array<i32>} : memref<36x256xf32, #tpu.memory_space<vmem>>, vector<4x256xf32>,
    %c0_30 = arith.constant 0 : index
    %c17_31 = arith.constant 17 : index
    %32 = vector.load %arg24[%c0_30, %c17_31] : memref<8x290xf32, #tpu.memory_space<vmem>>, vector<4x256xf32>
    %c4_32 = arith.constant 4 : index
    %c0_33 = arith.constant 0 : index
    %33 = vector.load %arg2[%c4_32, %c0_33] : memref<9x256xf32, #tpu.memory_space<vmem>>, vector<1x256xf32>
    %34 = vector.broadcast %33 : vector<1x256xf32> to vector<4x256xf32>
    %35 = arith.mulf %32, %34 : vector<4x256xf32>
    %c16_34 = arith.constant 16 : index
    %c0_35 = arith.constant 0 : index
    %36 = vector.load %arg26[%c16_34, %c0_35] : memref<36x256xf32, #tpu.memory_space<vmem>>, vector<4x256xf32>
    tpu.vector_store %arg26[%c16_34, %c0_35], %35 {strides = array<i32>} : memref<36x256xf32, #tpu.memory_space<vmem>>, vector<4x256xf32>,
    %c0_36 = arith.constant 0 : index
    %c18 = arith.constant 18 : index
    %37 = vector.load %arg24[%c0_36, %c18] : memref<8x290xf32, #tpu.memory_space<vmem>>, vector<4x256xf32>
    %c5 = arith.constant 5 : index
    %c0_37 = arith.constant 0 : index
    %38 = vector.load %arg2[%c5, %c0_37] : memref<9x256xf32, #tpu.memory_space<vmem>>, vector<1x256xf32>
    %39 = vector.broadcast %38 : vector<1x256xf32> to vector<4x256xf32>
    %40 = arith.mulf %37, %39 : vector<4x256xf32>
    %c20 = arith.constant 20 : index
    %c0_38 = arith.constant 0 : index
    %41 = vector.load %arg26[%c20, %c0_38] : memref<36x256xf32, #tpu.memory_space<vmem>>, vector<4x256xf32>
    tpu.vector_store %arg26[%c20, %c0_38], %40 {strides = array<i32>} : memref<36x256xf32, #tpu.memory_space<vmem>>, vector<4x256xf32>,
    %c0_39 = arith.constant 0 : index
    %c32 = arith.constant 32 : index
    %42 = vector.load %arg24[%c0_39, %c32] : memref<8x290xf32, #tpu.memory_space<vmem>>, vector<4x256xf32>
    %c6 = arith.constant 6 : index
    %c0_40 = arith.constant 0 : index
    %43 = vector.load %arg2[%c6, %c0_40] : memref<9x256xf32, #tpu.memory_space<vmem>>, vector<1x256xf32>
    %44 = vector.broadcast %43 : vector<1x256xf32> to vector<4x256xf32>
    %45 = arith.mulf %42, %44 : vector<4x256xf32>
    %c24 = arith.constant 24 : index
    %c0_41 = arith.constant 0 : index
    %46 = vector.load %arg26[%c24, %c0_41] : memref<36x256xf32, #tpu.memory_space<vmem>>, vector<4x256xf32>
    tpu.vector_store %arg26[%c24, %c0_41], %45 {strides = array<i32>} : memref<36x256xf32, #tpu.memory_space<vmem>>, vector<4x256xf32>,
    %c0_42 = arith.constant 0 : index
    %c33 = arith.constant 33 : index
    %47 = vector.load %arg24[%c0_42, %c33] : memref<8x290xf32, #tpu.memory_space<vmem>>, vector<4x256xf32>
    %c7 = arith.constant 7 : index
    %c0_43 = arith.constant 0 : index
    %48 = vector.load %arg2[%c7, %c0_43] : memref<9x256xf32, #tpu.memory_space<vmem>>, vector<1x256xf32>
    %49 = vector.broadcast %48 : vector<1x256xf32> to vector<4x256xf32>
    %50 = arith.mulf %47, %49 : vector<4x256xf32>
    %c28 = arith.constant 28 : index
    %c0_44 = arith.constant 0 : index
    %51 = vector.load %arg26[%c28, %c0_44] : memref<36x256xf32, #tpu.memory_space<vmem>>, vector<4x256xf32>
    tpu.vector_store %arg26[%c28, %c0_44], %50 {strides = array<i32>} : memref<36x256xf32, #tpu.memory_space<vmem>>, vector<4x256xf32>,
    %c0_45 = arith.constant 0 : index
    %c34 = arith.constant 34 : index
    %52 = vector.load %arg24[%c0_45, %c34] : memref<8x290xf32, #tpu.memory_space<vmem>>, vector<4x256xf32>
    %c8_46 = arith.constant 8 : index
    %c0_47 = arith.constant 0 : index
    %53 = vector.load %arg2[%c8_46, %c0_47] : memref<9x256xf32, #tpu.memory_space<vmem>>, vector<1x256xf32>
    %54 = vector.broadcast %53 : vector<1x256xf32> to vector<4x256xf32>
    %55 = arith.mulf %52, %54 : vector<4x256xf32>
    %c32_48 = arith.constant 32 : index
    %c0_49 = arith.constant 0 : index
    %56 = vector.load %arg26[%c32_48, %c0_49] : memref<36x256xf32, #tpu.memory_space<vmem>>, vector<4x256xf32>
    tpu.vector_store %arg26[%c32_48, %c0_49], %55 {strides = array<i32>} : memref<36x256xf32, #tpu.memory_space<vmem>>, vector<4x256xf32>,
    %c0_50 = arith.constant 0 : index
    %c0_51 = arith.constant 0 : index
    %57 = vector.load %arg8[%c0_50, %c0_51] : memref<8x36xf32, #tpu.memory_space<vmem>>, vector<8x36xf32>
    %c0_52 = arith.constant 0 : index
    %c0_53 = arith.constant 0 : index
    %58 = vector.load %arg26[%c0_52, %c0_53] : memref<36x256xf32, #tpu.memory_space<vmem>>, vector<36x256xf32>
    %cst_54 = arith.constant dense<0.000000e+00> : vector<8x256xf32>
    %59 = tpu.matmul %57, %58, %cst_54 {dimension_numbers = #tpu.dot_dimension_numbers<[1], [0], [0], [1], [0, 0, 1, 1], [], []>} : vector<8x36xf32>, vector<36x256xf32>, vector<8x256xf32> -> vector<8x256xf32>
    %c0_55 = arith.constant 0 : index
    %c0_56 = arith.constant 0 : index
    %60 = vector.load %arg9[%c0_55, %c0_56] : memref<8x1xf32, #tpu.memory_space<vmem>>, vector<8x1xf32>
    %61 = vector.broadcast %60 : vector<8x1xf32> to vector<8x256xf32>
    %62 = arith.addf %59, %61 : vector<8x256xf32>
    %c0_57 = arith.constant 0 : index
    %c17_58 = arith.constant 17 : index
    %63 = vector.load %arg24[%c0_57, %c17_58] : memref<8x290xf32, #tpu.memory_space<vmem>>, vector<8x256xf32>
    tpu.vector_store %arg24[%c0_57, %c17_58], %62 {strides = array<i32>} : memref<8x290xf32, #tpu.memory_space<vmem>>, vector<8x256xf32>,
    %c0_59 = arith.constant 0 : index
    %c0_60 = arith.constant 0 : index
    %64 = vector.load %arg24[%c0_59, %c0_60] : memref<8x290xf32, #tpu.memory_space<vmem>>, vector<8x256xf32>
    %c0_61 = arith.constant 0 : index
    %c0_62 = arith.constant 0 : index
    %65 = vector.load %arg2[%c0_61, %c0_62] : memref<9x256xf32, #tpu.memory_space<vmem>>, vector<1x256xf32>
    %66 = vector.broadcast %65 : vector<1x256xf32> to vector<8x256xf32>
    %67 = arith.mulf %64, %66 : vector<8x256xf32>
    %c0_63 = arith.constant 0 : index
    %c0_64 = arith.constant 0 : index
    %68 = vector.load %arg27[%c0_63, %c0_64] : memref<72x256xf32, #tpu.memory_space<vmem>>, vector<8x256xf32>
    tpu.vector_store %arg27[%c0_63, %c0_64], %67 {strides = array<i32>} : memref<72x256xf32, #tpu.memory_space<vmem>>, vector<8x256xf32>,
    %c0_65 = arith.constant 0 : index
    %c1_66 = arith.constant 1 : index
    %69 = vector.load %arg24[%c0_65, %c1_66] : memref<8x290xf32, #tpu.memory_space<vmem>>, vector<8x256xf32>
    %c1_67 = arith.constant 1 : index
    %c0_68 = arith.constant 0 : index
    %70 = vector.load %arg2[%c1_67, %c0_68] : memref<9x256xf32, #tpu.memory_space<vmem>>, vector<1x256xf32>
    %71 = vector.broadcast %70 : vector<1x256xf32> to vector<8x256xf32>
    %72 = arith.mulf %69, %71 : vector<8x256xf32>
    %c8_69 = arith.constant 8 : index
    %c0_70 = arith.constant 0 : index
    %73 = vector.load %arg27[%c8_69, %c0_70] : memref<72x256xf32, #tpu.memory_space<vmem>>, vector<8x256xf32>
    tpu.vector_store %arg27[%c8_69, %c0_70], %72 {strides = array<i32>} : memref<72x256xf32, #tpu.memory_space<vmem>>, vector<8x256xf32>,
    %c0_71 = arith.constant 0 : index
    %c2_72 = arith.constant 2 : index
    %74 = vector.load %arg24[%c0_71, %c2_72] : memref<8x290xf32, #tpu.memory_space<vmem>>, vector<8x256xf32>
    %c2_73 = arith.constant 2 : index
    %c0_74 = arith.constant 0 : index
    %75 = vector.load %arg2[%c2_73, %c0_74] : memref<9x256xf32, #tpu.memory_space<vmem>>, vector<1x256xf32>
    %76 = vector.broadcast %75 : vector<1x256xf32> to vector<8x256xf32>
    %77 = arith.mulf %74, %76 : vector<8x256xf32>
    %c16_75 = arith.constant 16 : index
    %c0_76 = arith.constant 0 : index
    %78 = vector.load %arg27[%c16_75, %c0_76] : memref<72x256xf32, #tpu.memory_space<vmem>>, vector<8x256xf32>
    tpu.vector_store %arg27[%c16_75, %c0_76], %77 {strides = array<i32>} : memref<72x256xf32, #tpu.memory_space<vmem>>, vector<8x256xf32>,
    %c0_77 = arith.constant 0 : index
    %c16_78 = arith.constant 16 : index
    %79 = vector.load %arg24[%c0_77, %c16_78] : memref<8x290xf32, #tpu.memory_space<vmem>>, vector<8x256xf32>
    %c3_79 = arith.constant 3 : index
    %c0_80 = arith.constant 0 : index
    %80 = vector.load %arg2[%c3_79, %c0_80] : memref<9x256xf32, #tpu.memory_space<vmem>>, vector<1x256xf32>
    %81 = vector.broadcast %80 : vector<1x256xf32> to vector<8x256xf32>
    %82 = arith.mulf %79, %81 : vector<8x256xf32>
    %c24_81 = arith.constant 24 : index
    %c0_82 = arith.constant 0 : index
    %83 = vector.load %arg27[%c24_81, %c0_82] : memref<72x256xf32, #tpu.memory_space<vmem>>, vector<8x256xf32>
    tpu.vector_store %arg27[%c24_81, %c0_82], %82 {strides = array<i32>} : memref<72x256xf32, #tpu.memory_space<vmem>>, vector<8x256xf32>,
    %c0_83 = arith.constant 0 : index
    %c17_84 = arith.constant 17 : index
    %84 = vector.load %arg24[%c0_83, %c17_84] : memref<8x290xf32, #tpu.memory_space<vmem>>, vector<8x256xf32>
    %c4_85 = arith.constant 4 : index
    %c0_86 = arith.constant 0 : index
    %85 = vector.load %arg2[%c4_85, %c0_86] : memref<9x256xf32, #tpu.memory_space<vmem>>, vector<1x256xf32>
    %86 = vector.broadcast %85 : vector<1x256xf32> to vector<8x256xf32>
    %87 = arith.mulf %84, %86 : vector<8x256xf32>
    %c32_87 = arith.constant 32 : index
    %c0_88 = arith.constant 0 : index
    %88 = vector.load %arg27[%c32_87, %c0_88] : memref<72x256xf32, #tpu.memory_space<vmem>>, vector<8x256xf32>
    tpu.vector_store %arg27[%c32_87, %c0_88], %87 {strides = array<i32>} : memref<72x256xf32, #tpu.memory_space<vmem>>, vector<8x256xf32>,
    %c0_89 = arith.constant 0 : index
    %c18_90 = arith.constant 18 : index
    %89 = vector.load %arg24[%c0_89, %c18_90] : memref<8x290xf32, #tpu.memory_space<vmem>>, vector<8x256xf32>
    %c5_91 = arith.constant 5 : index
    %c0_92 = arith.constant 0 : index
    %90 = vector.load %arg2[%c5_91, %c0_92] : memref<9x256xf32, #tpu.memory_space<vmem>>, vector<1x256xf32>
    %91 = vector.broadcast %90 : vector<1x256xf32> to vector<8x256xf32>
    %92 = arith.mulf %89, %91 : vector<8x256xf32>
    %c40 = arith.constant 40 : index
    %c0_93 = arith.constant 0 : index
    %93 = vector.load %arg27[%c40, %c0_93] : memref<72x256xf32, #tpu.memory_space<vmem>>, vector<8x256xf32>
    tpu.vector_store %arg27[%c40, %c0_93], %92 {strides = array<i32>} : memref<72x256xf32, #tpu.memory_space<vmem>>, vector<8x256xf32>,
    %c0_94 = arith.constant 0 : index
    %c32_95 = arith.constant 32 : index
    %94 = vector.load %arg24[%c0_94, %c32_95] : memref<8x290xf32, #tpu.memory_space<vmem>>, vector<8x256xf32>
    %c6_96 = arith.constant 6 : index
    %c0_97 = arith.constant 0 : index
    %95 = vector.load %arg2[%c6_96, %c0_97] : memref<9x256xf32, #tpu.memory_space<vmem>>, vector<1x256xf32>
    %96 = vector.broadcast %95 : vector<1x256xf32> to vector<8x256xf32>
    %97 = arith.mulf %94, %96 : vector<8x256xf32>
    %c48 = arith.constant 48 : index
    %c0_98 = arith.constant 0 : index
    %98 = vector.load %arg27[%c48, %c0_98] : memref<72x256xf32, #tpu.memory_space<vmem>>, vector<8x256xf32>
    tpu.vector_store %arg27[%c48, %c0_98], %97 {strides = array<i32>} : memref<72x256xf32, #tpu.memory_space<vmem>>, vector<8x256xf32>,
    %c0_99 = arith.constant 0 : index
    %c33_100 = arith.constant 33 : index
    %99 = vector.load %arg24[%c0_99, %c33_100] : memref<8x290xf32, #tpu.memory_space<vmem>>, vector<8x256xf32>
    %c7_101 = arith.constant 7 : index
    %c0_102 = arith.constant 0 : index
    %100 = vector.load %arg2[%c7_101, %c0_102] : memref<9x256xf32, #tpu.memory_space<vmem>>, vector<1x256xf32>
    %101 = vector.broadcast %100 : vector<1x256xf32> to vector<8x256xf32>
    %102 = arith.mulf %99, %101 : vector<8x256xf32>
    %c56 = arith.constant 56 : index
    %c0_103 = arith.constant 0 : index
    %103 = vector.load %arg27[%c56, %c0_103] : memref<72x256xf32, #tpu.memory_space<vmem>>, vector<8x256xf32>
    tpu.vector_store %arg27[%c56, %c0_103], %102 {strides = array<i32>} : memref<72x256xf32, #tpu.memory_space<vmem>>, vector<8x256xf32>,
    %c0_104 = arith.constant 0 : index
    %c34_105 = arith.constant 34 : index
    %104 = vector.load %arg24[%c0_104, %c34_105] : memref<8x290xf32, #tpu.memory_space<vmem>>, vector<8x256xf32>
    %c8_106 = arith.constant 8 : index
    %c0_107 = arith.constant 0 : index
    %105 = vector.load %arg2[%c8_106, %c0_107] : memref<9x256xf32, #tpu.memory_space<vmem>>, vector<1x256xf32>
    %106 = vector.broadcast %105 : vector<1x256xf32> to vector<8x256xf32>
    %107 = arith.mulf %104, %106 : vector<8x256xf32>
    %c64 = arith.constant 64 : index
    %c0_108 = arith.constant 0 : index
    %108 = vector.load %arg27[%c64, %c0_108] : memref<72x256xf32, #tpu.memory_space<vmem>>, vector<8x256xf32>
    tpu.vector_store %arg27[%c64, %c0_108], %107 {strides = array<i32>} : memref<72x256xf32, #tpu.memory_space<vmem>>, vector<8x256xf32>,
    %c0_109 = arith.constant 0 : index
    %c0_110 = arith.constant 0 : index
    %109 = vector.load %arg10[%c0_109, %c0_110] : memref<16x72xf32, #tpu.memory_space<vmem>>, vector<16x72xf32>
    %c0_111 = arith.constant 0 : index
    %c0_112 = arith.constant 0 : index
    %110 = vector.load %arg27[%c0_111, %c0_112] : memref<72x256xf32, #tpu.memory_space<vmem>>, vector<72x256xf32>
    %cst_113 = arith.constant dense<0.000000e+00> : vector<16x256xf32>
    %111 = tpu.matmul %109, %110, %cst_113 {dimension_numbers = #tpu.dot_dimension_numbers<[1], [0], [0], [1], [0, 0, 1, 1], [], []>} : vector<16x72xf32>, vector<72x256xf32>, vector<16x256xf32> -> vector<16x256xf32>
    %c0_114 = arith.constant 0 : index
    %c0_115 = arith.constant 0 : index
    %112 = vector.load %arg4[%c0_114, %c0_115] : memref<256x64xf32, #tpu.memory_space<vmem>>, vector<256x64xf32>
    %cst_116 = arith.constant dense<0.000000e+00> : vector<16x64xf32>
    %113 = tpu.matmul %111, %112, %cst_116 {dimension_numbers = #tpu.dot_dimension_numbers<[1], [0], [0], [1], [0, 0, 1, 1], [], []>} : vector<16x256xf32>, vector<256x64xf32>, vector<16x64xf32> -> vector<16x64xf32>
    %c0_117 = arith.constant 0 : index
    %c0_118 = arith.constant 0 : index
    %114 = vector.load %arg11[%c0_117, %c0_118] : memref<16x1xf32, #tpu.memory_space<vmem>>, vector<16x1xf32>
    %115 = vector.broadcast %114 : vector<16x1xf32> to vector<16x64xf32>
    %116 = arith.addf %113, %115 : vector<16x64xf32>
    %117 = vector.extract_strided_slice %116 {offsets = [0, 0], sizes = [8, 64], strides = [1, 1]} : vector<16x64xf32> to vector<8x64xf32>
    %cst_119 = arith.constant dense<0.000000e+00> : vector<8xf32>
    %118 = vector.multi_reduction <add>, %117, %cst_119 [1] : vector<8x64xf32> to vector<8xf32>
    %119 = vector.shape_cast %118 : vector<8xf32> to vector<8x1xf32>
    %cst_120 = arith.constant 1.562500e-02 : f32
    %120 = vector.broadcast %cst_120 : f32 to vector<8x1xf32>
    %121 = arith.mulf %119, %120 : vector<8x1xf32>
    %122 = vector.broadcast %121 : vector<8x1xf32> to vector<8x64xf32>
    %123 = arith.subf %117, %122 : vector<8x64xf32>
    %124 = arith.mulf %123, %123 : vector<8x64xf32>
    %cst_121 = arith.constant dense<0.000000e+00> : vector<8xf32>
    %125 = vector.multi_reduction <add>, %124, %cst_121 [1] : vector<8x64xf32> to vector<8xf32>
    %126 = vector.shape_cast %125 : vector<8xf32> to vector<8x1xf32>
    %cst_122 = arith.constant 1.562500e-02 : f32
    %127 = vector.broadcast %cst_122 : f32 to vector<8x1xf32>
    %128 = arith.mulf %126, %127 : vector<8x1xf32>
    %cst_123 = arith.constant 9.99999974E-6 : f32
    %129 = vector.broadcast %cst_123 : f32 to vector<8x1xf32>
    %130 = arith.addf %128, %129 : vector<8x1xf32>
    %131 = math.rsqrt %130 : vector<8x1xf32>
    %132 = vector.broadcast %131 : vector<8x1xf32> to vector<8x64xf32>
    %133 = arith.mulf %123, %132 : vector<8x64xf32>
    %cst_124 = arith.constant 0.000000e+00 : f32
    %134 = vector.broadcast %cst_124 : f32 to vector<8x64xf32>
    %135 = arith.cmpf oge, %133, %134 : vector<8x64xf32>
    %136 = vector.broadcast %4 : f32 to vector<8x64xf32>
    %137 = arith.mulf %136, %133 : vector<8x64xf32>
    %138 = arith.select %135, %133, %137 : vector<8x64xi1>, vector<8x64xf32>
    %139 = vector.extract_strided_slice %116 {offsets = [8, 0], sizes = [8, 64], strides = [1, 1]} : vector<16x64xf32> to vector<8x64xf32>
    %140 = arith.addf %138, %139 : vector<8x64xf32>
    %c0_125 = arith.constant 0 : index
    %c9 = arith.constant 9 : index
    %141 = vector.load %arg25[%c0_125, %c9] : memref<16x82xf32, #tpu.memory_space<vmem>>, vector<8x64xf32>
    tpu.vector_store %arg25[%c0_125, %c9], %140 {strides = array<i32>} : memref<16x82xf32, #tpu.memory_space<vmem>>, vector<8x64xf32>,
    %c0_126 = arith.constant 0 : index
    %c0_127 = arith.constant 0 : index
    %142 = vector.load %arg25[%c0_126, %c0_127] : memref<16x82xf32, #tpu.memory_space<vmem>>, vector<8x64xf32>
    %c0_128 = arith.constant 0 : index
    %c0_129 = arith.constant 0 : index
    %143 = vector.load %arg3[%c0_128, %c0_129] : memref<9x64xf32, #tpu.memory_space<vmem>>, vector<1x64xf32>
    %144 = vector.broadcast %143 : vector<1x64xf32> to vector<8x64xf32>
    %145 = arith.mulf %142, %144 : vector<8x64xf32>
    %c0_130 = arith.constant 0 : index
    %c0_131 = arith.constant 0 : index
    %146 = vector.load %arg28[%c0_130, %c0_131] : memref<72x64xf32, #tpu.memory_space<vmem>>, vector<8x64xf32>
    tpu.vector_store %arg28[%c0_130, %c0_131], %145 {strides = array<i32>} : memref<72x64xf32, #tpu.memory_space<vmem>>, vector<8x64xf32>,
    %c0_132 = arith.constant 0 : index
    %c1_133 = arith.constant 1 : index
    %147 = vector.load %arg25[%c0_132, %c1_133] : memref<16x82xf32, #tpu.memory_space<vmem>>, vector<8x64xf32>
    %c1_134 = arith.constant 1 : index
    %c0_135 = arith.constant 0 : index
    %148 = vector.load %arg3[%c1_134, %c0_135] : memref<9x64xf32, #tpu.memory_space<vmem>>, vector<1x64xf32>
    %149 = vector.broadcast %148 : vector<1x64xf32> to vector<8x64xf32>
    %150 = arith.mulf %147, %149 : vector<8x64xf32>
    %c8_136 = arith.constant 8 : index
    %c0_137 = arith.constant 0 : index
    %151 = vector.load %arg28[%c8_136, %c0_137] : memref<72x64xf32, #tpu.memory_space<vmem>>, vector<8x64xf32>
    tpu.vector_store %arg28[%c8_136, %c0_137], %150 {strides = array<i32>} : memref<72x64xf32, #tpu.memory_space<vmem>>, vector<8x64xf32>,
    %c0_138 = arith.constant 0 : index
    %c2_139 = arith.constant 2 : index
    %152 = vector.load %arg25[%c0_138, %c2_139] : memref<16x82xf32, #tpu.memory_space<vmem>>, vector<8x64xf32>
    %c2_140 = arith.constant 2 : index
    %c0_141 = arith.constant 0 : index
    %153 = vector.load %arg3[%c2_140, %c0_141] : memref<9x64xf32, #tpu.memory_space<vmem>>, vector<1x64xf32>
    %154 = vector.broadcast %153 : vector<1x64xf32> to vector<8x64xf32>
    %155 = arith.mulf %152, %154 : vector<8x64xf32>
    %c16_142 = arith.constant 16 : index
    %c0_143 = arith.constant 0 : index
    %156 = vector.load %arg28[%c16_142, %c0_143] : memref<72x64xf32, #tpu.memory_space<vmem>>, vector<8x64xf32>
    tpu.vector_store %arg28[%c16_142, %c0_143], %155 {strides = array<i32>} : memref<72x64xf32, #tpu.memory_space<vmem>>, vector<8x64xf32>,
    %c0_144 = arith.constant 0 : index
    %c8_145 = arith.constant 8 : index
    %157 = vector.load %arg25[%c0_144, %c8_145] : memref<16x82xf32, #tpu.memory_space<vmem>>, vector<8x64xf32>
    %c3_146 = arith.constant 3 : index
    %c0_147 = arith.constant 0 : index
    %158 = vector.load %arg3[%c3_146, %c0_147] : memref<9x64xf32, #tpu.memory_space<vmem>>, vector<1x64xf32>
    %159 = vector.broadcast %158 : vector<1x64xf32> to vector<8x64xf32>
    %160 = arith.mulf %157, %159 : vector<8x64xf32>
    %c24_148 = arith.constant 24 : index
    %c0_149 = arith.constant 0 : index
    %161 = vector.load %arg28[%c24_148, %c0_149] : memref<72x64xf32, #tpu.memory_space<vmem>>, vector<8x64xf32>
    tpu.vector_store %arg28[%c24_148, %c0_149], %160 {strides = array<i32>} : memref<72x64xf32, #tpu.memory_space<vmem>>, vector<8x64xf32>,
    %c0_150 = arith.constant 0 : index
    %c9_151 = arith.constant 9 : index
    %162 = vector.load %arg25[%c0_150, %c9_151] : memref<16x82xf32, #tpu.memory_space<vmem>>, vector<8x64xf32>
    %c4_152 = arith.constant 4 : index
    %c0_153 = arith.constant 0 : index
    %163 = vector.load %arg3[%c4_152, %c0_153] : memref<9x64xf32, #tpu.memory_space<vmem>>, vector<1x64xf32>
    %164 = vector.broadcast %163 : vector<1x64xf32> to vector<8x64xf32>
    %165 = arith.mulf %162, %164 : vector<8x64xf32>
    %c32_154 = arith.constant 32 : index
    %c0_155 = arith.constant 0 : index
    %166 = vector.load %arg28[%c32_154, %c0_155] : memref<72x64xf32, #tpu.memory_space<vmem>>, vector<8x64xf32>
    tpu.vector_store %arg28[%c32_154, %c0_155], %165 {strides = array<i32>} : memref<72x64xf32, #tpu.memory_space<vmem>>, vector<8x64xf32>,
    %c0_156 = arith.constant 0 : index
    %c10 = arith.constant 10 : index
    %167 = vector.load %arg25[%c0_156, %c10] : memref<16x82xf32, #tpu.memory_space<vmem>>, vector<8x64xf32>
    %c5_157 = arith.constant 5 : index
    %c0_158 = arith.constant 0 : index
    %168 = vector.load %arg3[%c5_157, %c0_158] : memref<9x64xf32, #tpu.memory_space<vmem>>, vector<1x64xf32>
    %169 = vector.broadcast %168 : vector<1x64xf32> to vector<8x64xf32>
    %170 = arith.mulf %167, %169 : vector<8x64xf32>
    %c40_159 = arith.constant 40 : index
    %c0_160 = arith.constant 0 : index
    %171 = vector.load %arg28[%c40_159, %c0_160] : memref<72x64xf32, #tpu.memory_space<vmem>>, vector<8x64xf32>
    tpu.vector_store %arg28[%c40_159, %c0_160], %170 {strides = array<i32>} : memref<72x64xf32, #tpu.memory_space<vmem>>, vector<8x64xf32>,
    %c0_161 = arith.constant 0 : index
    %c16_162 = arith.constant 16 : index
    %172 = vector.load %arg25[%c0_161, %c16_162] : memref<16x82xf32, #tpu.memory_space<vmem>>, vector<8x64xf32>
    %c6_163 = arith.constant 6 : index
    %c0_164 = arith.constant 0 : index
    %173 = vector.load %arg3[%c6_163, %c0_164] : memref<9x64xf32, #tpu.memory_space<vmem>>, vector<1x64xf32>
    %174 = vector.broadcast %173 : vector<1x64xf32> to vector<8x64xf32>
    %175 = arith.mulf %172, %174 : vector<8x64xf32>
    %c48_165 = arith.constant 48 : index
    %c0_166 = arith.constant 0 : index
    %176 = vector.load %arg28[%c48_165, %c0_166] : memref<72x64xf32, #tpu.memory_space<vmem>>, vector<8x64xf32>
    tpu.vector_store %arg28[%c48_165, %c0_166], %175 {strides = array<i32>} : memref<72x64xf32, #tpu.memory_space<vmem>>, vector<8x64xf32>,
    %c0_167 = arith.constant 0 : index
    %c17_168 = arith.constant 17 : index
    %177 = vector.load %arg25[%c0_167, %c17_168] : memref<16x82xf32, #tpu.memory_space<vmem>>, vector<8x64xf32>
    %c7_169 = arith.constant 7 : index
    %c0_170 = arith.constant 0 : index
    %178 = vector.load %arg3[%c7_169, %c0_170] : memref<9x64xf32, #tpu.memory_space<vmem>>, vector<1x64xf32>
    %179 = vector.broadcast %178 : vector<1x64xf32> to vector<8x64xf32>
    %180 = arith.mulf %177, %179 : vector<8x64xf32>
    %c56_171 = arith.constant 56 : index
    %c0_172 = arith.constant 0 : index
    %181 = vector.load %arg28[%c56_171, %c0_172] : memref<72x64xf32, #tpu.memory_space<vmem>>, vector<8x64xf32>
    tpu.vector_store %arg28[%c56_171, %c0_172], %180 {strides = array<i32>} : memref<72x64xf32, #tpu.memory_space<vmem>>, vector<8x64xf32>,
    %c0_173 = arith.constant 0 : index
    %c18_174 = arith.constant 18 : index
    %182 = vector.load %arg25[%c0_173, %c18_174] : memref<16x82xf32, #tpu.memory_space<vmem>>, vector<8x64xf32>
    %c8_175 = arith.constant 8 : index
    %c0_176 = arith.constant 0 : index
    %183 = vector.load %arg3[%c8_175, %c0_176] : memref<9x64xf32, #tpu.memory_space<vmem>>, vector<1x64xf32>
    %184 = vector.broadcast %183 : vector<1x64xf32> to vector<8x64xf32>
    %185 = arith.mulf %182, %184 : vector<8x64xf32>
    %c64_177 = arith.constant 64 : index
    %c0_178 = arith.constant 0 : index
    %186 = vector.load %arg28[%c64_177, %c0_178] : memref<72x64xf32, #tpu.memory_space<vmem>>, vector<8x64xf32>
    tpu.vector_store %arg28[%c64_177, %c0_178], %185 {strides = array<i32>} : memref<72x64xf32, #tpu.memory_space<vmem>>, vector<8x64xf32>,
    %c0_179 = arith.constant 0 : index
    %c0_180 = arith.constant 0 : index
    %187 = vector.load %arg12[%c0_179, %c0_180] : memref<32x72xf32, #tpu.memory_space<vmem>>, vector<32x72xf32>
    %c0_181 = arith.constant 0 : index
    %c0_182 = arith.constant 0 : index
    %188 = vector.load %arg28[%c0_181, %c0_182] : memref<72x64xf32, #tpu.memory_space<vmem>>, vector<72x64xf32>
    %cst_183 = arith.constant dense<0.000000e+00> : vector<32x64xf32>
    %189 = tpu.matmul %187, %188, %cst_183 {dimension_numbers = #tpu.dot_dimension_numbers<[1], [0], [0], [1], [0, 0, 1, 1], [], []>} : vector<32x72xf32>, vector<72x64xf32>, vector<32x64xf32> -> vector<32x64xf32>
    %c0_184 = arith.constant 0 : index
    %c0_185 = arith.constant 0 : index
    %190 = vector.load %arg5[%c0_184, %c0_185] : memref<64x16xf32, #tpu.memory_space<vmem>>, vector<64x16xf32>
    %cst_186 = arith.constant dense<0.000000e+00> : vector<32x16xf32>
    %191 = tpu.matmul %189, %190, %cst_186 {dimension_numbers = #tpu.dot_dimension_numbers<[1], [0], [0], [1], [0, 0, 1, 1], [], []>} : vector<32x64xf32>, vector<64x16xf32>, vector<32x16xf32> -> vector<32x16xf32>
    %c0_187 = arith.constant 0 : index
    %c0_188 = arith.constant 0 : index
    %192 = vector.load %arg13[%c0_187, %c0_188] : memref<32x1xf32, #tpu.memory_space<vmem>>, vector<32x1xf32>
    %193 = vector.broadcast %192 : vector<32x1xf32> to vector<32x16xf32>
    %194 = arith.addf %191, %193 : vector<32x16xf32>
    %195 = vector.extract_strided_slice %194 {offsets = [0, 0], sizes = [16, 16], strides = [1, 1]} : vector<32x16xf32> to vector<16x16xf32>
    %cst_189 = arith.constant dense<0.000000e+00> : vector<16xf32>
    %196 = vector.multi_reduction <add>, %195, %cst_189 [1] : vector<16x16xf32> to vector<16xf32>
    %197 = vector.shape_cast %196 : vector<16xf32> to vector<16x1xf32>
    %cst_190 = arith.constant 6.250000e-02 : f32
    %198 = vector.broadcast %cst_190 : f32 to vector<16x1xf32>
    %199 = arith.mulf %197, %198 : vector<16x1xf32>
    %200 = vector.broadcast %199 : vector<16x1xf32> to vector<16x16xf32>
    %201 = arith.subf %195, %200 : vector<16x16xf32>
    %202 = arith.mulf %201, %201 : vector<16x16xf32>
    %cst_191 = arith.constant dense<0.000000e+00> : vector<16xf32>
    %203 = vector.multi_reduction <add>, %202, %cst_191 [1] : vector<16x16xf32> to vector<16xf32>
    %204 = vector.shape_cast %203 : vector<16xf32> to vector<16x1xf32>
    %cst_192 = arith.constant 6.250000e-02 : f32
    %205 = vector.broadcast %cst_192 : f32 to vector<16x1xf32>
    %206 = arith.mulf %204, %205 : vector<16x1xf32>
    %cst_193 = arith.constant 9.99999974E-6 : f32
    %207 = vector.broadcast %cst_193 : f32 to vector<16x1xf32>
    %208 = arith.addf %206, %207 : vector<16x1xf32>
    %209 = math.rsqrt %208 : vector<16x1xf32>
    %210 = vector.broadcast %209 : vector<16x1xf32> to vector<16x16xf32>
    %211 = arith.mulf %201, %210 : vector<16x16xf32>
    %cst_194 = arith.constant 0.000000e+00 : f32
    %212 = vector.broadcast %cst_194 : f32 to vector<16x16xf32>
    %213 = arith.cmpf oge, %211, %212 : vector<16x16xf32>
    %214 = vector.broadcast %5 : f32 to vector<16x16xf32>
    %215 = arith.mulf %214, %211 : vector<16x16xf32>
    %216 = arith.select %213, %211, %215 : vector<16x16xi1>, vector<16x16xf32>
    %217 = vector.extract_strided_slice %194 {offsets = [16, 0], sizes = [16, 16], strides = [1, 1]} : vector<32x16xf32> to vector<16x16xf32>
    %218 = arith.addf %216, %217 : vector<16x16xf32>
    %c0_195 = arith.constant 0 : index
    %c0_196 = arith.constant 0 : index
    %219 = vector.load %arg6[%c0_195, %c0_196] : memref<16x64xf32, #tpu.memory_space<vmem>>, vector<16x64xf32>
    %cst_197 = arith.constant dense<0.000000e+00> : vector<16x64xf32>
    %220 = tpu.matmul %218, %219, %cst_197 {dimension_numbers = #tpu.dot_dimension_numbers<[1], [0], [0], [1], [0, 0, 1, 1], [], []>} : vector<16x16xf32>, vector<16x64xf32>, vector<16x64xf32> -> vector<16x64xf32>
    %c0_198 = arith.constant 0 : index
    %c9_199 = arith.constant 9 : index
    %221 = vector.load %arg25[%c0_198, %c9_199] : memref<16x82xf32, #tpu.memory_space<vmem>>, vector<16x64xf32>
    tpu.vector_store %arg25[%c0_198, %c9_199], %220 {strides = array<i32>} : memref<16x82xf32, #tpu.memory_space<vmem>>, vector<16x64xf32>,
    %c0_200 = arith.constant 0 : index
    %c0_201 = arith.constant 0 : index
    %222 = vector.load %arg25[%c0_200, %c0_201] : memref<16x82xf32, #tpu.memory_space<vmem>>, vector<16x64xf32>
    %c0_202 = arith.constant 0 : index
    %c0_203 = arith.constant 0 : index
    %223 = vector.load %arg3[%c0_202, %c0_203] : memref<9x64xf32, #tpu.memory_space<vmem>>, vector<1x64xf32>
    %224 = vector.broadcast %223 : vector<1x64xf32> to vector<16x64xf32>
    %225 = arith.mulf %222, %224 : vector<16x64xf32>
    %c0_204 = arith.constant 0 : index
    %c0_205 = arith.constant 0 : index
    %226 = vector.load %arg29[%c0_204, %c0_205] : memref<144x64xf32, #tpu.memory_space<vmem>>, vector<16x64xf32>
    tpu.vector_store %arg29[%c0_204, %c0_205], %225 {strides = array<i32>} : memref<144x64xf32, #tpu.memory_space<vmem>>, vector<16x64xf32>,
    %c0_206 = arith.constant 0 : index
    %c1_207 = arith.constant 1 : index
    %227 = vector.load %arg25[%c0_206, %c1_207] : memref<16x82xf32, #tpu.memory_space<vmem>>, vector<16x64xf32>
    %c1_208 = arith.constant 1 : index
    %c0_209 = arith.constant 0 : index
    %228 = vector.load %arg3[%c1_208, %c0_209] : memref<9x64xf32, #tpu.memory_space<vmem>>, vector<1x64xf32>
    %229 = vector.broadcast %228 : vector<1x64xf32> to vector<16x64xf32>
    %230 = arith.mulf %227, %229 : vector<16x64xf32>
    %c16_210 = arith.constant 16 : index
    %c0_211 = arith.constant 0 : index
    %231 = vector.load %arg29[%c16_210, %c0_211] : memref<144x64xf32, #tpu.memory_space<vmem>>, vector<16x64xf32>
    tpu.vector_store %arg29[%c16_210, %c0_211], %230 {strides = array<i32>} : memref<144x64xf32, #tpu.memory_space<vmem>>, vector<16x64xf32>,
    %c0_212 = arith.constant 0 : index
    %c2_213 = arith.constant 2 : index
    %232 = vector.load %arg25[%c0_212, %c2_213] : memref<16x82xf32, #tpu.memory_space<vmem>>, vector<16x64xf32>
    %c2_214 = arith.constant 2 : index
    %c0_215 = arith.constant 0 : index
    %233 = vector.load %arg3[%c2_214, %c0_215] : memref<9x64xf32, #tpu.memory_space<vmem>>, vector<1x64xf32>
    %234 = vector.broadcast %233 : vector<1x64xf32> to vector<16x64xf32>
    %235 = arith.mulf %232, %234 : vector<16x64xf32>
    %c32_216 = arith.constant 32 : index
    %c0_217 = arith.constant 0 : index
    %236 = vector.load %arg29[%c32_216, %c0_217] : memref<144x64xf32, #tpu.memory_space<vmem>>, vector<16x64xf32>
    tpu.vector_store %arg29[%c32_216, %c0_217], %235 {strides = array<i32>} : memref<144x64xf32, #tpu.memory_space<vmem>>, vector<16x64xf32>,
    %c0_218 = arith.constant 0 : index
    %c8_219 = arith.constant 8 : index
    %237 = vector.load %arg25[%c0_218, %c8_219] : memref<16x82xf32, #tpu.memory_space<vmem>>, vector<16x64xf32>
    %c3_220 = arith.constant 3 : index
    %c0_221 = arith.constant 0 : index
    %238 = vector.load %arg3[%c3_220, %c0_221] : memref<9x64xf32, #tpu.memory_space<vmem>>, vector<1x64xf32>
    %239 = vector.broadcast %238 : vector<1x64xf32> to vector<16x64xf32>
    %240 = arith.mulf %237, %239 : vector<16x64xf32>
    %c48_222 = arith.constant 48 : index
    %c0_223 = arith.constant 0 : index
    %241 = vector.load %arg29[%c48_222, %c0_223] : memref<144x64xf32, #tpu.memory_space<vmem>>, vector<16x64xf32>
    tpu.vector_store %arg29[%c48_222, %c0_223], %240 {strides = array<i32>} : memref<144x64xf32, #tpu.memory_space<vmem>>, vector<16x64xf32>,
    %c0_224 = arith.constant 0 : index
    %c9_225 = arith.constant 9 : index
    %242 = vector.load %arg25[%c0_224, %c9_225] : memref<16x82xf32, #tpu.memory_space<vmem>>, vector<16x64xf32>
    %c4_226 = arith.constant 4 : index
    %c0_227 = arith.constant 0 : index
    %243 = vector.load %arg3[%c4_226, %c0_227] : memref<9x64xf32, #tpu.memory_space<vmem>>, vector<1x64xf32>
    %244 = vector.broadcast %243 : vector<1x64xf32> to vector<16x64xf32>
    %245 = arith.mulf %242, %244 : vector<16x64xf32>
    %c64_228 = arith.constant 64 : index
    %c0_229 = arith.constant 0 : index
    %246 = vector.load %arg29[%c64_228, %c0_229] : memref<144x64xf32, #tpu.memory_space<vmem>>, vector<16x64xf32>
    tpu.vector_store %arg29[%c64_228, %c0_229], %245 {strides = array<i32>} : memref<144x64xf32, #tpu.memory_space<vmem>>, vector<16x64xf32>,
    %c0_230 = arith.constant 0 : index
    %c10_231 = arith.constant 10 : index
    %247 = vector.load %arg25[%c0_230, %c10_231] : memref<16x82xf32, #tpu.memory_space<vmem>>, vector<16x64xf32>
    %c5_232 = arith.constant 5 : index
    %c0_233 = arith.constant 0 : index
    %248 = vector.load %arg3[%c5_232, %c0_233] : memref<9x64xf32, #tpu.memory_space<vmem>>, vector<1x64xf32>
    %249 = vector.broadcast %248 : vector<1x64xf32> to vector<16x64xf32>
    %250 = arith.mulf %247, %249 : vector<16x64xf32>
    %c80 = arith.constant 80 : index
    %c0_234 = arith.constant 0 : index
    %251 = vector.load %arg29[%c80, %c0_234] : memref<144x64xf32, #tpu.memory_space<vmem>>, vector<16x64xf32>
    tpu.vector_store %arg29[%c80, %c0_234], %250 {strides = array<i32>} : memref<144x64xf32, #tpu.memory_space<vmem>>, vector<16x64xf32>,
    %c0_235 = arith.constant 0 : index
    %c16_236 = arith.constant 16 : index
    %252 = vector.load %arg25[%c0_235, %c16_236] : memref<16x82xf32, #tpu.memory_space<vmem>>, vector<16x64xf32>
    %c6_237 = arith.constant 6 : index
    %c0_238 = arith.constant 0 : index
    %253 = vector.load %arg3[%c6_237, %c0_238] : memref<9x64xf32, #tpu.memory_space<vmem>>, vector<1x64xf32>
    %254 = vector.broadcast %253 : vector<1x64xf32> to vector<16x64xf32>
    %255 = arith.mulf %252, %254 : vector<16x64xf32>
    %c96 = arith.constant 96 : index
    %c0_239 = arith.constant 0 : index
    %256 = vector.load %arg29[%c96, %c0_239] : memref<144x64xf32, #tpu.memory_space<vmem>>, vector<16x64xf32>
    tpu.vector_store %arg29[%c96, %c0_239], %255 {strides = array<i32>} : memref<144x64xf32, #tpu.memory_space<vmem>>, vector<16x64xf32>,
    %c0_240 = arith.constant 0 : index
    %c17_241 = arith.constant 17 : index
    %257 = vector.load %arg25[%c0_240, %c17_241] : memref<16x82xf32, #tpu.memory_space<vmem>>, vector<16x64xf32>
    %c7_242 = arith.constant 7 : index
    %c0_243 = arith.constant 0 : index
    %258 = vector.load %arg3[%c7_242, %c0_243] : memref<9x64xf32, #tpu.memory_space<vmem>>, vector<1x64xf32>
    %259 = vector.broadcast %258 : vector<1x64xf32> to vector<16x64xf32>
    %260 = arith.mulf %257, %259 : vector<16x64xf32>
    %c112 = arith.constant 112 : index
    %c0_244 = arith.constant 0 : index
    %261 = vector.load %arg29[%c112, %c0_244] : memref<144x64xf32, #tpu.memory_space<vmem>>, vector<16x64xf32>
    tpu.vector_store %arg29[%c112, %c0_244], %260 {strides = array<i32>} : memref<144x64xf32, #tpu.memory_space<vmem>>, vector<16x64xf32>,
    %c0_245 = arith.constant 0 : index
    %c18_246 = arith.constant 18 : index
    %262 = vector.load %arg25[%c0_245, %c18_246] : memref<16x82xf32, #tpu.memory_space<vmem>>, vector<16x64xf32>
    %c8_247 = arith.constant 8 : index
    %c0_248 = arith.constant 0 : index
    %263 = vector.load %arg3[%c8_247, %c0_248] : memref<9x64xf32, #tpu.memory_space<vmem>>, vector<1x64xf32>
    %264 = vector.broadcast %263 : vector<1x64xf32> to vector<16x64xf32>
    %265 = arith.mulf %262, %264 : vector<16x64xf32>
    %c128 = arith.constant 128 : index
    %c0_249 = arith.constant 0 : index
    %266 = vector.load %arg29[%c128, %c0_249] : memref<144x64xf32, #tpu.memory_space<vmem>>, vector<16x64xf32>
    tpu.vector_store %arg29[%c128, %c0_249], %265 {strides = array<i32>} : memref<144x64xf32, #tpu.memory_space<vmem>>, vector<16x64xf32>,
    %c0_250 = arith.constant 0 : index
    %c0_251 = arith.constant 0 : index
    %267 = vector.load %arg14[%c0_250, %c0_251] : memref<8x144xf32, #tpu.memory_space<vmem>>, vector<8x144xf32>
    %c0_252 = arith.constant 0 : index
    %c0_253 = arith.constant 0 : index
    %268 = vector.load %arg29[%c0_252, %c0_253] : memref<144x64xf32, #tpu.memory_space<vmem>>, vector<144x64xf32>
    %cst_254 = arith.constant dense<0.000000e+00> : vector<8x64xf32>
    %269 = tpu.matmul %267, %268, %cst_254 {dimension_numbers = #tpu.dot_dimension_numbers<[1], [0], [0], [1], [0, 0, 1, 1], [], []>} : vector<8x144xf32>, vector<144x64xf32>, vector<8x64xf32> -> vector<8x64xf32>
    %c0_255 = arith.constant 0 : index
    %c0_256 = arith.constant 0 : index
    %270 = vector.load %arg15[%c0_255, %c0_256] : memref<8x1xf32, #tpu.memory_space<vmem>>, vector<8x1xf32>
    %271 = vector.broadcast %270 : vector<8x1xf32> to vector<8x64xf32>
    %272 = arith.addf %269, %271 : vector<8x64xf32>
    %cst_257 = arith.constant dense<0.000000e+00> : vector<8xf32>
    %273 = vector.multi_reduction <add>, %272, %cst_257 [1] : vector<8x64xf32> to vector<8xf32>
    %274 = vector.shape_cast %273 : vector<8xf32> to vector<8x1xf32>
    %cst_258 = arith.constant 1.562500e-02 : f32
    %275 = vector.broadcast %cst_258 : f32 to vector<8x1xf32>
    %276 = arith.mulf %274, %275 : vector<8x1xf32>
    %277 = vector.broadcast %276 : vector<8x1xf32> to vector<8x64xf32>
    %278 = arith.subf %272, %277 : vector<8x64xf32>
    %279 = arith.mulf %278, %278 : vector<8x64xf32>
    %cst_259 = arith.constant dense<0.000000e+00> : vector<8xf32>
    %280 = vector.multi_reduction <add>, %279, %cst_259 [1] : vector<8x64xf32> to vector<8xf32>
    %281 = vector.shape_cast %280 : vector<8xf32> to vector<8x1xf32>
    %cst_260 = arith.constant 1.562500e-02 : f32
    %282 = vector.broadcast %cst_260 : f32 to vector<8x1xf32>
    %283 = arith.mulf %281, %282 : vector<8x1xf32>
    %cst_261 = arith.constant 9.99999974E-6 : f32
    %284 = vector.broadcast %cst_261 : f32 to vector<8x1xf32>
    %285 = arith.addf %283, %284 : vector<8x1xf32>
    %286 = math.rsqrt %285 : vector<8x1xf32>
    %287 = vector.broadcast %286 : vector<8x1xf32> to vector<8x64xf32>
    %288 = arith.mulf %278, %287 : vector<8x64xf32>
    %cst_262 = arith.constant 0.000000e+00 : f32
    %289 = vector.broadcast %cst_262 : f32 to vector<8x64xf32>
    %290 = arith.cmpf oge, %288, %289 : vector<8x64xf32>
    %291 = vector.broadcast %6 : f32 to vector<8x64xf32>
    %292 = arith.mulf %291, %288 : vector<8x64xf32>
    %293 = arith.select %290, %288, %292 : vector<8x64xi1>, vector<8x64xf32>
    %c0_263 = arith.constant 0 : index
    %c9_264 = arith.constant 9 : index
    %294 = vector.load %arg25[%c0_263, %c9_264] : memref<16x82xf32, #tpu.memory_space<vmem>>, vector<8x64xf32>
    tpu.vector_store %arg25[%c0_263, %c9_264], %293 {strides = array<i32>} : memref<16x82xf32, #tpu.memory_space<vmem>>, vector<8x64xf32>,
    %c0_265 = arith.constant 0 : index
    %c0_266 = arith.constant 0 : index
    %295 = vector.load %arg25[%c0_265, %c0_266] : memref<16x82xf32, #tpu.memory_space<vmem>>, vector<8x64xf32>
    %c0_267 = arith.constant 0 : index
    %c0_268 = arith.constant 0 : index
    %296 = vector.load %arg3[%c0_267, %c0_268] : memref<9x64xf32, #tpu.memory_space<vmem>>, vector<1x64xf32>
    %297 = vector.broadcast %296 : vector<1x64xf32> to vector<8x64xf32>
    %298 = arith.mulf %295, %297 : vector<8x64xf32>
    %c0_269 = arith.constant 0 : index
    %c0_270 = arith.constant 0 : index
    %299 = vector.load %arg28[%c0_269, %c0_270] : memref<72x64xf32, #tpu.memory_space<vmem>>, vector<8x64xf32>
    tpu.vector_store %arg28[%c0_269, %c0_270], %298 {strides = array<i32>} : memref<72x64xf32, #tpu.memory_space<vmem>>, vector<8x64xf32>,
    %c0_271 = arith.constant 0 : index
    %c1_272 = arith.constant 1 : index
    %300 = vector.load %arg25[%c0_271, %c1_272] : memref<16x82xf32, #tpu.memory_space<vmem>>, vector<8x64xf32>
    %c1_273 = arith.constant 1 : index
    %c0_274 = arith.constant 0 : index
    %301 = vector.load %arg3[%c1_273, %c0_274] : memref<9x64xf32, #tpu.memory_space<vmem>>, vector<1x64xf32>
    %302 = vector.broadcast %301 : vector<1x64xf32> to vector<8x64xf32>
    %303 = arith.mulf %300, %302 : vector<8x64xf32>
    %c8_275 = arith.constant 8 : index
    %c0_276 = arith.constant 0 : index
    %304 = vector.load %arg28[%c8_275, %c0_276] : memref<72x64xf32, #tpu.memory_space<vmem>>, vector<8x64xf32>
    tpu.vector_store %arg28[%c8_275, %c0_276], %303 {strides = array<i32>} : memref<72x64xf32, #tpu.memory_space<vmem>>, vector<8x64xf32>,
    %c0_277 = arith.constant 0 : index
    %c2_278 = arith.constant 2 : index
    %305 = vector.load %arg25[%c0_277, %c2_278] : memref<16x82xf32, #tpu.memory_space<vmem>>, vector<8x64xf32>
    %c2_279 = arith.constant 2 : index
    %c0_280 = arith.constant 0 : index
    %306 = vector.load %arg3[%c2_279, %c0_280] : memref<9x64xf32, #tpu.memory_space<vmem>>, vector<1x64xf32>
    %307 = vector.broadcast %306 : vector<1x64xf32> to vector<8x64xf32>
    %308 = arith.mulf %305, %307 : vector<8x64xf32>
    %c16_281 = arith.constant 16 : index
    %c0_282 = arith.constant 0 : index
    %309 = vector.load %arg28[%c16_281, %c0_282] : memref<72x64xf32, #tpu.memory_space<vmem>>, vector<8x64xf32>
    tpu.vector_store %arg28[%c16_281, %c0_282], %308 {strides = array<i32>} : memref<72x64xf32, #tpu.memory_space<vmem>>, vector<8x64xf32>,
    %c0_283 = arith.constant 0 : index
    %c8_284 = arith.constant 8 : index
    %310 = vector.load %arg25[%c0_283, %c8_284] : memref<16x82xf32, #tpu.memory_space<vmem>>, vector<8x64xf32>
    %c3_285 = arith.constant 3 : index
    %c0_286 = arith.constant 0 : index
    %311 = vector.load %arg3[%c3_285, %c0_286] : memref<9x64xf32, #tpu.memory_space<vmem>>, vector<1x64xf32>
    %312 = vector.broadcast %311 : vector<1x64xf32> to vector<8x64xf32>
    %313 = arith.mulf %310, %312 : vector<8x64xf32>
    %c24_287 = arith.constant 24 : index
    %c0_288 = arith.constant 0 : index
    %314 = vector.load %arg28[%c24_287, %c0_288] : memref<72x64xf32, #tpu.memory_space<vmem>>, vector<8x64xf32>
    tpu.vector_store %arg28[%c24_287, %c0_288], %313 {strides = array<i32>} : memref<72x64xf32, #tpu.memory_space<vmem>>, vector<8x64xf32>,
    %c0_289 = arith.constant 0 : index
    %c9_290 = arith.constant 9 : index
    %315 = vector.load %arg25[%c0_289, %c9_290] : memref<16x82xf32, #tpu.memory_space<vmem>>, vector<8x64xf32>
    %c4_291 = arith.constant 4 : index
    %c0_292 = arith.constant 0 : index
    %316 = vector.load %arg3[%c4_291, %c0_292] : memref<9x64xf32, #tpu.memory_space<vmem>>, vector<1x64xf32>
    %317 = vector.broadcast %316 : vector<1x64xf32> to vector<8x64xf32>
    %318 = arith.mulf %315, %317 : vector<8x64xf32>
    %c32_293 = arith.constant 32 : index
    %c0_294 = arith.constant 0 : index
    %319 = vector.load %arg28[%c32_293, %c0_294] : memref<72x64xf32, #tpu.memory_space<vmem>>, vector<8x64xf32>
    tpu.vector_store %arg28[%c32_293, %c0_294], %318 {strides = array<i32>} : memref<72x64xf32, #tpu.memory_space<vmem>>, vector<8x64xf32>,
    %c0_295 = arith.constant 0 : index
    %c10_296 = arith.constant 10 : index
    %320 = vector.load %arg25[%c0_295, %c10_296] : memref<16x82xf32, #tpu.memory_space<vmem>>, vector<8x64xf32>
    %c5_297 = arith.constant 5 : index
    %c0_298 = arith.constant 0 : index
    %321 = vector.load %arg3[%c5_297, %c0_298] : memref<9x64xf32, #tpu.memory_space<vmem>>, vector<1x64xf32>
    %322 = vector.broadcast %321 : vector<1x64xf32> to vector<8x64xf32>
    %323 = arith.mulf %320, %322 : vector<8x64xf32>
    %c40_299 = arith.constant 40 : index
    %c0_300 = arith.constant 0 : index
    %324 = vector.load %arg28[%c40_299, %c0_300] : memref<72x64xf32, #tpu.memory_space<vmem>>, vector<8x64xf32>
    tpu.vector_store %arg28[%c40_299, %c0_300], %323 {strides = array<i32>} : memref<72x64xf32, #tpu.memory_space<vmem>>, vector<8x64xf32>,
    %c0_301 = arith.constant 0 : index
    %c16_302 = arith.constant 16 : index
    %325 = vector.load %arg25[%c0_301, %c16_302] : memref<16x82xf32, #tpu.memory_space<vmem>>, vector<8x64xf32>
    %c6_303 = arith.constant 6 : index
    %c0_304 = arith.constant 0 : index
    %326 = vector.load %arg3[%c6_303, %c0_304] : memref<9x64xf32, #tpu.memory_space<vmem>>, vector<1x64xf32>
    %327 = vector.broadcast %326 : vector<1x64xf32> to vector<8x64xf32>
    %328 = arith.mulf %325, %327 : vector<8x64xf32>
    %c48_305 = arith.constant 48 : index
    %c0_306 = arith.constant 0 : index
    %329 = vector.load %arg28[%c48_305, %c0_306] : memref<72x64xf32, #tpu.memory_space<vmem>>, vector<8x64xf32>
    tpu.vector_store %arg28[%c48_305, %c0_306], %328 {strides = array<i32>} : memref<72x64xf32, #tpu.memory_space<vmem>>, vector<8x64xf32>,
    %c0_307 = arith.constant 0 : index
    %c17_308 = arith.constant 17 : index
    %330 = vector.load %arg25[%c0_307, %c17_308] : memref<16x82xf32, #tpu.memory_space<vmem>>, vector<8x64xf32>
    %c7_309 = arith.constant 7 : index
    %c0_310 = arith.constant 0 : index
    %331 = vector.load %arg3[%c7_309, %c0_310] : memref<9x64xf32, #tpu.memory_space<vmem>>, vector<1x64xf32>
    %332 = vector.broadcast %331 : vector<1x64xf32> to vector<8x64xf32>
    %333 = arith.mulf %330, %332 : vector<8x64xf32>
    %c56_311 = arith.constant 56 : index
    %c0_312 = arith.constant 0 : index
    %334 = vector.load %arg28[%c56_311, %c0_312] : memref<72x64xf32, #tpu.memory_space<vmem>>, vector<8x64xf32>
    tpu.vector_store %arg28[%c56_311, %c0_312], %333 {strides = array<i32>} : memref<72x64xf32, #tpu.memory_space<vmem>>, vector<8x64xf32>,
    %c0_313 = arith.constant 0 : index
    %c18_314 = arith.constant 18 : index
    %335 = vector.load %arg25[%c0_313, %c18_314] : memref<16x82xf32, #tpu.memory_space<vmem>>, vector<8x64xf32>
    %c8_315 = arith.constant 8 : index
    %c0_316 = arith.constant 0 : index
    %336 = vector.load %arg3[%c8_315, %c0_316] : memref<9x64xf32, #tpu.memory_space<vmem>>, vector<1x64xf32>
    %337 = vector.broadcast %336 : vector<1x64xf32> to vector<8x64xf32>
    %338 = arith.mulf %335, %337 : vector<8x64xf32>
    %c64_317 = arith.constant 64 : index
    %c0_318 = arith.constant 0 : index
    %339 = vector.load %arg28[%c64_317, %c0_318] : memref<72x64xf32, #tpu.memory_space<vmem>>, vector<8x64xf32>
    tpu.vector_store %arg28[%c64_317, %c0_318], %338 {strides = array<i32>} : memref<72x64xf32, #tpu.memory_space<vmem>>, vector<8x64xf32>,
    %c0_319 = arith.constant 0 : index
    %c0_320 = arith.constant 0 : index
    %340 = vector.load %arg16[%c0_319, %c0_320] : memref<8x72xf32, #tpu.memory_space<vmem>>, vector<8x72xf32>
    %c0_321 = arith.constant 0 : index
    %c0_322 = arith.constant 0 : index
    %341 = vector.load %arg28[%c0_321, %c0_322] : memref<72x64xf32, #tpu.memory_space<vmem>>, vector<72x64xf32>
    %cst_323 = arith.constant dense<0.000000e+00> : vector<8x64xf32>
    %342 = tpu.matmul %340, %341, %cst_323 {dimension_numbers = #tpu.dot_dimension_numbers<[1], [0], [0], [1], [0, 0, 1, 1], [], []>} : vector<8x72xf32>, vector<72x64xf32>, vector<8x64xf32> -> vector<8x64xf32>
    %c0_324 = arith.constant 0 : index
    %c0_325 = arith.constant 0 : index
    %343 = vector.load %arg17[%c0_324, %c0_325] : memref<8x1xf32, #tpu.memory_space<vmem>>, vector<8x1xf32>
    %344 = vector.broadcast %343 : vector<8x1xf32> to vector<8x64xf32>
    %345 = arith.addf %342, %344 : vector<8x64xf32>
    %cst_326 = arith.constant dense<0.000000e+00> : vector<8xf32>
    %346 = vector.multi_reduction <add>, %345, %cst_326 [1] : vector<8x64xf32> to vector<8xf32>
    %347 = vector.shape_cast %346 : vector<8xf32> to vector<8x1xf32>
    %cst_327 = arith.constant 1.562500e-02 : f32
    %348 = vector.broadcast %cst_327 : f32 to vector<8x1xf32>
    %349 = arith.mulf %347, %348 : vector<8x1xf32>
    %350 = vector.broadcast %349 : vector<8x1xf32> to vector<8x64xf32>
    %351 = arith.subf %345, %350 : vector<8x64xf32>
    %352 = arith.mulf %351, %351 : vector<8x64xf32>
    %cst_328 = arith.constant dense<0.000000e+00> : vector<8xf32>
    %353 = vector.multi_reduction <add>, %352, %cst_328 [1] : vector<8x64xf32> to vector<8xf32>
    %354 = vector.shape_cast %353 : vector<8xf32> to vector<8x1xf32>
    %cst_329 = arith.constant 1.562500e-02 : f32
    %355 = vector.broadcast %cst_329 : f32 to vector<8x1xf32>
    %356 = arith.mulf %354, %355 : vector<8x1xf32>
    %cst_330 = arith.constant 9.99999974E-6 : f32
    %357 = vector.broadcast %cst_330 : f32 to vector<8x1xf32>
    %358 = arith.addf %356, %357 : vector<8x1xf32>
    %359 = math.rsqrt %358 : vector<8x1xf32>
    %360 = vector.broadcast %359 : vector<8x1xf32> to vector<8x64xf32>
    %361 = arith.mulf %351, %360 : vector<8x64xf32>
    %cst_331 = arith.constant 0.000000e+00 : f32
    %362 = vector.broadcast %cst_331 : f32 to vector<8x64xf32>
    %363 = arith.cmpf oge, %361, %362 : vector<8x64xf32>
    %364 = vector.broadcast %7 : f32 to vector<8x64xf32>
    %365 = arith.mulf %364, %361 : vector<8x64xf32>
    %366 = arith.select %363, %361, %365 : vector<8x64xi1>, vector<8x64xf32>
    %367 = arith.addf %366, %293 : vector<8x64xf32>
    %c0_332 = arith.constant 0 : index
    %c0_333 = arith.constant 0 : index
    %368 = vector.load %arg7[%c0_332, %c0_333] : memref<64x256xf32, #tpu.memory_space<vmem>>, vector<64x256xf32>
    %cst_334 = arith.constant dense<0.000000e+00> : vector<8x256xf32>
    %369 = tpu.matmul %367, %368, %cst_334 {dimension_numbers = #tpu.dot_dimension_numbers<[1], [0], [0], [1], [0, 0, 1, 1], [], []>} : vector<8x64xf32>, vector<64x256xf32>, vector<8x256xf32> -> vector<8x256xf32>
    %c0_335 = arith.constant 0 : index
    %c17_336 = arith.constant 17 : index
    %370 = vector.load %arg24[%c0_335, %c17_336] : memref<8x290xf32, #tpu.memory_space<vmem>>, vector<8x256xf32>
    tpu.vector_store %arg24[%c0_335, %c17_336], %369 {strides = array<i32>} : memref<8x290xf32, #tpu.memory_space<vmem>>, vector<8x256xf32>,
    %c0_337 = arith.constant 0 : index
    %c0_338 = arith.constant 0 : index
    %371 = vector.load %arg24[%c0_337, %c0_338] : memref<8x290xf32, #tpu.memory_space<vmem>>, vector<8x256xf32>
    %c0_339 = arith.constant 0 : index
    %c0_340 = arith.constant 0 : index
    %372 = vector.load %arg2[%c0_339, %c0_340] : memref<9x256xf32, #tpu.memory_space<vmem>>, vector<1x256xf32>
    %373 = vector.broadcast %372 : vector<1x256xf32> to vector<8x256xf32>
    %374 = arith.mulf %371, %373 : vector<8x256xf32>
    %c0_341 = arith.constant 0 : index
    %c0_342 = arith.constant 0 : index
    %375 = vector.load %arg27[%c0_341, %c0_342] : memref<72x256xf32, #tpu.memory_space<vmem>>, vector<8x256xf32>
    tpu.vector_store %arg27[%c0_341, %c0_342], %374 {strides = array<i32>} : memref<72x256xf32, #tpu.memory_space<vmem>>, vector<8x256xf32>,
    %c0_343 = arith.constant 0 : index
    %c1_344 = arith.constant 1 : index
    %376 = vector.load %arg24[%c0_343, %c1_344] : memref<8x290xf32, #tpu.memory_space<vmem>>, vector<8x256xf32>
    %c1_345 = arith.constant 1 : index
    %c0_346 = arith.constant 0 : index
    %377 = vector.load %arg2[%c1_345, %c0_346] : memref<9x256xf32, #tpu.memory_space<vmem>>, vector<1x256xf32>
    %378 = vector.broadcast %377 : vector<1x256xf32> to vector<8x256xf32>
    %379 = arith.mulf %376, %378 : vector<8x256xf32>
    %c8_347 = arith.constant 8 : index
    %c0_348 = arith.constant 0 : index
    %380 = vector.load %arg27[%c8_347, %c0_348] : memref<72x256xf32, #tpu.memory_space<vmem>>, vector<8x256xf32>
    tpu.vector_store %arg27[%c8_347, %c0_348], %379 {strides = array<i32>} : memref<72x256xf32, #tpu.memory_space<vmem>>, vector<8x256xf32>,
    %c0_349 = arith.constant 0 : index
    %c2_350 = arith.constant 2 : index
    %381 = vector.load %arg24[%c0_349, %c2_350] : memref<8x290xf32, #tpu.memory_space<vmem>>, vector<8x256xf32>
    %c2_351 = arith.constant 2 : index
    %c0_352 = arith.constant 0 : index
    %382 = vector.load %arg2[%c2_351, %c0_352] : memref<9x256xf32, #tpu.memory_space<vmem>>, vector<1x256xf32>
    %383 = vector.broadcast %382 : vector<1x256xf32> to vector<8x256xf32>
    %384 = arith.mulf %381, %383 : vector<8x256xf32>
    %c16_353 = arith.constant 16 : index
    %c0_354 = arith.constant 0 : index
    %385 = vector.load %arg27[%c16_353, %c0_354] : memref<72x256xf32, #tpu.memory_space<vmem>>, vector<8x256xf32>
    tpu.vector_store %arg27[%c16_353, %c0_354], %384 {strides = array<i32>} : memref<72x256xf32, #tpu.memory_space<vmem>>, vector<8x256xf32>,
    %c0_355 = arith.constant 0 : index
    %c16_356 = arith.constant 16 : index
    %386 = vector.load %arg24[%c0_355, %c16_356] : memref<8x290xf32, #tpu.memory_space<vmem>>, vector<8x256xf32>
    %c3_357 = arith.constant 3 : index
    %c0_358 = arith.constant 0 : index
    %387 = vector.load %arg2[%c3_357, %c0_358] : memref<9x256xf32, #tpu.memory_space<vmem>>, vector<1x256xf32>
    %388 = vector.broadcast %387 : vector<1x256xf32> to vector<8x256xf32>
    %389 = arith.mulf %386, %388 : vector<8x256xf32>
    %c24_359 = arith.constant 24 : index
    %c0_360 = arith.constant 0 : index
    %390 = vector.load %arg27[%c24_359, %c0_360] : memref<72x256xf32, #tpu.memory_space<vmem>>, vector<8x256xf32>
    tpu.vector_store %arg27[%c24_359, %c0_360], %389 {strides = array<i32>} : memref<72x256xf32, #tpu.memory_space<vmem>>, vector<8x256xf32>,
    %c0_361 = arith.constant 0 : index
    %c17_362 = arith.constant 17 : index
    %391 = vector.load %arg24[%c0_361, %c17_362] : memref<8x290xf32, #tpu.memory_space<vmem>>, vector<8x256xf32>
    %c4_363 = arith.constant 4 : index
    %c0_364 = arith.constant 0 : index
    %392 = vector.load %arg2[%c4_363, %c0_364] : memref<9x256xf32, #tpu.memory_space<vmem>>, vector<1x256xf32>
    %393 = vector.broadcast %392 : vector<1x256xf32> to vector<8x256xf32>
    %394 = arith.mulf %391, %393 : vector<8x256xf32>
    %c32_365 = arith.constant 32 : index
    %c0_366 = arith.constant 0 : index
    %395 = vector.load %arg27[%c32_365, %c0_366] : memref<72x256xf32, #tpu.memory_space<vmem>>, vector<8x256xf32>
    tpu.vector_store %arg27[%c32_365, %c0_366], %394 {strides = array<i32>} : memref<72x256xf32, #tpu.memory_space<vmem>>, vector<8x256xf32>,
    %c0_367 = arith.constant 0 : index
    %c18_368 = arith.constant 18 : index
    %396 = vector.load %arg24[%c0_367, %c18_368] : memref<8x290xf32, #tpu.memory_space<vmem>>, vector<8x256xf32>
    %c5_369 = arith.constant 5 : index
    %c0_370 = arith.constant 0 : index
    %397 = vector.load %arg2[%c5_369, %c0_370] : memref<9x256xf32, #tpu.memory_space<vmem>>, vector<1x256xf32>
    %398 = vector.broadcast %397 : vector<1x256xf32> to vector<8x256xf32>
    %399 = arith.mulf %396, %398 : vector<8x256xf32>
    %c40_371 = arith.constant 40 : index
    %c0_372 = arith.constant 0 : index
    %400 = vector.load %arg27[%c40_371, %c0_372] : memref<72x256xf32, #tpu.memory_space<vmem>>, vector<8x256xf32>
    tpu.vector_store %arg27[%c40_371, %c0_372], %399 {strides = array<i32>} : memref<72x256xf32, #tpu.memory_space<vmem>>, vector<8x256xf32>,
    %c0_373 = arith.constant 0 : index
    %c32_374 = arith.constant 32 : index
    %401 = vector.load %arg24[%c0_373, %c32_374] : memref<8x290xf32, #tpu.memory_space<vmem>>, vector<8x256xf32>
    %c6_375 = arith.constant 6 : index
    %c0_376 = arith.constant 0 : index
    %402 = vector.load %arg2[%c6_375, %c0_376] : memref<9x256xf32, #tpu.memory_space<vmem>>, vector<1x256xf32>
    %403 = vector.broadcast %402 : vector<1x256xf32> to vector<8x256xf32>
    %404 = arith.mulf %401, %403 : vector<8x256xf32>
    %c48_377 = arith.constant 48 : index
    %c0_378 = arith.constant 0 : index
    %405 = vector.load %arg27[%c48_377, %c0_378] : memref<72x256xf32, #tpu.memory_space<vmem>>, vector<8x256xf32>
    tpu.vector_store %arg27[%c48_377, %c0_378], %404 {strides = array<i32>} : memref<72x256xf32, #tpu.memory_space<vmem>>, vector<8x256xf32>,
    %c0_379 = arith.constant 0 : index
    %c33_380 = arith.constant 33 : index
    %406 = vector.load %arg24[%c0_379, %c33_380] : memref<8x290xf32, #tpu.memory_space<vmem>>, vector<8x256xf32>
    %c7_381 = arith.constant 7 : index
    %c0_382 = arith.constant 0 : index
    %407 = vector.load %arg2[%c7_381, %c0_382] : memref<9x256xf32, #tpu.memory_space<vmem>>, vector<1x256xf32>
    %408 = vector.broadcast %407 : vector<1x256xf32> to vector<8x256xf32>
    %409 = arith.mulf %406, %408 : vector<8x256xf32>
    %c56_383 = arith.constant 56 : index
    %c0_384 = arith.constant 0 : index
    %410 = vector.load %arg27[%c56_383, %c0_384] : memref<72x256xf32, #tpu.memory_space<vmem>>, vector<8x256xf32>
    tpu.vector_store %arg27[%c56_383, %c0_384], %409 {strides = array<i32>} : memref<72x256xf32, #tpu.memory_space<vmem>>, vector<8x256xf32>,
    %c0_385 = arith.constant 0 : index
    %c34_386 = arith.constant 34 : index
    %411 = vector.load %arg24[%c0_385, %c34_386] : memref<8x290xf32, #tpu.memory_space<vmem>>, vector<8x256xf32>
    %c8_387 = arith.constant 8 : index
    %c0_388 = arith.constant 0 : index
    %412 = vector.load %arg2[%c8_387, %c0_388] : memref<9x256xf32, #tpu.memory_space<vmem>>, vector<1x256xf32>
    %413 = vector.broadcast %412 : vector<1x256xf32> to vector<8x256xf32>
    %414 = arith.mulf %411, %413 : vector<8x256xf32>
    %c64_389 = arith.constant 64 : index
    %c0_390 = arith.constant 0 : index
    %415 = vector.load %arg27[%c64_389, %c0_390] : memref<72x256xf32, #tpu.memory_space<vmem>>, vector<8x256xf32>
    tpu.vector_store %arg27[%c64_389, %c0_390], %414 {strides = array<i32>} : memref<72x256xf32, #tpu.memory_space<vmem>>, vector<8x256xf32>,
    %c0_391 = arith.constant 0 : index
    %c0_392 = arith.constant 0 : index
    %416 = vector.load %arg18[%c0_391, %c0_392] : memref<4x72xf32, #tpu.memory_space<vmem>>, vector<4x72xf32>
    %c0_393 = arith.constant 0 : index
    %c0_394 = arith.constant 0 : index
    %417 = vector.load %arg27[%c0_393, %c0_394] : memref<72x256xf32, #tpu.memory_space<vmem>>, vector<72x256xf32>
    %cst_395 = arith.constant dense<0.000000e+00> : vector<4x256xf32>
    %418 = tpu.matmul %416, %417, %cst_395 {dimension_numbers = #tpu.dot_dimension_numbers<[1], [0], [0], [1], [0, 0, 1, 1], [], []>} : vector<4x72xf32>, vector<72x256xf32>, vector<4x256xf32> -> vector<4x256xf32>
    %c0_396 = arith.constant 0 : index
    %c0_397 = arith.constant 0 : index
    %419 = vector.load %arg19[%c0_396, %c0_397] : memref<4x1xf32, #tpu.memory_space<vmem>>, vector<4x1xf32>
    %420 = vector.broadcast %419 : vector<4x1xf32> to vector<4x256xf32>
    %421 = arith.addf %418, %420 : vector<4x256xf32>
    %cst_398 = arith.constant dense<0.000000e+00> : vector<4xf32>
    %422 = vector.multi_reduction <add>, %421, %cst_398 [1] : vector<4x256xf32> to vector<4xf32>
    %423 = vector.shape_cast %422 : vector<4xf32> to vector<4x1xf32>
    %cst_399 = arith.constant 3.906250e-03 : f32
    %424 = vector.broadcast %cst_399 : f32 to vector<4x1xf32>
    %425 = arith.mulf %423, %424 : vector<4x1xf32>
    %426 = vector.broadcast %425 : vector<4x1xf32> to vector<4x256xf32>
    %427 = arith.subf %421, %426 : vector<4x256xf32>
    %428 = arith.mulf %427, %427 : vector<4x256xf32>
    %cst_400 = arith.constant dense<0.000000e+00> : vector<4xf32>
    %429 = vector.multi_reduction <add>, %428, %cst_400 [1] : vector<4x256xf32> to vector<4xf32>
    %430 = vector.shape_cast %429 : vector<4xf32> to vector<4x1xf32>
    %cst_401 = arith.constant 3.906250e-03 : f32
    %431 = vector.broadcast %cst_401 : f32 to vector<4x1xf32>
    %432 = arith.mulf %430, %431 : vector<4x1xf32>
    %cst_402 = arith.constant 9.99999974E-6 : f32
    %433 = vector.broadcast %cst_402 : f32 to vector<4x1xf32>
    %434 = arith.addf %432, %433 : vector<4x1xf32>
    %435 = math.rsqrt %434 : vector<4x1xf32>
    %436 = vector.broadcast %435 : vector<4x1xf32> to vector<4x256xf32>
    %437 = arith.mulf %427, %436 : vector<4x256xf32>
    %cst_403 = arith.constant 0.000000e+00 : f32
    %438 = vector.broadcast %cst_403 : f32 to vector<4x256xf32>
    %439 = arith.cmpf oge, %437, %438 : vector<4x256xf32>
    %440 = vector.broadcast %8 : f32 to vector<4x256xf32>
    %441 = arith.mulf %440, %437 : vector<4x256xf32>
    %442 = arith.select %439, %437, %441 : vector<4x256xi1>, vector<4x256xf32>
    %c0_404 = arith.constant 0 : index
    %c17_405 = arith.constant 17 : index
    %443 = vector.load %arg24[%c0_404, %c17_405] : memref<8x290xf32, #tpu.memory_space<vmem>>, vector<4x256xf32>
    tpu.vector_store %arg24[%c0_404, %c17_405], %442 {strides = array<i32>} : memref<8x290xf32, #tpu.memory_space<vmem>>, vector<4x256xf32>,
    %c0_406 = arith.constant 0 : index
    %c0_407 = arith.constant 0 : index
    %444 = vector.load %arg24[%c0_406, %c0_407] : memref<8x290xf32, #tpu.memory_space<vmem>>, vector<4x256xf32>
    %c0_408 = arith.constant 0 : index
    %c0_409 = arith.constant 0 : index
    %445 = vector.load %arg2[%c0_408, %c0_409] : memref<9x256xf32, #tpu.memory_space<vmem>>, vector<1x256xf32>
    %446 = vector.broadcast %445 : vector<1x256xf32> to vector<4x256xf32>
    %447 = arith.mulf %444, %446 : vector<4x256xf32>
    %c0_410 = arith.constant 0 : index
    %c0_411 = arith.constant 0 : index
    %448 = vector.load %arg26[%c0_410, %c0_411] : memref<36x256xf32, #tpu.memory_space<vmem>>, vector<4x256xf32>
    tpu.vector_store %arg26[%c0_410, %c0_411], %447 {strides = array<i32>} : memref<36x256xf32, #tpu.memory_space<vmem>>, vector<4x256xf32>,
    %c0_412 = arith.constant 0 : index
    %c1_413 = arith.constant 1 : index
    %449 = vector.load %arg24[%c0_412, %c1_413] : memref<8x290xf32, #tpu.memory_space<vmem>>, vector<4x256xf32>
    %c1_414 = arith.constant 1 : index
    %c0_415 = arith.constant 0 : index
    %450 = vector.load %arg2[%c1_414, %c0_415] : memref<9x256xf32, #tpu.memory_space<vmem>>, vector<1x256xf32>
    %451 = vector.broadcast %450 : vector<1x256xf32> to vector<4x256xf32>
    %452 = arith.mulf %449, %451 : vector<4x256xf32>
    %c4_416 = arith.constant 4 : index
    %c0_417 = arith.constant 0 : index
    %453 = vector.load %arg26[%c4_416, %c0_417] : memref<36x256xf32, #tpu.memory_space<vmem>>, vector<4x256xf32>
    tpu.vector_store %arg26[%c4_416, %c0_417], %452 {strides = array<i32>} : memref<36x256xf32, #tpu.memory_space<vmem>>, vector<4x256xf32>,
    %c0_418 = arith.constant 0 : index
    %c2_419 = arith.constant 2 : index
    %454 = vector.load %arg24[%c0_418, %c2_419] : memref<8x290xf32, #tpu.memory_space<vmem>>, vector<4x256xf32>
    %c2_420 = arith.constant 2 : index
    %c0_421 = arith.constant 0 : index
    %455 = vector.load %arg2[%c2_420, %c0_421] : memref<9x256xf32, #tpu.memory_space<vmem>>, vector<1x256xf32>
    %456 = vector.broadcast %455 : vector<1x256xf32> to vector<4x256xf32>
    %457 = arith.mulf %454, %456 : vector<4x256xf32>
    %c8_422 = arith.constant 8 : index
    %c0_423 = arith.constant 0 : index
    %458 = vector.load %arg26[%c8_422, %c0_423] : memref<36x256xf32, #tpu.memory_space<vmem>>, vector<4x256xf32>
    tpu.vector_store %arg26[%c8_422, %c0_423], %457 {strides = array<i32>} : memref<36x256xf32, #tpu.memory_space<vmem>>, vector<4x256xf32>,
    %c0_424 = arith.constant 0 : index
    %c16_425 = arith.constant 16 : index
    %459 = vector.load %arg24[%c0_424, %c16_425] : memref<8x290xf32, #tpu.memory_space<vmem>>, vector<4x256xf32>
    %c3_426 = arith.constant 3 : index
    %c0_427 = arith.constant 0 : index
    %460 = vector.load %arg2[%c3_426, %c0_427] : memref<9x256xf32, #tpu.memory_space<vmem>>, vector<1x256xf32>
    %461 = vector.broadcast %460 : vector<1x256xf32> to vector<4x256xf32>
    %462 = arith.mulf %459, %461 : vector<4x256xf32>
    %c12_428 = arith.constant 12 : index
    %c0_429 = arith.constant 0 : index
    %463 = vector.load %arg26[%c12_428, %c0_429] : memref<36x256xf32, #tpu.memory_space<vmem>>, vector<4x256xf32>
    tpu.vector_store %arg26[%c12_428, %c0_429], %462 {strides = array<i32>} : memref<36x256xf32, #tpu.memory_space<vmem>>, vector<4x256xf32>,
    %c0_430 = arith.constant 0 : index
    %c17_431 = arith.constant 17 : index
    %464 = vector.load %arg24[%c0_430, %c17_431] : memref<8x290xf32, #tpu.memory_space<vmem>>, vector<4x256xf32>
    %c4_432 = arith.constant 4 : index
    %c0_433 = arith.constant 0 : index
    %465 = vector.load %arg2[%c4_432, %c0_433] : memref<9x256xf32, #tpu.memory_space<vmem>>, vector<1x256xf32>
    %466 = vector.broadcast %465 : vector<1x256xf32> to vector<4x256xf32>
    %467 = arith.mulf %464, %466 : vector<4x256xf32>
    %c16_434 = arith.constant 16 : index
    %c0_435 = arith.constant 0 : index
    %468 = vector.load %arg26[%c16_434, %c0_435] : memref<36x256xf32, #tpu.memory_space<vmem>>, vector<4x256xf32>
    tpu.vector_store %arg26[%c16_434, %c0_435], %467 {strides = array<i32>} : memref<36x256xf32, #tpu.memory_space<vmem>>, vector<4x256xf32>,
    %c0_436 = arith.constant 0 : index
    %c18_437 = arith.constant 18 : index
    %469 = vector.load %arg24[%c0_436, %c18_437] : memref<8x290xf32, #tpu.memory_space<vmem>>, vector<4x256xf32>
    %c5_438 = arith.constant 5 : index
    %c0_439 = arith.constant 0 : index
    %470 = vector.load %arg2[%c5_438, %c0_439] : memref<9x256xf32, #tpu.memory_space<vmem>>, vector<1x256xf32>
    %471 = vector.broadcast %470 : vector<1x256xf32> to vector<4x256xf32>
    %472 = arith.mulf %469, %471 : vector<4x256xf32>
    %c20_440 = arith.constant 20 : index
    %c0_441 = arith.constant 0 : index
    %473 = vector.load %arg26[%c20_440, %c0_441] : memref<36x256xf32, #tpu.memory_space<vmem>>, vector<4x256xf32>
    tpu.vector_store %arg26[%c20_440, %c0_441], %472 {strides = array<i32>} : memref<36x256xf32, #tpu.memory_space<vmem>>, vector<4x256xf32>,
    %c0_442 = arith.constant 0 : index
    %c32_443 = arith.constant 32 : index
    %474 = vector.load %arg24[%c0_442, %c32_443] : memref<8x290xf32, #tpu.memory_space<vmem>>, vector<4x256xf32>
    %c6_444 = arith.constant 6 : index
    %c0_445 = arith.constant 0 : index
    %475 = vector.load %arg2[%c6_444, %c0_445] : memref<9x256xf32, #tpu.memory_space<vmem>>, vector<1x256xf32>
    %476 = vector.broadcast %475 : vector<1x256xf32> to vector<4x256xf32>
    %477 = arith.mulf %474, %476 : vector<4x256xf32>
    %c24_446 = arith.constant 24 : index
    %c0_447 = arith.constant 0 : index
    %478 = vector.load %arg26[%c24_446, %c0_447] : memref<36x256xf32, #tpu.memory_space<vmem>>, vector<4x256xf32>
    tpu.vector_store %arg26[%c24_446, %c0_447], %477 {strides = array<i32>} : memref<36x256xf32, #tpu.memory_space<vmem>>, vector<4x256xf32>,
    %c0_448 = arith.constant 0 : index
    %c33_449 = arith.constant 33 : index
    %479 = vector.load %arg24[%c0_448, %c33_449] : memref<8x290xf32, #tpu.memory_space<vmem>>, vector<4x256xf32>
    %c7_450 = arith.constant 7 : index
    %c0_451 = arith.constant 0 : index
    %480 = vector.load %arg2[%c7_450, %c0_451] : memref<9x256xf32, #tpu.memory_space<vmem>>, vector<1x256xf32>
    %481 = vector.broadcast %480 : vector<1x256xf32> to vector<4x256xf32>
    %482 = arith.mulf %479, %481 : vector<4x256xf32>
    %c28_452 = arith.constant 28 : index
    %c0_453 = arith.constant 0 : index
    %483 = vector.load %arg26[%c28_452, %c0_453] : memref<36x256xf32, #tpu.memory_space<vmem>>, vector<4x256xf32>
    tpu.vector_store %arg26[%c28_452, %c0_453], %482 {strides = array<i32>} : memref<36x256xf32, #tpu.memory_space<vmem>>, vector<4x256xf32>,
    %c0_454 = arith.constant 0 : index
    %c34_455 = arith.constant 34 : index
    %484 = vector.load %arg24[%c0_454, %c34_455] : memref<8x290xf32, #tpu.memory_space<vmem>>, vector<4x256xf32>
    %c8_456 = arith.constant 8 : index
    %c0_457 = arith.constant 0 : index
    %485 = vector.load %arg2[%c8_456, %c0_457] : memref<9x256xf32, #tpu.memory_space<vmem>>, vector<1x256xf32>
    %486 = vector.broadcast %485 : vector<1x256xf32> to vector<4x256xf32>
    %487 = arith.mulf %484, %486 : vector<4x256xf32>
    %c32_458 = arith.constant 32 : index
    %c0_459 = arith.constant 0 : index
    %488 = vector.load %arg26[%c32_458, %c0_459] : memref<36x256xf32, #tpu.memory_space<vmem>>, vector<4x256xf32>
    tpu.vector_store %arg26[%c32_458, %c0_459], %487 {strides = array<i32>} : memref<36x256xf32, #tpu.memory_space<vmem>>, vector<4x256xf32>,
    %c0_460 = arith.constant 0 : index
    %c0_461 = arith.constant 0 : index
    %489 = vector.load %arg20[%c0_460, %c0_461] : memref<4x36xf32, #tpu.memory_space<vmem>>, vector<4x36xf32>
    %c0_462 = arith.constant 0 : index
    %c0_463 = arith.constant 0 : index
    %490 = vector.load %arg26[%c0_462, %c0_463] : memref<36x256xf32, #tpu.memory_space<vmem>>, vector<36x256xf32>
    %cst_464 = arith.constant dense<0.000000e+00> : vector<4x256xf32>
    %491 = tpu.matmul %489, %490, %cst_464 {dimension_numbers = #tpu.dot_dimension_numbers<[1], [0], [0], [1], [0, 0, 1, 1], [], []>} : vector<4x36xf32>, vector<36x256xf32>, vector<4x256xf32> -> vector<4x256xf32>
    %c0_465 = arith.constant 0 : index
    %c0_466 = arith.constant 0 : index
    %492 = vector.load %arg21[%c0_465, %c0_466] : memref<4x1xf32, #tpu.memory_space<vmem>>, vector<4x1xf32>
    %493 = vector.broadcast %492 : vector<4x1xf32> to vector<4x256xf32>
    %494 = arith.addf %491, %493 : vector<4x256xf32>
    %495 = arith.addf %494, %442 : vector<4x256xf32>
    %c0_467 = arith.constant 0 : index
    %c0_468 = arith.constant 0 : index
    %c0_469 = arith.constant 0 : index
    %496 = vector.load %arg23[%c0_467, %c0_468, %c0_469] : memref<1x4x256xf32, #tpu.memory_space<vmem>>, vector<1x4x256xf32>
    %497 = vector.shape_cast %496 : vector<1x4x256xf32> to vector<4x256xf32>
    %498 = vector.shape_cast %495 : vector<4x256xf32> to vector<1x4x256xf32>
    tpu.vector_store %arg23[%c0_467, %c0_468, %c0_469], %498 {strides = array<i32>} : memref<1x4x256xf32, #tpu.memory_space<vmem>>, vector<1x4x256xf32>,
    return
  }
  func.func @transform_0(%arg0: i32) -> (i32, i32, i32) {
    %c0_i32 = arith.constant 0 : i32
    %c0_i32_0 = arith.constant 0 : i32
    %c0_i32_1 = arith.constant 0 : i32
    return %arg0, %c0_i32, %c0_i32_0 : i32, i32, i32
  }
  func.func @transform_1(%arg0: i32) -> (i32, i32) {
    %c0_i32 = arith.constant 0 : i32
    %c0_i32_0 = arith.constant 0 : i32
    %c0_i32_1 = arith.constant 0 : i32
    return %c0_i32, %c0_i32_0 : i32, i32
  }
  func.func @transform_2(%arg0: i32) -> (i32, i32) {
    %c0_i32 = arith.constant 0 : i32
    %c0_i32_0 = arith.constant 0 : i32
    %c0_i32_1 = arith.constant 0 : i32
    return %c0_i32, %c0_i32_0 : i32, i32
  }
  func.func @transform_3(%arg0: i32) -> (i32, i32) {
    %c0_i32 = arith.constant 0 : i32
    %c0_i32_0 = arith.constant 0 : i32
    %c0_i32_1 = arith.constant 0 : i32
    return %c0_i32, %c0_i32_0 : i32, i32
  }
  func.func @transform_4(%arg0: i32) -> (i32, i32) {
    %c0_i32 = arith.constant 0 : i32
    %c0_i32_0 = arith.constant 0 : i32
    %c0_i32_1 = arith.constant 0 : i32
    return %c0_i32, %c0_i32_0 : i32, i32
  }
  func.func @transform_5(%arg0: i32) -> (i32, i32) {
    %c0_i32 = arith.constant 0 : i32
    %c0_i32_0 = arith.constant 0 : i32
    %c0_i32_1 = arith.constant 0 : i32
    return %c0_i32, %c0_i32_0 : i32, i32
  }
  func.func @transform_6(%arg0: i32) -> (i32, i32) {
    %c0_i32 = arith.constant 0 : i32
    %c0_i32_0 = arith.constant 0 : i32
    %c0_i32_1 = arith.constant 0 : i32
    return %c0_i32, %c0_i32_0 : i32, i32
  }
  func.func @transform_7(%arg0: i32) -> (i32, i32) {
    %c0_i32 = arith.constant 0 : i32
    %c0_i32_0 = arith.constant 0 : i32
    %c0_i32_1 = arith.constant 0 : i32
    return %c0_i32, %c0_i32_0 : i32, i32
  }
  func.func @transform_8(%arg0: i32) -> (i32, i32) {
    %c0_i32 = arith.constant 0 : i32
    %c0_i32_0 = arith.constant 0 : i32
    %c0_i32_1 = arith.constant 0 : i32
    return %c0_i32, %c0_i32_0 : i32, i32
  }
  func.func @transform_9(%arg0: i32) -> (i32, i32) {
    %c0_i32 = arith.constant 0 : i32
    %c0_i32_0 = arith.constant 0 : i32
    %c0_i32_1 = arith.constant 0 : i32
    return %c0_i32, %c0_i32_0 : i32, i32
  }
  func.func @transform_10(%arg0: i32) -> (i32, i32) {
    %c0_i32 = arith.constant 0 : i32
    %c0_i32_0 = arith.constant 0 : i32
    %c0_i32_1 = arith.constant 0 : i32
    return %c0_i32, %c0_i32_0 : i32, i32
  }
  func.func @transform_11(%arg0: i32) -> (i32, i32) {
    %c0_i32 = arith.constant 0 : i32
    %c0_i32_0 = arith.constant 0 : i32
    %c0_i32_1 = arith.constant 0 : i32
    return %c0_i32, %c0_i32_0 : i32, i32
  }
  func.func @transform_12(%arg0: i32) -> (i32, i32) {
    %c0_i32 = arith.constant 0 : i32
    %c0_i32_0 = arith.constant 0 : i32
    %c0_i32_1 = arith.constant 0 : i32
    return %c0_i32, %c0_i32_0 : i32, i32
  }
  func.func @transform_13(%arg0: i32) -> (i32, i32) {
    %c0_i32 = arith.constant 0 : i32
    %c0_i32_0 = arith.constant 0 : i32
    %c0_i32_1 = arith.constant 0 : i32
    return %c0_i32, %c0_i32_0 : i32, i32
  }
  func.func @transform_14(%arg0: i32) -> (i32, i32) {
    %c0_i32 = arith.constant 0 : i32
    %c0_i32_0 = arith.constant 0 : i32
    %c0_i32_1 = arith.constant 0 : i32
    return %c0_i32, %c0_i32_0 : i32, i32
  }
  func.func @transform_15(%arg0: i32) -> (i32, i32) {
    %c0_i32 = arith.constant 0 : i32
    %c0_i32_0 = arith.constant 0 : i32
    %c0_i32_1 = arith.constant 0 : i32
    return %c0_i32, %c0_i32_0 : i32, i32
  }
  func.func @transform_16(%arg0: i32) -> (i32, i32) {
    %c0_i32 = arith.constant 0 : i32
    %c0_i32_0 = arith.constant 0 : i32
    %c0_i32_1 = arith.constant 0 : i32
    return %c0_i32, %c0_i32_0 : i32, i32
  }
  func.func @transform_17(%arg0: i32) -> (i32, i32) {
    %c0_i32 = arith.constant 0 : i32
    %c0_i32_0 = arith.constant 0 : i32
    %c0_i32_1 = arith.constant 0 : i32
    return %c0_i32, %c0_i32_0 : i32, i32
  }
  func.func @transform_18(%arg0: i32) -> (i32, i32) {
    %c0_i32 = arith.constant 0 : i32
    %c0_i32_0 = arith.constant 0 : i32
    %c0_i32_1 = arith.constant 0 : i32
    return %c0_i32, %c0_i32_0 : i32, i32
  }
  func.func @transform_19(%arg0: i32) -> (i32, i32) {
    %c0_i32 = arith.constant 0 : i32
    %c0_i32_0 = arith.constant 0 : i32
    %c0_i32_1 = arith.constant 0 : i32
    return %c0_i32, %c0_i32_0 : i32, i32
  }
  func.func @transform_20(%arg0: i32) -> (i32, i32) {
    %c0_i32 = arith.constant 0 : i32
    %c0_i32_0 = arith.constant 0 : i32
    %c0_i32_1 = arith.constant 0 : i32
    return %c0_i32, %c0_i32_0 : i32, i32
  }
  func.func @transform_21(%arg0: i32) -> i32 {
    %c0_i32 = arith.constant 0 : i32
    %c0_i32_0 = arith.constant 0 : i32
    return %c0_i32 : i32
  }
  func.func @transform_22(%arg0: i32) -> (i32, i32, i32) {
    %c0_i32 = arith.constant 0 : i32
    %c0_i32_0 = arith.constant 0 : i32
    %c0_i32_1 = arith.constant 0 : i32
    return %arg0, %c0_i32, %c0_i32_0 : i32, i32, i32
  }
}

</mosaic_0001>

<llo_original>
// kernel: custom_autoencoder_forward.1
$region0: #{custom_autoencoder_forward.1}
  #allocation0 [shape = 'u32[]', space=smem, size = 0x4, offset = 0x4, fixed_abs, tag = 'smem constant byte address 0x4 - core index']
  #allocation1 [shape = 'u32[144,128]{1,0:T(1,128)}', space=vmem, size = 0x12000, scoped, tag = 'internal scratch']
  #allocation2 [shape = 'f32[8,290]{1,0:T(8,128)}', space=vmem, size = 0x3000, scoped, tag = 'scratch operand']
  #allocation3 [shape = 'f32[16,82]{1,0:T(8,128)}', space=vmem, size = 0x2000, scoped, tag = 'scratch operand']
  #allocation4 [shape = 'f32[36,256]{1,0:T(8,128)}', space=vmem, size = 0xa000, scoped, tag = 'scratch operand']
  #allocation5 [shape = 'f32[72,256]{1,0:T(8,128)}', space=vmem, size = 0x12000, scoped, tag = 'scratch operand']
  #allocation6 [shape = 'f32[72,64]{1,0:T(8,128)}', space=vmem, size = 0x9000, scoped, tag = 'scratch operand']
  #allocation7 [shape = 'f32[144,64]{1,0:T(8,128)}', space=vmem, size = 0x12000, scoped, tag = 'scratch operand']
  %s0 = inlined_call_operand.vmem [shape: f32[2,4,256], index: 0, kind: input, shape index: {}]
  %s1 = inlined_call_operand.vmem [shape: f32[9,256], index: 1, kind: input, shape index: {}]
  %s2 = inlined_call_operand.vmem [shape: f32[9,64], index: 2, kind: input, shape index: {}]
  %s3 = inlined_call_operand.vmem [shape: f32[256,64], index: 3, kind: input, shape index: {}]
  %s4 = inlined_call_operand.vmem [shape: f32[64,16], index: 4, kind: input, shape index: {}]
  %s5 = inlined_call_operand.vmem [shape: f32[16,64], index: 5, kind: input, shape index: {}]
  %s6 = inlined_call_operand.vmem [shape: f32[64,256], index: 6, kind: input, shape index: {}]
  %s7 = inlined_call_operand.vmem [shape: f32[8,36], index: 7, kind: input, shape index: {}]
  %s8 = inlined_call_operand.vmem [shape: f32[8,1], index: 8, kind: input, shape index: {}]
  %s9 = inlined_call_operand.vmem [shape: f32[16,72], index: 9, kind: input, shape index: {}]
  %s10 = inlined_call_operand.vmem [shape: f32[16,1], index: 10, kind: input, shape index: {}]
  %s11 = inlined_call_operand.vmem [shape: f32[32,72], index: 11, kind: input, shape index: {}]
  %s12 = inlined_call_operand.vmem [shape: f32[32,1], index: 12, kind: input, shape index: {}]
  %s13 = inlined_call_operand.vmem [shape: f32[8,144], index: 13, kind: input, shape index: {}]
  %s14 = inlined_call_operand.vmem [shape: f32[8,1], index: 14, kind: input, shape index: {}]
  %s15 = inlined_call_operand.vmem [shape: f32[8,72], index: 15, kind: input, shape index: {}]
  %s16 = inlined_call_operand.vmem [shape: f32[8,1], index: 16, kind: input, shape index: {}]
  %s17 = inlined_call_operand.vmem [shape: f32[4,72], index: 17, kind: input, shape index: {}]
  %s18 = inlined_call_operand.vmem [shape: f32[4,1], index: 18, kind: input, shape index: {}]
  %s19 = inlined_call_operand.vmem [shape: f32[4,36], index: 19, kind: input, shape index: {}]
  %s20 = inlined_call_operand.vmem [shape: f32[4,1], index: 20, kind: input, shape index: {}]
  %s21 = inlined_call_operand.vmem [shape: f32[5], index: 21, kind: input, shape index: {}]
  %s22 = inlined_call_operand.vmem [shape: f32[2,4,256], index: 22, kind: output, shape index: {}]
  %s23 = sld [smem:[#allocation0]]
  $region125: #{custom_autoencoder_forward.1} parent=0
    _
  %s25 = ssub.s32 1, %s23
  %s26 = scalar_select 0, %s25, %s23
  $region1: #{custom_autoencoder_forward.1} parent=0
    #allocation8 [shape = 'u8[512]{0}', space=smem, size = 0x200, scoped, tag = 'input window, operand 21, single buffered']
    #allocation9 [shape = 's32[2]{0}', space=sflag, size = 0x8, scoped, tag = 'scoped memory for custom_autoencoder_forward.1']
    %27 = vsyncpa [#allocation9], 0
    loop: start=0, step=1, limit=4
    $region2: #{custom_autoencoder_forward.1} parent=1 // loop_pre_header
      _
    $region3: #{custom_autoencoder_forward.1} parent=1 // loop_header
      %s29 = sphi 0, %s33
      %p30 = scmp.ge.s32.totalorder %s29, 4
      %s39 = sphi 0, %s41
      %s42 = sphi 0, %s39
      %s43 = sphi 0, %s42
      %s59 = sphi 0, %s43
      %s63 = sphi 0, %s63
      %s65 = sphi 0, %s63
      %s66 = sphi 0, %s65
      %s80 = sphi 0, %s66
      %s84 = sphi 0, %s84
      %s86 = sphi 0, %s84
      %s87 = sphi 0, %s86
      %s101 = sphi 0, %s87
      %s105 = sphi 0, %s105
      %s107 = sphi 0, %s105
      %s108 = sphi 0, %s107
      %s122 = sphi 0, %s108
      %s126 = sphi 0, %s126
      %s128 = sphi 0, %s126
      %s129 = sphi 0, %s128
      %s143 = sphi 0, %s129
      %s147 = sphi 0, %s147
      %s149 = sphi 0, %s147
      %s150 = sphi 0, %s149
      %s164 = sphi 0, %s150
      %s168 = sphi 0, %s168
      %s170 = sphi 0, %s168
      %s171 = sphi 0, %s170
      %s185 = sphi 0, %s171
      %s189 = sphi 0, %s189
      %s191 = sphi 0, %s189
      %s192 = sphi 0, %s191
      %s206 = sphi 0, %s192
      %s210 = sphi 0, %s210
      %s212 = sphi 0, %s210
      %s213 = sphi 0, %s212
      %s227 = sphi 0, %s213
      %s231 = sphi 0, %s231
      %s233 = sphi 0, %s231
      %s234 = sphi 0, %s233
      %s248 = sphi 0, %s234
      %s252 = sphi 0, %s252
      %s254 = sphi 0, %s252
      %s255 = sphi 0, %s254
      %s269 = sphi 0, %s255
      %s273 = sphi 0, %s273
      %s275 = sphi 0, %s273
      %s276 = sphi 0, %s275
      %s290 = sphi 0, %s276
      %s294 = sphi 0, %s294
      %s296 = sphi 0, %s294
      %s297 = sphi 0, %s296
      %s311 = sphi 0, %s297
      %s315 = sphi 0, %s315
      %s317 = sphi 0, %s315
      %s318 = sphi 0, %s317
      %s332 = sphi 0, %s318
      %s336 = sphi 0, %s336
      %s338 = sphi 0, %s336
      %s339 = sphi 0, %s338
      %s353 = sphi 0, %s339
      %s357 = sphi 0, %s357
      %s359 = sphi 0, %s357
      %s360 = sphi 0, %s359
      %s374 = sphi 0, %s360
      %s378 = sphi 0, %s378
      %s380 = sphi 0, %s378
      %s381 = sphi 0, %s380
      %s395 = sphi 0, %s381
      %s399 = sphi 0, %s399
      %s401 = sphi 0, %s399
      %s402 = sphi 0, %s401
      %s416 = sphi 0, %s402
      %s420 = sphi 0, %s420
      %s422 = sphi 0, %s420
      %s423 = sphi 0, %s422
      %s437 = sphi 0, %s423
      %s441 = sphi 0, %s441
      %s443 = sphi 0, %s441
      %s444 = sphi 0, %s443
      %s458 = sphi 0, %s444
      %s462 = sphi 0, %s462
      %s464 = sphi 0, %s462
      %s465 = sphi 0, %s464
      %s479 = sphi 0, %s465
      %s483 = sphi 0, %s483
      %s485 = sphi 0, %s483
      %s486 = sphi 0, %s485
      %s500 = sphi 0, %s486
      %s506 = sphi 0, %s508
      %s509 = sphi 0, %s506
      %s510 = sphi 0, %s509
      %s526 = sphi 0, %s510
    $region4: #{custom_autoencoder_forward.1} parent=1 // loop_header_branch
      %32 = sbr.rel (%p30) target = $region8
    $region5: #{custom_autoencoder_forward.1} parent=1 // loop_body
      %s34 = ssub.s32 %s29, 1
      %s35 = ssub.s32 %s29, 2
      %s36 = sadd.s32 %s29, 1
      %s37 = ssub.s32 %s29, %s36
      %p38 = scmp.eq.s32.totalorder %s37, 0
      %s40 = sadd.s32 %s39, 1
      %s41 = scalar_select %p38, %s39, %s40
      %p44 = pneg %p38
      %p45 = scmp.eq.s32.totalorder %s29, 1
      %p46 = por %p44, %p45
      %p47 = scmp.ne.s32.totalorder %s39, %s42
      %p48 = scmp.eq.s32.totalorder %s29, 0
      %p49 = por %p47, %p48
      %p50 = scmp.ne.s32.totalorder %s39, %s42
      %p51 = scmp.eq.s32.totalorder %s34, 1
      %p52 = por %p50, %p51
      %p53 = scmp.ne.s32.totalorder %s42, %s43
      %p54 = scmp.eq.s32.totalorder %s34, 0
      %p55 = por %p53, %p54
      %p56 = scmp.ne.s32.totalorder %s42, %s43
      %p57 = scmp.eq.s32.totalorder %s35, 1
      %p58 = por %p56, %p57
      %p60 = scmp.ne.s32.totalorder %s43, %s59
      %p61 = scmp.eq.s32.totalorder %s35, 0
      %p62 = por %p60, %p61
      %s64 = sadd.s32 %s63, 1
      %p67 = scmp.eq.s32.totalorder %s29, 1
      %p68 = scmp.ne.s32.totalorder %s63, %s65
      %p69 = scmp.eq.s32.totalorder %s29, 0
      %p70 = por %p68, %p69
      %p71 = scmp.ne.s32.totalorder %s63, %s65
      %p72 = scmp.eq.s32.totalorder %s34, 1
      %p73 = por %p71, %p72
      %p74 = scmp.ne.s32.totalorder %s65, %s66
      %p75 = scmp.eq.s32.totalorder %s34, 0
      %p76 = por %p74, %p75
      %p77 = scmp.ne.s32.totalorder %s65, %s66
      %p78 = scmp.eq.s32.totalorder %s35, 1
      %p79 = por %p77, %p78
      %p81 = scmp.ne.s32.totalorder %s66, %s80
      %p82 = scmp.eq.s32.totalorder %s35, 0
      %p83 = por %p81, %p82
      %s85 = sadd.s32 %s84, 1
      %p88 = scmp.eq.s32.totalorder %s29, 1
      %p89 = scmp.ne.s32.totalorder %s84, %s86
      %p90 = scmp.eq.s32.totalorder %s29, 0
      %p91 = por %p89, %p90
      %p92 = scmp.ne.s32.totalorder %s84, %s86
      %p93 = scmp.eq.s32.totalorder %s34, 1
      %p94 = por %p92, %p93
      %p95 = scmp.ne.s32.totalorder %s86, %s87
      %p96 = scmp.eq.s32.totalorder %s34, 0
      %p97 = por %p95, %p96
      %p98 = scmp.ne.s32.totalorder %s86, %s87
      %p99 = scmp.eq.s32.totalorder %s35, 1
      %p100 = por %p98, %p99
      %p102 = scmp.ne.s32.totalorder %s87, %s101
      %p103 = scmp.eq.s32.totalorder %s35, 0
      %p104 = por %p102, %p103
      %s106 = sadd.s32 %s105, 1
      %p109 = scmp.eq.s32.totalorder %s29, 1
      %p110 = scmp.ne.s32.totalorder %s105, %s107
      %p111 = scmp.eq.s32.totalorder %s29, 0
      %p112 = por %p110, %p111
      %p113 = scmp.ne.s32.totalorder %s105, %s107
      %p114 = scmp.eq.s32.totalorder %s34, 1
      %p115 = por %p113, %p114
      %p116 = scmp.ne.s32.totalorder %s107, %s108
      %p117 = scmp.eq.s32.totalorder %s34, 0
      %p118 = por %p116, %p117
      %p119 = scmp.ne.s32.totalorder %s107, %s108
      %p120 = scmp.eq.s32.totalorder %s35, 1
      %p121 = por %p119, %p120
      %p123 = scmp.ne.s32.totalorder %s108, %s122
      %p124 = scmp.eq.s32.totalorder %s35, 0
      %p125 = por %p123, %p124
      %s127 = sadd.s32 %s126, 1
      %p130 = scmp.eq.s32.totalorder %s29, 1
      %p131 = scmp.ne.s32.totalorder %s126, %s128
      %p132 = scmp.eq.s32.totalorder %s29, 0
      %p133 = por %p131, %p132
      %p134 = scmp.ne.s32.totalorder %s126, %s128
      %p135 = scmp.eq.s32.totalorder %s34, 1
      %p136 = por %p134, %p135
      %p137 = scmp.ne.s32.totalorder %s128, %s129
      %p138 = scmp.eq.s32.totalorder %s34, 0
      %p139 = por %p137, %p138
      %p140 = scmp.ne.s32.totalorder %s128, %s129
      %p141 = scmp.eq.s32.totalorder %s35, 1
      %p142 = por %p140, %p141
      %p144 = scmp.ne.s32.totalorder %s129, %s143
      %p145 = scmp.eq.s32.totalorder %s35, 0
      %p146 = por %p144, %p145
      %s148 = sadd.s32 %s147, 1
      %p151 = scmp.eq.s32.totalorder %s29, 1
      %p152 = scmp.ne.s32.totalorder %s147, %s149
      %p153 = scmp.eq.s32.totalorder %s29, 0
      %p154 = por %p152, %p153
      %p155 = scmp.ne.s32.totalorder %s147, %s149
      %p156 = scmp.eq.s32.totalorder %s34, 1
      %p157 = por %p155, %p156
      %p158 = scmp.ne.s32.totalorder %s149, %s150
      %p159 = scmp.eq.s32.totalorder %s34, 0
      %p160 = por %p158, %p159
      %p161 = scmp.ne.s32.totalorder %s149, %s150
      %p162 = scmp.eq.s32.totalorder %s35, 1
      %p163 = por %p161, %p162
      %p165 = scmp.ne.s32.totalorder %s150, %s164
      %p166 = scmp.eq.s32.totalorder %s35, 0
      %p167 = por %p165, %p166
      %s169 = sadd.s32 %s168, 1
      %p172 = scmp.eq.s32.totalorder %s29, 1
      %p173 = scmp.ne.s32.totalorder %s168, %s170
      %p174 = scmp.eq.s32.totalorder %s29, 0
      %p175 = por %p173, %p174
      %p176 = scmp.ne.s32.totalorder %s168, %s170
      %p177 = scmp.eq.s32.totalorder %s34, 1
      %p178 = por %p176, %p177
      %p179 = scmp.ne.s32.totalorder %s170, %s171
      %p180 = scmp.eq.s32.totalorder %s34, 0
      %p181 = por %p179, %p180
      %p182 = scmp.ne.s32.totalorder %s170, %s171
      %p183 = scmp.eq.s32.totalorder %s35, 1
      %p184 = por %p182, %p183
      %p186 = scmp.ne.s32.totalorder %s171, %s185
      %p187 = scmp.eq.s32.totalorder %s35, 0
      %p188 = por %p186, %p187
      %s190 = sadd.s32 %s189, 1
      %p193 = scmp.eq.s32.totalorder %s29, 1
      %p194 = scmp.ne.s32.totalorder %s189, %s191
      %p195 = scmp.eq.s32.totalorder %s29, 0
      %p196 = por %p194, %p195
      %p197 = scmp.ne.s32.totalorder %s189, %s191
      %p198 = scmp.eq.s32.totalorder %s34, 1
      %p199 = por %p197, %p198
      %p200 = scmp.ne.s32.totalorder %s191, %s192
      %p201 = scmp.eq.s32.totalorder %s34, 0
      %p202 = por %p200, %p201
      %p203 = scmp.ne.s32.totalorder %s191, %s192
      %p204 = scmp.eq.s32.totalorder %s35, 1
      %p205 = por %p203, %p204
      %p207 = scmp.ne.s32.totalorder %s192, %s206
      %p208 = scmp.eq.s32.totalorder %s35, 0
      %p209 = por %p207, %p208
      %s211 = sadd.s32 %s210, 1
      %p214 = scmp.eq.s32.totalorder %s29, 1
      %p215 = scmp.ne.s32.totalorder %s210, %s212
      %p216 = scmp.eq.s32.totalorder %s29, 0
      %p217 = por %p215, %p216
      %p218 = scmp.ne.s32.totalorder %s210, %s212
      %p219 = scmp.eq.s32.totalorder %s34, 1
      %p220 = por %p218, %p219
      %p221 = scmp.ne.s32.totalorder %s212, %s213
      %p222 = scmp.eq.s32.totalorder %s34, 0
      %p223 = por %p221, %p222
      %p224 = scmp.ne.s32.totalorder %s212, %s213
      %p225 = scmp.eq.s32.totalorder %s35, 1
      %p226 = por %p224, %p225
      %p228 = scmp.ne.s32.totalorder %s213, %s227
      %p229 = scmp.eq.s32.totalorder %s35, 0
      %p230 = por %p228, %p229
      %s232 = sadd.s32 %s231, 1
      %p235 = scmp.eq.s32.totalorder %s29, 1
      %p236 = scmp.ne.s32.totalorder %s231, %s233
      %p237 = scmp.eq.s32.totalorder %s29, 0
      %p238 = por %p236, %p237
      %p239 = scmp.ne.s32.totalorder %s231, %s233
      %p240 = scmp.eq.s32.totalorder %s34, 1
      %p241 = por %p239, %p240
      %p242 = scmp.ne.s32.totalorder %s233, %s234
      %p243 = scmp.eq.s32.totalorder %s34, 0
      %p244 = por %p242, %p243
      %p245 = scmp.ne.s32.totalorder %s233, %s234
      %p246 = scmp.eq.s32.totalorder %s35, 1
      %p247 = por %p245, %p246
      %p249 = scmp.ne.s32.totalorder %s234, %s248
      %p250 = scmp.eq.s32.totalorder %s35, 0
      %p251 = por %p249, %p250
      %s253 = sadd.s32 %s252, 1
      %p256 = scmp.eq.s32.totalorder %s29, 1
      %p257 = scmp.ne.s32.totalorder %s252, %s254
      %p258 = scmp.eq.s32.totalorder %s29, 0
      %p259 = por %p257, %p258
      %p260 = scmp.ne.s32.totalorder %s252, %s254
      %p261 = scmp.eq.s32.totalorder %s34, 1
      %p262 = por %p260, %p261
      %p263 = scmp.ne.s32.totalorder %s254, %s255
      %p264 = scmp.eq.s32.totalorder %s34, 0
      %p265 = por %p263, %p264
      %p266 = scmp.ne.s32.totalorder %s254, %s255
      %p267 = scmp.eq.s32.totalorder %s35, 1
      %p268 = por %p266, %p267
      %p270 = scmp.ne.s32.totalorder %s255, %s269
      %p271 = scmp.eq.s32.totalorder %s35, 0
      %p272 = por %p270, %p271
      %s274 = sadd.s32 %s273, 1
      %p277 = scmp.eq.s32.totalorder %s29, 1
      %p278 = scmp.ne.s32.totalorder %s273, %s275
      %p279 = scmp.eq.s32.totalorder %s29, 0
      %p280 = por %p278, %p279
      %p281 = scmp.ne.s32.totalorder %s273, %s275
      %p282 = scmp.eq.s32.totalorder %s34, 1
      %p283 = por %p281, %p282
      %p284 = scmp.ne.s32.totalorder %s275, %s276
      %p285 = scmp.eq.s32.totalorder %s34, 0
      %p286 = por %p284, %p285
      %p287 = scmp.ne.s32.totalorder %s275, %s276
      %p288 = scmp.eq.s32.totalorder %s35, 1
      %p289 = por %p287, %p288
      %p291 = scmp.ne.s32.totalorder %s276, %s290
      %p292 = scmp.eq.s32.totalorder %s35, 0
      %p293 = por %p291, %p292
      %s295 = sadd.s32 %s294, 1
      %p298 = scmp.eq.s32.totalorder %s29, 1
      %p299 = scmp.ne.s32.totalorder %s294, %s296
      %p300 = scmp.eq.s32.totalorder %s29, 0
      %p301 = por %p299, %p300
      %p302 = scmp.ne.s32.totalorder %s294, %s296
      %p303 = scmp.eq.s32.totalorder %s34, 1
      %p304 = por %p302, %p303
      %p305 = scmp.ne.s32.totalorder %s296, %s297
      %p306 = scmp.eq.s32.totalorder %s34, 0
      %p307 = por %p305, %p306
      %p308 = scmp.ne.s32.totalorder %s296, %s297
      %p309 = scmp.eq.s32.totalorder %s35, 1
      %p310 = por %p308, %p309
      %p312 = scmp.ne.s32.totalorder %s297, %s311
      %p313 = scmp.eq.s32.totalorder %s35, 0
      %p314 = por %p312, %p313
      %s316 = sadd.s32 %s315, 1
      %p319 = scmp.eq.s32.totalorder %s29, 1
      %p320 = scmp.ne.s32.totalorder %s315, %s317
      %p321 = scmp.eq.s32.totalorder %s29, 0
      %p322 = por %p320, %p321
      %p323 = scmp.ne.s32.totalorder %s315, %s317
      %p324 = scmp.eq.s32.totalorder %s34, 1
      %p325 = por %p323, %p324
      %p326 = scmp.ne.s32.totalorder %s317, %s318
      %p327 = scmp.eq.s32.totalorder %s34, 0
      %p328 = por %p326, %p327
      %p329 = scmp.ne.s32.totalorder %s317, %s318
      %p330 = scmp.eq.s32.totalorder %s35, 1
      %p331 = por %p329, %p330
      %p333 = scmp.ne.s32.totalorder %s318, %s332
      %p334 = scmp.eq.s32.totalorder %s35, 0
      %p335 = por %p333, %p334
      %s337 = sadd.s32 %s336, 1
      %p340 = scmp.eq.s32.totalorder %s29, 1
      %p341 = scmp.ne.s32.totalorder %s336, %s338
      %p342 = scmp.eq.s32.totalorder %s29, 0
      %p343 = por %p341, %p342
      %p344 = scmp.ne.s32.totalorder %s336, %s338
      %p345 = scmp.eq.s32.totalorder %s34, 1
      %p346 = por %p344, %p345
      %p347 = scmp.ne.s32.totalorder %s338, %s339
      %p348 = scmp.eq.s32.totalorder %s34, 0
      %p349 = por %p347, %p348
      %p350 = scmp.ne.s32.totalorder %s338, %s339
      %p351 = scmp.eq.s32.totalorder %s35, 1
      %p352 = por %p350, %p351
      %p354 = scmp.ne.s32.totalorder %s339, %s353
      %p355 = scmp.eq.s32.totalorder %s35, 0
      %p356 = por %p354, %p355
      %s358 = sadd.s32 %s357, 1
      %p361 = scmp.eq.s32.totalorder %s29, 1
      %p362 = scmp.ne.s32.totalorder %s357, %s359
      %p363 = scmp.eq.s32.totalorder %s29, 0
      %p364 = por %p362, %p363
      %p365 = scmp.ne.s32.totalorder %s357, %s359
      %p366 = scmp.eq.s32.totalorder %s34, 1
      %p367 = por %p365, %p366
      %p368 = scmp.ne.s32.totalorder %s359, %s360
      %p369 = scmp.eq.s32.totalorder %s34, 0
      %p370 = por %p368, %p369
      %p371 = scmp.ne.s32.totalorder %s359, %s360
      %p372 = scmp.eq.s32.totalorder %s35, 1
      %p373 = por %p371, %p372
      %p375 = scmp.ne.s32.totalorder %s360, %s374
      %p376 = scmp.eq.s32.totalorder %s35, 0
      %p377 = por %p375, %p376
      %s379 = sadd.s32 %s378, 1
      %p382 = scmp.eq.s32.totalorder %s29, 1
      %p383 = scmp.ne.s32.totalorder %s378, %s380
      %p384 = scmp.eq.s32.totalorder %s29, 0
      %p385 = por %p383, %p384
      %p386 = scmp.ne.s32.totalorder %s378, %s380
      %p387 = scmp.eq.s32.totalorder %s34, 1
      %p388 = por %p386, %p387
      %p389 = scmp.ne.s32.totalorder %s380, %s381
      %p390 = scmp.eq.s32.totalorder %s34, 0
      %p391 = por %p389, %p390
      %p392 = scmp.ne.s32.totalorder %s380, %s381
      %p393 = scmp.eq.s32.totalorder %s35, 1
      %p394 = por %p392, %p393
      %p396 = scmp.ne.s32.totalorder %s381, %s395
      %p397 = scmp.eq.s32.totalorder %s35, 0
      %p398 = por %p396, %p397
      %s400 = sadd.s32 %s399, 1
      %p403 = scmp.eq.s32.totalorder %s29, 1
      %p404 = scmp.ne.s32.totalorder %s399, %s401
      %p405 = scmp.eq.s32.totalorder %s29, 0
      %p406 = por %p404, %p405
      %p407 = scmp.ne.s32.totalorder %s399, %s401
      %p408 = scmp.eq.s32.totalorder %s34, 1
      %p409 = por %p407, %p408
      %p410 = scmp.ne.s32.totalorder %s401, %s402
      %p411 = scmp.eq.s32.totalorder %s34, 0
      %p412 = por %p410, %p411
      %p413 = scmp.ne.s32.totalorder %s401, %s402
      %p414 = scmp.eq.s32.totalorder %s35, 1
      %p415 = por %p413, %p414
      %p417 = scmp.ne.s32.totalorder %s402, %s416
      %p418 = scmp.eq.s32.totalorder %s35, 0
      %p419 = por %p417, %p418
      %s421 = sadd.s32 %s420, 1
      %p424 = scmp.eq.s32.totalorder %s29, 1
      %p425 = scmp.ne.s32.totalorder %s420, %s422
      %p426 = scmp.eq.s32.totalorder %s29, 0
      %p427 = por %p425, %p426
      %p428 = scmp.ne.s32.totalorder %s420, %s422
      %p429 = scmp.eq.s32.totalorder %s34, 1
      %p430 = por %p428, %p429
      %p431 = scmp.ne.s32.totalorder %s422, %s423
      %p432 = scmp.eq.s32.totalorder %s34, 0
      %p433 = por %p431, %p432
      %p434 = scmp.ne.s32.totalorder %s422, %s423
      %p435 = scmp.eq.s32.totalorder %s35, 1
      %p436 = por %p434, %p435
      %p438 = scmp.ne.s32.totalorder %s423, %s437
      %p439 = scmp.eq.s32.totalorder %s35, 0
      %p440 = por %p438, %p439
      %s442 = sadd.s32 %s441, 1
      %p445 = scmp.eq.s32.totalorder %s29, 1
      %p446 = scmp.ne.s32.totalorder %s441, %s443
      %p447 = scmp.eq.s32.totalorder %s29, 0
      %p448 = por %p446, %p447
      %p449 = scmp.ne.s32.totalorder %s441, %s443
      %p450 = scmp.eq.s32.totalorder %s34, 1
      %p451 = por %p449, %p450
      %p452 = scmp.ne.s32.totalorder %s443, %s444
      %p453 = scmp.eq.s32.totalorder %s34, 0
      %p454 = por %p452, %p453
      %p455 = scmp.ne.s32.totalorder %s443, %s444
      %p456 = scmp.eq.s32.totalorder %s35, 1
      %p457 = por %p455, %p456
      %p459 = scmp.ne.s32.totalorder %s444, %s458
      %p460 = scmp.eq.s32.totalorder %s35, 0
      %p461 = por %p459, %p460
      %s463 = sadd.s32 %s462, 1
      %p466 = scmp.eq.s32.totalorder %s29, 1
      %p467 = scmp.ne.s32.totalorder %s462, %s464
      %p468 = scmp.eq.s32.totalorder %s29, 0
      %p469 = por %p467, %p468
      %p470 = scmp.ne.s32.totalorder %s462, %s464
      %p471 = scmp.eq.s32.totalorder %s34, 1
      %p472 = por %p470, %p471
      %p473 = scmp.ne.s32.totalorder %s464, %s465
      %p474 = scmp.eq.s32.totalorder %s34, 0
      %p475 = por %p473, %p474
      %p476 = scmp.ne.s32.totalorder %s464, %s465
      %p477 = scmp.eq.s32.totalorder %s35, 1
      %p478 = por %p476, %p477
      %p480 = scmp.ne.s32.totalorder %s465, %s479
      %p481 = scmp.eq.s32.totalorder %s35, 0
      %p482 = por %p480, %p481
      %s484 = sadd.s32 %s483, 1
      %p487 = scmp.eq.s32.totalorder %s29, 1
      %p488 = scmp.ne.s32.totalorder %s483, %s485
      %p489 = scmp.eq.s32.totalorder %s29, 0
      %p490 = por %p488, %p489
      %p491 = scmp.ne.s32.totalorder %s483, %s485
      %p492 = scmp.eq.s32.totalorder %s34, 1
      %p493 = por %p491, %p492
      %p494 = scmp.ne.s32.totalorder %s485, %s486
      %p495 = scmp.eq.s32.totalorder %s34, 0
      %p496 = por %p494, %p495
      %p497 = scmp.ne.s32.totalorder %s485, %s486
      %p498 = scmp.eq.s32.totalorder %s35, 1
      %p499 = por %p497, %p498
      %p501 = scmp.ne.s32.totalorder %s486, %s500
      %p502 = scmp.eq.s32.totalorder %s35, 0
      %p503 = por %p501, %p502
      %s504 = ssub.s32 %s29, %s36
      %p505 = scmp.eq.s32.totalorder %s504, 0
      %s507 = sadd.s32 %s506, 1
      %s508 = scalar_select %p505, %s506, %s507
      %p511 = pneg %p505
      %p512 = scmp.eq.s32.totalorder %s29, 1
      %p513 = por %p511, %p512
      %p514 = scmp.ne.s32.totalorder %s506, %s509
      %p515 = scmp.eq.s32.totalorder %s29, 0
      %p516 = por %p514, %p515
      %p517 = scmp.ne.s32.totalorder %s506, %s509
      %p518 = scmp.eq.s32.totalorder %s34, 1
      %p519 = por %p517, %p518
      %p520 = scmp.ne.s32.totalorder %s509, %s510
      %p521 = scmp.eq.s32.totalorder %s34, 0
      %p522 = por %p520, %p521
      %p523 = scmp.ne.s32.totalorder %s509, %s510
      %p524 = scmp.eq.s32.totalorder %s35, 1
      %p525 = por %p523, %p524
      %p527 = scmp.ne.s32.totalorder %s510, %s526
      %p528 = scmp.eq.s32.totalorder %s35, 0
      %p529 = por %p527, %p528
      %p530 = scmp.le.s32.totalorder 1, %s29
      %p531 = scmp.lt.s32.totalorder %s29, 3
      %p532 = pnand %p530, %p531
      %p533 = pneg %p532
      // Predicated region
      $region9: #{custom_autoencoder_forward.1} parent=5 // pred_check
        _
      $region10: #{custom_autoencoder_forward.1} parent=5 // pred_check_branch
        %535 = sbr.rel (%p532) target = $region12
      $region11: #{custom_autoencoder_forward.1} parent=5 // pred_region
        %s536 = ssub.s32 %s29, 1
        // Predicated region
        $region13: #{custom_autoencoder_forward.1} parent=11 // pred_check
          %p537 = pneg %p76
        $region14: #{custom_autoencoder_forward.1} parent=11 // pred_check_branch
          %539 = sbr.rel (%p537) target = $region16
        $region15: #{custom_autoencoder_forward.1} parent=11 // pred_region
          _
        $region16: #{custom_autoencoder_forward.1} parent=11 // pred_fallthru
          _
        // Predicated region
        $region17: #{custom_autoencoder_forward.1} parent=11 // pred_check
          %p540 = pneg %p97
        $region18: #{custom_autoencoder_forward.1} parent=11 // pred_check_branch
          %542 = sbr.rel (%p540) target = $region20
        $region19: #{custom_autoencoder_forward.1} parent=11 // pred_region
          _
        $region20: #{custom_autoencoder_forward.1} parent=11 // pred_fallthru
          _
        // Predicated region
        $region21: #{custom_autoencoder_forward.1} parent=11 // pred_check
          %p543 = pneg %p118
        $region22: #{custom_autoencoder_forward.1} parent=11 // pred_check_branch
          %545 = sbr.rel (%p543) target = $region24
        $region23: #{custom_autoencoder_forward.1} parent=11 // pred_region
          _
        $region24: #{custom_autoencoder_forward.1} parent=11 // pred_fallthru
          _
        // Predicated region
        $region25: #{custom_autoencoder_forward.1} parent=11 // pred_check
          %p546 = pneg %p139
        $region26: #{custom_autoencoder_forward.1} parent=11 // pred_check_branch
          %548 = sbr.rel (%p546) target = $region28
        $region27: #{custom_autoencoder_forward.1} parent=11 // pred_region
          _
        $region28: #{custom_autoencoder_forward.1} parent=11 // pred_fallthru
          _
        // Predicated region
        $region29: #{custom_autoencoder_forward.1} parent=11 // pred_check
          %p549 = pneg %p160
        $region30: #{custom_autoencoder_forward.1} parent=11 // pred_check_branch
          %551 = sbr.rel (%p549) target = $region32
        $region31: #{custom_autoencoder_forward.1} parent=11 // pred_region
          _
        $region32: #{custom_autoencoder_forward.1} parent=11 // pred_fallthru
          _
        // Predicated region
        $region33: #{custom_autoencoder_forward.1} parent=11 // pred_check
          %p552 = pneg %p181
        $region34: #{custom_autoencoder_forward.1} parent=11 // pred_check_branch
          %554 = sbr.rel (%p552) target = $region36
        $region35: #{custom_autoencoder_forward.1} parent=11 // pred_region
          _
        $region36: #{custom_autoencoder_forward.1} parent=11 // pred_fallthru
          _
        // Predicated region
        $region37: #{custom_autoencoder_forward.1} parent=11 // pred_check
          %p555 = pneg %p202
        $region38: #{custom_autoencoder_forward.1} parent=11 // pred_check_branch
          %557 = sbr.rel (%p555) target = $region40
        $region39: #{custom_autoencoder_forward.1} parent=11 // pred_region
          _
        $region40: #{custom_autoencoder_forward.1} parent=11 // pred_fallthru
          _
        // Predicated region
        $region41: #{custom_autoencoder_forward.1} parent=11 // pred_check
          %p558 = pneg %p223
        $region42: #{custom_autoencoder_forward.1} parent=11 // pred_check_branch
          %560 = sbr.rel (%p558) target = $region44
        $region43: #{custom_autoencoder_forward.1} parent=11 // pred_region
          _
        $region44: #{custom_autoencoder_forward.1} parent=11 // pred_fallthru
          _
        // Predicated region
        $region45: #{custom_autoencoder_forward.1} parent=11 // pred_check
          %p561 = pneg %p244
        $region46: #{custom_autoencoder_forward.1} parent=11 // pred_check_branch
          %563 = sbr.rel (%p561) target = $region48
        $region47: #{custom_autoencoder_forward.1} parent=11 // pred_region
          _
        $region48: #{custom_autoencoder_forward.1} parent=11 // pred_fallthru
          _
        // Predicated region
        $region49: #{custom_autoencoder_forward.1} parent=11 // pred_check
          %p564 = pneg %p265
        $region50: #{custom_autoencoder_forward.1} parent=11 // pred_check_branch
          %566 = sbr.rel (%p564) target = $region52
        $region51: #{custom_autoencoder_forward.1} parent=11 // pred_region
          _
        $region52: #{custom_autoencoder_forward.1} parent=11 // pred_fallthru
          _
        // Predicated region
        $region53: #{custom_autoencoder_forward.1} parent=11 // pred_check
          %p567 = pneg %p286
        $region54: #{custom_autoencoder_forward.1} parent=11 // pred_check_branch
          %569 = sbr.rel (%p567) target = $region56
        $region55: #{custom_autoencoder_forward.1} parent=11 // pred_region
          _
        $region56: #{custom_autoencoder_forward.1} parent=11 // pred_fallthru
          _
        // Predicated region
        $region57: #{custom_autoencoder_forward.1} parent=11 // pred_check
          %p570 = pneg %p307
        $region58: #{custom_autoencoder_forward.1} parent=11 // pred_check_branch
          %572 = sbr.rel (%p570) target = $region60
        $region59: #{custom_autoencoder_forward.1} parent=11 // pred_region
          _
        $region60: #{custom_autoencoder_forward.1} parent=11 // pred_fallthru
          _
        // Predicated region
        $region61: #{custom_autoencoder_forward.1} parent=11 // pred_check
          %p573 = pneg %p328
        $region62: #{custom_autoencoder_forward.1} parent=11 // pred_check_branch
          %575 = sbr.rel (%p573) target = $region64
        $region63: #{custom_autoencoder_forward.1} parent=11 // pred_region
          _
        $region64: #{custom_autoencoder_forward.1} parent=11 // pred_fallthru
          _
        // Predicated region
        $region65: #{custom_autoencoder_forward.1} parent=11 // pred_check
          %p576 = pneg %p349
        $region66: #{custom_autoencoder_forward.1} parent=11 // pred_check_branch
          %578 = sbr.rel (%p576) target = $region68
        $region67: #{custom_autoencoder_forward.1} parent=11 // pred_region
          _
        $region68: #{custom_autoencoder_forward.1} parent=11 // pred_fallthru
          _
        // Predicated region
        $region69: #{custom_autoencoder_forward.1} parent=11 // pred_check
          %p579 = pneg %p370
        $region70: #{custom_autoencoder_forward.1} parent=11 // pred_check_branch
          %581 = sbr.rel (%p579) target = $region72
        $region71: #{custom_autoencoder_forward.1} parent=11 // pred_region
          _
        $region72: #{custom_autoencoder_forward.1} parent=11 // pred_fallthru
          _
        // Predicated region
        $region73: #{custom_autoencoder_forward.1} parent=11 // pred_check
          %p582 = pneg %p391
        $region74: #{custom_autoencoder_forward.1} parent=11 // pred_check_branch
          %584 = sbr.rel (%p582) target = $region76
        $region75: #{custom_autoencoder_forward.1} parent=11 // pred_region
          _
        $region76: #{custom_autoencoder_forward.1} parent=11 // pred_fallthru
          _
        // Predicated region
        $region77: #{custom_autoencoder_forward.1} parent=11 // pred_check
          %p585 = pneg %p412
        $region78: #{custom_autoencoder_forward.1} parent=11 // pred_check_branch
          %587 = sbr.rel (%p585) target = $region80
        $region79: #{custom_autoencoder_forward.1} parent=11 // pred_region
          _
        $region80: #{custom_autoencoder_forward.1} parent=11 // pred_fallthru
          _
        // Predicated region
        $region81: #{custom_autoencoder_forward.1} parent=11 // pred_check
          %p588 = pneg %p433
        $region82: #{custom_autoencoder_forward.1} parent=11 // pred_check_branch
          %590 = sbr.rel (%p588) target = $region84
        $region83: #{custom_autoencoder_forward.1} parent=11 // pred_region
          _
        $region84: #{custom_autoencoder_forward.1} parent=11 // pred_fallthru
          _
        // Predicated region
        $region85: #{custom_autoencoder_forward.1} parent=11 // pred_check
          %p591 = pneg %p454
        $region86: #{custom_autoencoder_forward.1} parent=11 // pred_check_branch
          %593 = sbr.rel (%p591) target = $region88
        $region87: #{custom_autoencoder_forward.1} parent=11 // pred_region
          _
        $region88: #{custom_autoencoder_forward.1} parent=11 // pred_fallthru
          _
        // Predicated region
        $region89: #{custom_autoencoder_forward.1} parent=11 // pred_check
          %p594 = pneg %p475
        $region90: #{custom_autoencoder_forward.1} parent=11 // pred_check_branch
          %596 = sbr.rel (%p594) target = $region92
        $region91: #{custom_autoencoder_forward.1} parent=11 // pred_region
          _
        $region92: #{custom_autoencoder_forward.1} parent=11 // pred_fallthru
          _
        // Predicated region
        $region93: #{custom_autoencoder_forward.1} parent=11 // pred_check
          %p597 = pneg %p496
        $region94: #{custom_autoencoder_forward.1} parent=11 // pred_check_branch
          %599 = sbr.rel (%p597) target = $region96
        $region95: #{custom_autoencoder_forward.1} parent=11 // pred_region
          %s601 = ssub.s32 16, 16
          %602 = vsyncadd [#allocation9], %s601
          %s604 = sshll.u32 %s21, 4
          %s605 = int_to_ptr.vmem [resolvable:$true] %s604
          %607 = dma.vmem_to_smem %s605, 16, [#allocation8], [#allocation9]
        $region96: #{custom_autoencoder_forward.1} parent=11 // pred_fallthru
          _
      $region12: #{custom_autoencoder_forward.1} parent=5 // pred_fallthru
        _
      %p608 = scmp.lt.s32.totalorder %s29, 2
      // Predicated region
      $region97: #{custom_autoencoder_forward.1} parent=5 // pred_check
        %p609 = pneg %p608
      $region98: #{custom_autoencoder_forward.1} parent=5 // pred_check_branch
        %611 = sbr.rel (%p609) target = $region100
      $region99: #{custom_autoencoder_forward.1} parent=5 // pred_region
        // Predicated region
        $region101: #{custom_autoencoder_forward.1} parent=99 // pred_check
          %p612 = pneg %p49
        $region102: #{custom_autoencoder_forward.1} parent=99 // pred_check_branch
          %614 = sbr.rel (%p612) target = $region104
        $region103: #{custom_autoencoder_forward.1} parent=99 // pred_region
          %p615 = scmp.lt.s32.totalorder %s29, 1
          %s616 = scalar_select %p615, %s29, 1
          %s617 = smul.addr %s616, 2
          %s618 = smul.addr %s617, 4
          %s619 = scalar_lea.vmem %s0, %s618
        $region104: #{custom_autoencoder_forward.1} parent=99 // pred_fallthru
          _
      $region100: #{custom_autoencoder_forward.1} parent=5 // pred_fallthru
        _
      %p620 = scmp.le.s32.totalorder 1, %s29
      %p621 = scmp.lt.s32.totalorder %s29, 3
      %p622 = pnand %p620, %p621
      %p623 = pneg %p622
      // Predicated region
      $region105: #{custom_autoencoder_forward.1} parent=5 // pred_check
        _
      $region106: #{custom_autoencoder_forward.1} parent=5 // pred_check_branch
        %625 = sbr.rel (%p622) target = $region108
      $region107: #{custom_autoencoder_forward.1} parent=5 // pred_region
        %s626 = ssub.s32 %s29, 1
        // Predicated region
        $region109: #{custom_autoencoder_forward.1} parent=107 // pred_check
          %p627 = pneg %p496
        $region110: #{custom_autoencoder_forward.1} parent=107 // pred_check_branch
          %629 = sbr.rel (%p627) target = $region112
        $region111: #{custom_autoencoder_forward.1} parent=107 // pred_region
          %630 = dma.done [#allocation9], 16
        $region112: #{custom_autoencoder_forward.1} parent=107 // pred_fallthru
          _
        %631 = sfence
        %p632 = scmp.lt.s32.totalorder %s34, 1
        %s633 = scalar_select %p632, %s34, 1
        %s634 = smul.addr %s633, 2
        %s635 = smul.addr %s634, 4
        %s636 = scalar_lea.vmem %s0, %s635
        %p637 = pneg %p55
        %p638 = pneg %p52
        %p639 = pneg %p76
        %p640 = pneg %p73
        %p641 = pneg %p97
        %p642 = pneg %p94
        %p643 = pneg %p118
        %p644 = pneg %p115
        %p645 = pneg %p139
        %p646 = pneg %p136
        %p647 = pneg %p160
        %p648 = pneg %p157
        %p649 = pneg %p181
        %p650 = pneg %p178
        %p651 = pneg %p202
        %p652 = pneg %p199
        %p653 = pneg %p223
        %p654 = pneg %p220
        %p655 = pneg %p244
        %p656 = pneg %p241
        %p657 = pneg %p265
        %p658 = pneg %p262
        %p659 = pneg %p286
        %p660 = pneg %p283
        %p661 = pneg %p307
        %p662 = pneg %p304
        %p663 = pneg %p328
        %p664 = pneg %p325
        %p665 = pneg %p349
        %p666 = pneg %p346
        %p667 = pneg %p370
        %p668 = pneg %p367
        %p669 = pneg %p391
        %p670 = pneg %p388
        %p671 = pneg %p412
        %p672 = pneg %p409
        %p673 = pneg %p433
        %p674 = pneg %p430
        %p675 = pneg %p454
        %p676 = pneg %p451
        %p677 = pneg %p475
        %p678 = pneg %p472
        %p679 = pneg %p496
        %p680 = pneg %p493
        %p681 = pneg %p522
        %p682 = pneg %p519
        %p683 = scmp.lt.s32.totalorder %s34, 1
        %s684 = scalar_select %p683, %s34, 1
        %s685 = smul.addr %s684, 2
        %s686 = smul.addr %s685, 4
        %s687 = scalar_lea.vmem %s22, %s686
        %p688 = scmp.lt.s32.totalorder %s34, 1
        %s689 = scalar_select %p688, %s34, 1
        %s690 = smul.addr %s689, 2
        %s691 = smul.addr %s690, 4
        %s692 = scalar_lea.vmem %s0, %s691
        %p693 = scmp.lt.s32.totalorder %s34, 1
        %s694 = scalar_select %p693, %s34, 1
        %s695 = smul.addr %s694, 2
        %s696 = smul.addr %s695, 4
        %s697 = scalar_lea.vmem %s22, %s696
        %698 = vst [vmem:[#allocation2] sm:$0xff] 0.0
        %699 = vst [vmem:[#allocation2 + $0x8] sm:$0xff] 0.0
        %vm700 = vcmask 277504
        %701 = vst.msk [vmem:[#allocation2 + $0x10] sm:$0xff] %vm700, 0.0
        %vm702 = vcmask 670720
        %703 = vst.msk [vmem:[#allocation3] sm:$0xff] %vm702, 0.0
        %704 = vst.msk [vmem:[#allocation3 + $0x8] sm:$0xff] %vm702, 0.0
        %s705 = sld [smem:[#allocation8]]
        %s706 = sld [smem:[#allocation8 + $0x1]]
        %s707 = sld [smem:[#allocation8 + $0x2]]
        %s708 = sld [smem:[#allocation8 + $0x3]]
        %s709 = sld [smem:[#allocation8 + $0x4]]
        %v710 = vld [vmem:[%s692] sm:$0xff]
        %v712 = vcombine.high %v710, %v710
        %713 = vrot.lane.b32.xlu0 %v710, 17
        %v714 = vpop.permute.xlu0 %713
        %715 = vrot.lane.b32.xlu0 %v712, 17
        %v716 = vpop.permute.xlu0 %715
        %vm717 = vcmask 138240
        %v718 = vsel %vm717, %v714, %v716
        %vm722 = vcmask 1043592
        %723 = vst.msk [vmem:[#allocation2] sm:$0xf] %vm722, %v714
        %724 = vst [vmem:[#allocation2 + $0x8] sm:$0xf] %v718
        %vm725 = vcmask 134144
        %726 = vst.msk [vmem:[#allocation2 + $0x10] sm:$0xf] %vm725, %v716
        %v727 = vld [vmem:[#allocation2] sm:$0xf]
        %v728 = vld [vmem:[#allocation2 + $0x8] sm:$0xf]
        %v729 = vld [vmem:[%s1] ss:$8 sm:$0x3]
        %v731 = vlaneseq
        %v732 = vshrl.u32 %v731, 7
        %v733 = vsub.s32 0, %v732
        %v734 = vrot.slane %v729, %v733
        %v735 = vlaneseq
        %v736 = vshrl.u32 %v735, 7
        %v737 = vsub.s32 1, %v736
        %v738 = vrot.slane %v729, %v737
        %v741 = vmul.f32 %v727, %v734
        %v742 = vmul.f32 %v728, %v738
        %743 = vst [vmem:[#allocation4] sm:$0xf] %v741
        %744 = vst [vmem:[#allocation4 + $0x8] sm:$0xf] %v742
        %v745 = vld [vmem:[#allocation2] sm:$0xf]
        %v746 = vld [vmem:[#allocation2 + $0x8] sm:$0xf]
        %v747 = vld [vmem:[#allocation2 + $0x10] sm:$0xf]
        %s748 = scalar_lea.vmem %s1, 1
        %v749 = vld [vmem:[%s748] ss:$8 sm:$0x3]
        %v751 = vlaneseq
        %v752 = vshrl.u32 %v751, 7
        %v753 = vsub.s32 0, %v752
        %v754 = vrot.slane %v749, %v753
        %v755 = vlaneseq
        %v756 = vshrl.u32 %v755, 7
        %v757 = vsub.s32 1, %v756
        %v758 = vrot.slane %v749, %v757
        %759 = vrot.lane.b32.xlu0 %v754, 1
        %v760 = vpop.permute.xlu0 %759
        %761 = vrot.lane.b32.xlu0 %v758, 1
        %v762 = vpop.permute.xlu0 %761
        %vm763 = vcmask 7168
        %v764 = vsel %vm763, %v760, %v762
        %v768 = vmul.f32 %v745, %v760
        %v769 = vmul.f32 %v746, %v764
        %v770 = vmul.f32 %v747, %v762
        %v774 = vrot.slane %v768, 4
        %v775 = vrot.slane %v769, 4
        %v776 = vrot.slane %v770, 4
        %777 = vrot.lane.b32.xlu0 %v774, 127
        %v778 = vpop.permute.xlu0 %777
        %779 = vrot.lane.b32.xlu0 %v775, 127
        %v780 = vpop.permute.xlu0 %779
        %781 = vrot.lane.b32.xlu0 %v776, 127
        %v782 = vpop.permute.xlu0 %781
        %vm783 = vcmask 1039360
        %v784 = vsel %vm783, %v778, %v780
        %v785 = vsel %vm783, %v780, %v782
        %788 = vst [vmem:[#allocation4] sm:$0xf0] %v784
        %789 = vst [vmem:[#allocation4 + $0x8] sm:$0xf0] %v785
        %v790 = vld [vmem:[#allocation2] sm:$0xf]
        %v791 = vld [vmem:[#allocation2 + $0x8] sm:$0xf]
        %v792 = vld [vmem:[#allocation2 + $0x10] sm:$0xf]
        %s793 = scalar_lea.vmem %s1, 2
        %v794 = vld [vmem:[%s793] ss:$8 sm:$0x3]
        %v796 = vlaneseq
        %v797 = vshrl.u32 %v796, 7
        %v798 = vsub.s32 0, %v797
        %v799 = vrot.slane %v794, %v798
        %v800 = vlaneseq
        %v801 = vshrl.u32 %v800, 7
        %v802 = vsub.s32 1, %v801
        %v803 = vrot.slane %v794, %v802
        %804 = vrot.lane.b32.xlu0 %v799, 2
        %v805 = vpop.permute.xlu0 %804
        %806 = vrot.lane.b32.xlu0 %v803, 2
        %v807 = vpop.permute.xlu0 %806
        %vm808 = vcmask 15360
        %v809 = vsel %vm808, %v805, %v807
        %v813 = vmul.f32 %v790, %v805
        %v814 = vmul.f32 %v791, %v809
        %v815 = vmul.f32 %v792, %v807
        %819 = vrot.lane.b32.xlu0 %v813, 126
        %v820 = vpop.permute.xlu0 %819
        %821 = vrot.lane.b32.xlu0 %v814, 126
        %v822 = vpop.permute.xlu0 %821
        %823 = vrot.lane.b32.xlu0 %v815, 126
        %v824 = vpop.permute.xlu0 %823
        %vm825 = vcmask 1031168
        %v826 = vsel %vm825, %v820, %v822
        %v827 = vsel %vm825, %v822, %v824
        %830 = vst [vmem:[#allocation4 + $0x10] sm:$0xf] %v826
        %831 = vst [vmem:[#allocation4 + $0x18] sm:$0xf] %v827
        %v832 = vld [vmem:[#allocation2] sm:$0xf]
        %v833 = vld [vmem:[#allocation2 + $0x8] sm:$0xf]
        %v834 = vld [vmem:[#allocation2 + $0x10] sm:$0xf]
        %s835 = scalar_lea.vmem %s1, 3
        %v836 = vld [vmem:[%s835] ss:$8 sm:$0x3]
        %v838 = vlaneseq
        %v839 = vshrl.u32 %v838, 7
        %v840 = vsub.s32 0, %v839
        %v841 = vrot.slane %v836, %v840
        %v842 = vlaneseq
        %v843 = vshrl.u32 %v842, 7
        %v844 = vsub.s32 1, %v843
        %v845 = vrot.slane %v836, %v844
        %846 = vrot.lane.b32.xlu0 %v841, 16
        %v847 = vpop.permute.xlu0 %846
        %848 = vrot.lane.b32.xlu0 %v845, 16
        %v849 = vpop.permute.xlu0 %848
        %vm850 = vcmask 130048
        %v851 = vsel %vm850, %v847, %v849
        %v855 = vmul.f32 %v832, %v847
        %v856 = vmul.f32 %v833, %v851
        %v857 = vmul.f32 %v834, %v849
        %v861 = vrot.slane %v855, 4
        %v862 = vrot.slane %v856, 4
        %v863 = vrot.slane %v857, 4
        %864 = vrot.lane.b32.xlu0 %v861, 112
        %v865 = vpop.permute.xlu0 %864
        %866 = vrot.lane.b32.xlu0 %v862, 112
        %v867 = vpop.permute.xlu0 %866
        %868 = vrot.lane.b32.xlu0 %v863, 112
        %v869 = vpop.permute.xlu0 %868
        %vm870 = vcmask 916480
        %v871 = vsel %vm870, %v865, %v867
        %v872 = vsel %vm870, %v867, %v869
        %875 = vst [vmem:[#allocation4 + $0x10] sm:$0xf0] %v871
        %876 = vst [vmem:[#allocation4 + $0x18] sm:$0xf0] %v872
        %v877 = vld [vmem:[#allocation2] sm:$0xf]
        %v878 = vld [vmem:[#allocation2 + $0x8] sm:$0xf]
        %v879 = vld [vmem:[#allocation2 + $0x10] sm:$0xf]
        %s880 = scalar_lea.vmem %s1, 4
        %v881 = vld [vmem:[%s880] ss:$8 sm:$0x3]
        %v883 = vlaneseq
        %v884 = vshrl.u32 %v883, 7
        %v885 = vsub.s32 0, %v884
        %v886 = vrot.slane %v881, %v885
        %v887 = vlaneseq
        %v888 = vshrl.u32 %v887, 7
        %v889 = vsub.s32 1, %v888
        %v890 = vrot.slane %v881, %v889
        %891 = vrot.lane.b32.xlu0 %v886, 17
        %v892 = vpop.permute.xlu0 %891
        %893 = vrot.lane.b32.xlu0 %v890, 17
        %v894 = vpop.permute.xlu0 %893
        %v895 = vsel %vm717, %v892, %v894
        %v899 = vmul.f32 %v877, %v892
        %v900 = vmul.f32 %v878, %v895
        %v901 = vmul.f32 %v879, %v894
        %905 = vrot.lane.b32.xlu0 %v899, 111
        %v906 = vpop.permute.xlu0 %905
        %907 = vrot.lane.b32.xlu0 %v900, 111
        %v908 = vpop.permute.xlu0 %907
        %909 = vrot.lane.b32.xlu0 %v901, 111
        %v910 = vpop.permute.xlu0 %909
        %vm911 = vcmask 908288
        %v912 = vsel %vm911, %v906, %v908
        %v913 = vsel %vm911, %v908, %v910
        %916 = vst [vmem:[#allocation4 + $0x20] sm:$0xf] %v912
        %917 = vst [vmem:[#allocation4 + $0x28] sm:$0xf] %v913
        %v918 = vld [vmem:[#allocation2] sm:$0xf]
        %v919 = vld [vmem:[#allocation2 + $0x8] sm:$0xf]
        %v920 = vld [vmem:[#allocation2 + $0x10] sm:$0xf]
        %s921 = scalar_lea.vmem %s1, 5
        %v922 = vld [vmem:[%s921] ss:$8 sm:$0x3]
        %v924 = vlaneseq
        %v925 = vshrl.u32 %v924, 7
        %v926 = vsub.s32 0, %v925
        %v927 = vrot.slane %v922, %v926
        %v928 = vlaneseq
        %v929 = vshrl.u32 %v928, 7
        %v930 = vsub.s32 1, %v929
        %v931 = vrot.slane %v922, %v930
        %932 = vrot.lane.b32.xlu0 %v927, 18
        %v933 = vpop.permute.xlu0 %932
        %934 = vrot.lane.b32.xlu0 %v931, 18
        %v935 = vpop.permute.xlu0 %934
        %vm936 = vcmask 146432
        %v937 = vsel %vm936, %v933, %v935
        %v941 = vmul.f32 %v918, %v933
        %v942 = vmul.f32 %v919, %v937
        %v943 = vmul.f32 %v920, %v935
        %v947 = vrot.slane %v941, 4
        %v948 = vrot.slane %v942, 4
        %v949 = vrot.slane %v943, 4
        %950 = vrot.lane.b32.xlu0 %v947, 110
        %v951 = vpop.permute.xlu0 %950
        %952 = vrot.lane.b32.xlu0 %v948, 110
        %v953 = vpop.permute.xlu0 %952
        %954 = vrot.lane.b32.xlu0 %v949, 110
        %v955 = vpop.permute.xlu0 %954
        %vm956 = vcmask 900096
        %v957 = vsel %vm956, %v951, %v953
        %v958 = vsel %vm956, %v953, %v955
        %961 = vst [vmem:[#allocation4 + $0x20] sm:$0xf0] %v957
        %962 = vst [vmem:[#allocation4 + $0x28] sm:$0xf0] %v958
        %v963 = vld [vmem:[#allocation2] sm:$0xf]
        %v964 = vld [vmem:[#allocation2 + $0x8] sm:$0xf]
        %v965 = vld [vmem:[#allocation2 + $0x10] sm:$0xf]
        %s966 = scalar_lea.vmem %s1, 6
        %v967 = vld [vmem:[%s966] ss:$8 sm:$0x3]
        %v969 = vlaneseq
        %v970 = vshrl.u32 %v969, 7
        %v971 = vsub.s32 0, %v970
        %v972 = vrot.slane %v967, %v971
        %v973 = vlaneseq
        %v974 = vshrl.u32 %v973, 7
        %v975 = vsub.s32 1, %v974
        %v976 = vrot.slane %v967, %v975
        %977 = vrot.lane.b32.xlu0 %v972, 32
        %v978 = vpop.permute.xlu0 %977
        %979 = vrot.lane.b32.xlu0 %v976, 32
        %v980 = vpop.permute.xlu0 %979
        %vm981 = vcmask 261120
        %v982 = vsel %vm981, %v978, %v980
        %v986 = vmul.f32 %v963, %v978
        %v987 = vmul.f32 %v964, %v982
        %v988 = vmul.f32 %v965, %v980
        %992 = vrot.lane.b32.xlu0 %v986, 96
        %v993 = vpop.permute.xlu0 %992
        %994 = vrot.lane.b32.xlu0 %v987, 96
        %v995 = vpop.permute.xlu0 %994
        %996 = vrot.lane.b32.xlu0 %v988, 96
        %v997 = vpop.permute.xlu0 %996
        %vm998 = vcmask 785408
        %v999 = vsel %vm998, %v993, %v995
        %v1000 = vsel %vm998, %v995, %v997
        %1003 = vst [vmem:[#allocation4 + $0x30] sm:$0xf] %v999
        %1004 = vst [vmem:[#allocation4 + $0x38] sm:$0xf] %v1000
        %v1005 = vld [vmem:[#allocation2] sm:$0xf]
        %v1006 = vld [vmem:[#allocation2 + $0x8] sm:$0xf]
        %v1007 = vld [vmem:[#allocation2 + $0x10] sm:$0xf]
        %s1008 = scalar_lea.vmem %s1, 7
        %v1009 = vld [vmem:[%s1008] ss:$8 sm:$0x3]
        %v1011 = vlaneseq
        %v1012 = vshrl.u32 %v1011, 7
        %v1013 = vsub.s32 0, %v1012
        %v1014 = vrot.slane %v1009, %v1013
        %v1015 = vlaneseq
        %v1016 = vshrl.u32 %v1015, 7
        %v1017 = vsub.s32 1, %v1016
        %v1018 = vrot.slane %v1009, %v1017
        %1019 = vrot.lane.b32.xlu0 %v1014, 33
        %v1020 = vpop.permute.xlu0 %1019
        %1021 = vrot.lane.b32.xlu0 %v1018, 33
        %v1022 = vpop.permute.xlu0 %1021
        %vm1023 = vcmask 269312
        %v1024 = vsel %vm1023, %v1020, %v1022
        %v1028 = vmul.f32 %v1005, %v1020
        %v1029 = vmul.f32 %v1006, %v1024
        %v1030 = vmul.f32 %v1007, %v1022
        %v1034 = vrot.slane %v1028, 4
        %v1035 = vrot.slane %v1029, 4
        %v1036 = vrot.slane %v1030, 4
        %1037 = vrot.lane.b32.xlu0 %v1034, 95
        %v1038 = vpop.permute.xlu0 %1037
        %1039 = vrot.lane.b32.xlu0 %v1035, 95
        %v1040 = vpop.permute.xlu0 %1039
        %1041 = vrot.lane.b32.xlu0 %v1036, 95
        %v1042 = vpop.permute.xlu0 %1041
        %vm1043 = vcmask 777216
        %v1044 = vsel %vm1043, %v1038, %v1040
        %v1045 = vsel %vm1043, %v1040, %v1042
        %1048 = vst [vmem:[#allocation4 + $0x30] sm:$0xf0] %v1044
        %1049 = vst [vmem:[#allocation4 + $0x38] sm:$0xf0] %v1045
        %v1050 = vld [vmem:[#allocation2] sm:$0xf]
        %v1051 = vld [vmem:[#allocation2 + $0x8] sm:$0xf]
        %v1052 = vld [vmem:[#allocation2 + $0x10] sm:$0xf]
        %s1053 = scalar_lea.vmem %s1, 16
        %v1054 = vld [vmem:[%s1053] ss:$8 sm:$0x3]
        %v1056 = vlaneseq
        %v1057 = vshrl.u32 %v1056, 7
        %v1058 = vsub.s32 0, %v1057
        %v1059 = vrot.slane %v1054, %v1058
        %v1060 = vlaneseq
        %v1061 = vshrl.u32 %v1060, 7
        %v1062 = vsub.s32 1, %v1061
        %v1063 = vrot.slane %v1054, %v1062
        %1064 = vrot.lane.b32.xlu0 %v1059, 34
        %v1065 = vpop.permute.xlu0 %1064
        %1066 = vrot.lane.b32.xlu0 %v1063, 34
        %v1067 = vpop.permute.xlu0 %1066
        %v1068 = vsel %vm700, %v1065, %v1067
        %v1072 = vmul.f32 %v1050, %v1065
        %v1073 = vmul.f32 %v1051, %v1068
        %v1074 = vmul.f32 %v1052, %v1067
        %1078 = vrot.lane.b32.xlu0 %v1072, 94
        %v1079 = vpop.permute.xlu0 %1078
        %1080 = vrot.lane.b32.xlu0 %v1073, 94
        %v1081 = vpop.permute.xlu0 %1080
        %1082 = vrot.lane.b32.xlu0 %v1074, 94
        %v1083 = vpop.permute.xlu0 %1082
        %vm1084 = vcmask 769024
        %v1085 = vsel %vm1084, %v1079, %v1081
        %v1086 = vsel %vm1084, %v1081, %v1083
        %1089 = vst [vmem:[#allocation4 + $0x40] sm:$0xf] %v1085
        %1090 = vst [vmem:[#allocation4 + $0x48] sm:$0xf] %v1086
        %v1091 = vld [vmem:[%s7] sm:$0xff]
        %v1092 = vld [vmem:[#allocation4] sm:$0xff]
        %v1093 = vld [vmem:[#allocation4 + $0x8] sm:$0xff]
        %v1094 = vld [vmem:[#allocation4 + $0x10] sm:$0xff]
        %v1095 = vld [vmem:[#allocation4 + $0x18] sm:$0xff]
        %v1096 = vld [vmem:[#allocation4 + $0x20] sm:$0xff]
        %v1097 = vld [vmem:[#allocation4 + $0x28] sm:$0xff]
        %v1098 = vld [vmem:[#allocation4 + $0x30] sm:$0xff]
        %v1099 = vld [vmem:[#allocation4 + $0x38] sm:$0xff]
        %v1100 = vld [vmem:[#allocation4 + $0x40] sm:$0xf]
        %v1101 = vld [vmem:[#allocation4 + $0x48] sm:$0xf]
        %v1102 = vld [vmem:[%s8] sm:$0xff]
        %1104 = vset.pattern.permute.xlu0 0
        %1105 = vperm.xlu0 %1104, %v1102
        %v1106 = vpop.permute.xlu0 %1105
        %vm1108 = vcmask 293888
        %v1110 = vsel %vm1108, %v1091, 0
        %vm1112 = vcmask 1043456
        %v1114 = vsel %vm1112, %v1100, 0
        %v1117 = vsel %vm1112, %v1101, 0
        %1119 = vmatprep.subr.mxu0 %v1093
        %1120 = vmatpush1.msra.mxu0 %v1092
        %1121 = vmatprep.subr.mxu0 %v1095
        %1122 = vmatpush1.msra.mxu0 %v1094
        %1123 = vmatprep.subr.mxu0 %v1097
        %1124 = vmatpush1.msra.mxu0 %v1096
        %1125 = vmatprep.subr.mxu0 %v1099
        %1126 = vmatpush1.msra.mxu0 %v1098
        %1127 = vmatprep.subr.mxu0 %v1117
        %1128 = vmatpush1.msra.mxu0 %v1114
        %1129 = vmatprep.subr.mxu0 0.0
        %1130 = vmatpush1.msra.mxu0 0.0
        %1131 = vmatprep.subr.mxu0 0.0
        %1132 = vmatpush1.msra.mxu0 0.0
        %1133 = vmatprep.subr.mxu0 0.0
        %1134 = vmatpush1.msra.mxu0 0.0
        %1135 = vmatprep.subr.mxu0 0.0
        %1136 = vmatpush1.msra.mxu0 0.0
        %1137 = vmatprep.subr.mxu0 0.0
        %1138 = vmatpush1.msra.mxu0 0.0
        %1139 = vmatprep.subr.mxu0 0.0
        %1140 = vmatpush1.msra.mxu0 0.0
        %1141 = vmatprep.subr.mxu0 0.0
        %1142 = vmatpush1.msra.mxu0 0.0
        %1143 = vmatprep.subr.mxu0 0.0
        %1144 = vmatpush1.msra.mxu0 0.0
        %1145 = vmatprep.subr.mxu0 0.0
        %1146 = vmatpush1.msra.mxu0 0.0
        %1147 = vmatprep.subr.mxu0 0.0
        %1148 = vmatpush1.msra.mxu0 0.0
        %1149 = vmatprep.subr.mxu0 0.0
        %1150 = vmatpush1.msra.mxu0 0.0
        %1151 = vmatprep.subr.mxu0 0.0
        %1152 = vmatpush1.msra.mxu0 0.0
        %1153 = vmatprep.subr.mxu0 0.0
        %1154 = vmatpush1.msra.mxu0 0.0
        %1155 = vmatprep.subr.mxu0 0.0
        %1156 = vmatpush1.msra.mxu0 0.0
        %1157 = vmatprep.subr.mxu0 0.0
        %1158 = vmatpush1.msra.mxu0 0.0
        %1159 = vmatprep.subr.mxu0 0.0
        %1160 = vmatpush1.msra.mxu0 0.0
        %1161 = vmatprep.subr.mxu0 0.0
        %1162 = vmatpush1.msra.mxu0 0.0
        %1163 = vmatprep.subr.mxu0 0.0
        %1164 = vmatpush1.msra.mxu0 0.0
        %1165 = vmatprep.subr.mxu0 0.0
        %1166 = vmatpush1.msra.mxu0 0.0
        %1167 = vmatprep.subr.mxu0 0.0
        %1168 = vmatpush1.msra.mxu0 0.0
        %1169 = vmatprep.subr.mxu0 0.0
        %1170 = vmatpush1.msra.mxu0 0.0
        %1171 = vmatprep.subr.mxu0 0.0
        %1172 = vmatpush1.msra.mxu0 0.0
        %1173 = vmatprep.subr.mxu0 0.0
        %1174 = vmatpush1.msra.mxu0 0.0
        %1175 = vmatprep.subr.mxu0 0.0
        %1176 = vmatpush1.msra.mxu0 0.0
        %1177 = vmatprep.subr.mxu0 0.0
        %1178 = vmatpush1.msra.mxu0 0.0
        %1179 = vmatprep.subr.mxu0 0.0
        %1180 = vmatpush1.msra.mxu0 0.0
        %1181 = vmatprep.subr.mxu0 0.0
        %1182 = vmatpush1.msra.mxu0 0.0
        %1183 = vmatprep.mubr.f32.mxu0 0.0
        %1184 = vmatmul.mubr.f32.gmra.mrb[0].mxu0 %v1110
        %v1185 = vpop.f32.mrb[0].mxu0
        %v1186 = vadd.f32 %v1106, %v1185
        %v1187 = vpop.f32.mrb[0].mxu0
        %v1188 = vadd.f32 %v1106, %v1187
        %1189 = vdwg.mxu0
        %1192 = vrot.lane.b32.xlu0 %v1186, 17
        %v1193 = vpop.permute.xlu0 %1192
        %1194 = vrot.lane.b32.xlu0 %v1188, 17
        %v1195 = vpop.permute.xlu0 %1194
        %v1196 = vsel %vm717, %v1193, %v1195
        %vm1200 = vcmask 1047688
        %1201 = vst.msk [vmem:[#allocation2] sm:$0xff] %vm1200, %v1193
        %1202 = vst [vmem:[#allocation2 + $0x8] sm:$0xff] %v1196
        %1203 = vst.msk [vmem:[#allocation2 + $0x10] sm:$0xff] %vm717, %v1195
        %v1204 = vld [vmem:[#allocation2] sm:$0xff]
        %v1205 = vld [vmem:[#allocation2 + $0x8] sm:$0xff]
        %v1206 = vld [vmem:[%s1] ss:$8 sm:$0x3]
        %v1208 = vlaneseq
        %v1209 = vshrl.u32 %v1208, 7
        %v1210 = vsub.s32 0, %v1209
        %v1211 = vrot.slane %v1206, %v1210
        %v1212 = vlaneseq
        %v1213 = vshrl.u32 %v1212, 7
        %v1214 = vsub.s32 1, %v1213
        %v1215 = vrot.slane %v1206, %v1214
        %v1218 = vmul.f32 %v1204, %v1211
        %v1219 = vmul.f32 %v1205, %v1215
        %1220 = vst [vmem:[#allocation5] sm:$0xff] %v1218
        %1221 = vst [vmem:[#allocation5 + $0x8] sm:$0xff] %v1219
        %v1222 = vld [vmem:[#allocation2] sm:$0xff]
        %v1223 = vld [vmem:[#allocation2 + $0x8] sm:$0xff]
        %v1224 = vld [vmem:[#allocation2 + $0x10] sm:$0xff]
        %v1225 = vld [vmem:[%s748] ss:$8 sm:$0x3]
        %v1227 = vlaneseq
        %v1228 = vshrl.u32 %v1227, 7
        %v1229 = vsub.s32 0, %v1228
        %v1230 = vrot.slane %v1225, %v1229
        %v1231 = vlaneseq
        %v1232 = vshrl.u32 %v1231, 7
        %v1233 = vsub.s32 1, %v1232
        %v1234 = vrot.slane %v1225, %v1233
        %1235 = vrot.lane.b32.xlu0 %v1230, 1
        %v1236 = vpop.permute.xlu0 %1235
        %1237 = vrot.lane.b32.xlu0 %v1234, 1
        %v1238 = vpop.permute.xlu0 %1237
        %v1239 = vsel %vm763, %v1236, %v1238
        %v1243 = vmul.f32 %v1222, %v1236
        %v1244 = vmul.f32 %v1223, %v1239
        %v1245 = vmul.f32 %v1224, %v1238
        %1249 = vrot.lane.b32.xlu0 %v1243, 127
        %v1250 = vpop.permute.xlu0 %1249
        %1251 = vrot.lane.b32.xlu0 %v1244, 127
        %v1252 = vpop.permute.xlu0 %1251
        %1253 = vrot.lane.b32.xlu0 %v1245, 127
        %v1254 = vpop.permute.xlu0 %1253
        %v1255 = vsel %vm783, %v1250, %v1252
        %v1256 = vsel %vm783, %v1252, %v1254
        %1259 = vst [vmem:[#allocation5 + $0x10] sm:$0xff] %v1255
        %1260 = vst [vmem:[#allocation5 + $0x18] sm:$0xff] %v1256
        %v1261 = vld [vmem:[#allocation2] sm:$0xff]
        %v1262 = vld [vmem:[#allocation2 + $0x8] sm:$0xff]
        %v1263 = vld [vmem:[#allocation2 + $0x10] sm:$0xff]
        %v1264 = vld [vmem:[%s793] ss:$8 sm:$0x3]
        %v1266 = vlaneseq
        %v1267 = vshrl.u32 %v1266, 7
        %v1268 = vsub.s32 0, %v1267
        %v1269 = vrot.slane %v1264, %v1268
        %v1270 = vlaneseq
        %v1271 = vshrl.u32 %v1270, 7
        %v1272 = vsub.s32 1, %v1271
        %v1273 = vrot.slane %v1264, %v1272
        %1274 = vrot.lane.b32.xlu0 %v1269, 2
        %v1275 = vpop.permute.xlu0 %1274
        %1276 = vrot.lane.b32.xlu0 %v1273, 2
        %v1277 = vpop.permute.xlu0 %1276
        %v1278 = vsel %vm808, %v1275, %v1277
        %v1282 = vmul.f32 %v1261, %v1275
        %v1283 = vmul.f32 %v1262, %v1278
        %v1284 = vmul.f32 %v1263, %v1277
        %1288 = vrot.lane.b32.xlu0 %v1282, 126
        %v1289 = vpop.permute.xlu0 %1288
        %1290 = vrot.lane.b32.xlu0 %v1283, 126
        %v1291 = vpop.permute.xlu0 %1290
        %1292 = vrot.lane.b32.xlu0 %v1284, 126
        %v1293 = vpop.permute.xlu0 %1292
        %v1294 = vsel %vm825, %v1289, %v1291
        %v1295 = vsel %vm825, %v1291, %v1293
        %1298 = vst [vmem:[#allocation5 + $0x20] sm:$0xff] %v1294
        %1299 = vst [vmem:[#allocation5 + $0x28] sm:$0xff] %v1295
        %v1300 = vld [vmem:[#allocation2] sm:$0xff]
        %v1301 = vld [vmem:[#allocation2 + $0x8] sm:$0xff]
        %v1302 = vld [vmem:[#allocation2 + $0x10] sm:$0xff]
        %v1303 = vld [vmem:[%s835] ss:$8 sm:$0x3]
        %v1305 = vlaneseq
        %v1306 = vshrl.u32 %v1305, 7
        %v1307 = vsub.s32 0, %v1306
        %v1308 = vrot.slane %v1303, %v1307
        %v1309 = vlaneseq
        %v1310 = vshrl.u32 %v1309, 7
        %v1311 = vsub.s32 1, %v1310
        %v1312 = vrot.slane %v1303, %v1311
        %1313 = vrot.lane.b32.xlu0 %v1308, 16
        %v1314 = vpop.permute.xlu0 %1313
        %1315 = vrot.lane.b32.xlu0 %v1312, 16
        %v1316 = vpop.permute.xlu0 %1315
        %v1317 = vsel %vm850, %v1314, %v1316
        %v1321 = vmul.f32 %v1300, %v1314
        %v1322 = vmul.f32 %v1301, %v1317
        %v1323 = vmul.f32 %v1302, %v1316
        %1327 = vrot.lane.b32.xlu0 %v1321, 112
        %v1328 = vpop.permute.xlu0 %1327
        %1329 = vrot.lane.b32.xlu0 %v1322, 112
        %v1330 = vpop.permute.xlu0 %1329
        %1331 = vrot.lane.b32.xlu0 %v1323, 112
        %v1332 = vpop.permute.xlu0 %1331
        %v1333 = vsel %vm870, %v1328, %v1330
        %v1334 = vsel %vm870, %v1330, %v1332
        %1337 = vst [vmem:[#allocation5 + $0x30] sm:$0xff] %v1333
        %1338 = vst [vmem:[#allocation5 + $0x38] sm:$0xff] %v1334
        %v1339 = vld [vmem:[#allocation2] sm:$0xff]
        %v1340 = vld [vmem:[#allocation2 + $0x8] sm:$0xff]
        %v1341 = vld [vmem:[#allocation2 + $0x10] sm:$0xff]
        %v1342 = vld [vmem:[%s880] ss:$8 sm:$0x3]
        %v1344 = vlaneseq
        %v1345 = vshrl.u32 %v1344, 7
        %v1346 = vsub.s32 0, %v1345
        %v1347 = vrot.slane %v1342, %v1346
        %v1348 = vlaneseq
        %v1349 = vshrl.u32 %v1348, 7
        %v1350 = vsub.s32 1, %v1349
        %v1351 = vrot.slane %v1342, %v1350
        %1352 = vrot.lane.b32.xlu0 %v1347, 17
        %v1353 = vpop.permute.xlu0 %1352
        %1354 = vrot.lane.b32.xlu0 %v1351, 17
        %v1355 = vpop.permute.xlu0 %1354
        %v1356 = vsel %vm717, %v1353, %v1355
        %v1360 = vmul.f32 %v1339, %v1353
        %v1361 = vmul.f32 %v1340, %v1356
        %v1362 = vmul.f32 %v1341, %v1355
        %1366 = vrot.lane.b32.xlu0 %v1360, 111
        %v1367 = vpop.permute.xlu0 %1366
        %1368 = vrot.lane.b32.xlu0 %v1361, 111
        %v1369 = vpop.permute.xlu0 %1368
        %1370 = vrot.lane.b32.xlu0 %v1362, 111
        %v1371 = vpop.permute.xlu0 %1370
        %v1372 = vsel %vm911, %v1367, %v1369
        %v1373 = vsel %vm911, %v1369, %v1371
        %1376 = vst [vmem:[#allocation5 + $0x40] sm:$0xff] %v1372
        %1377 = vst [vmem:[#allocation5 + $0x48] sm:$0xff] %v1373
        %v1378 = vld [vmem:[#allocation2] sm:$0xff]
        %v1379 = vld [vmem:[#allocation2 + $0x8] sm:$0xff]
        %v1380 = vld [vmem:[#allocation2 + $0x10] sm:$0xff]
        %v1381 = vld [vmem:[%s921] ss:$8 sm:$0x3]
        %v1383 = vlaneseq
        %v1384 = vshrl.u32 %v1383, 7
        %v1385 = vsub.s32 0, %v1384
        %v1386 = vrot.slane %v1381, %v1385
        %v1387 = vlaneseq
        %v1388 = vshrl.u32 %v1387, 7
        %v1389 = vsub.s32 1, %v1388
        %v1390 = vrot.slane %v1381, %v1389
        %1391 = vrot.lane.b32.xlu0 %v1386, 18
        %v1392 = vpop.permute.xlu0 %1391
        %1393 = vrot.lane.b32.xlu0 %v1390, 18
        %v1394 = vpop.permute.xlu0 %1393
        %v1395 = vsel %vm936, %v1392, %v1394
        %v1399 = vmul.f32 %v1378, %v1392
        %v1400 = vmul.f32 %v1379, %v1395
        %v1401 = vmul.f32 %v1380, %v1394
        %1405 = vrot.lane.b32.xlu0 %v1399, 110
        %v1406 = vpop.permute.xlu0 %1405
        %1407 = vrot.lane.b32.xlu0 %v1400, 110
        %v1408 = vpop.permute.xlu0 %1407
        %1409 = vrot.lane.b32.xlu0 %v1401, 110
        %v1410 = vpop.permute.xlu0 %1409
        %v1411 = vsel %vm956, %v1406, %v1408
        %v1412 = vsel %vm956, %v1408, %v1410
        %1415 = vst [vmem:[#allocation5 + $0x50] sm:$0xff] %v1411
        %1416 = vst [vmem:[#allocation5 + $0x58] sm:$0xff] %v1412
        %v1417 = vld [vmem:[#allocation2] sm:$0xff]
        %v1418 = vld [vmem:[#allocation2 + $0x8] sm:$0xff]
        %v1419 = vld [vmem:[#allocation2 + $0x10] sm:$0xff]
        %v1420 = vld [vmem:[%s966] ss:$8 sm:$0x3]
        %v1422 = vlaneseq
        %v1423 = vshrl.u32 %v1422, 7
        %v1424 = vsub.s32 0, %v1423
        %v1425 = vrot.slane %v1420, %v1424
        %v1426 = vlaneseq
        %v1427 = vshrl.u32 %v1426, 7
        %v1428 = vsub.s32 1, %v1427
        %v1429 = vrot.slane %v1420, %v1428
        %1430 = vrot.lane.b32.xlu0 %v1425, 32
        %v1431 = vpop.permute.xlu0 %1430
        %1432 = vrot.lane.b32.xlu0 %v1429, 32
        %v1433 = vpop.permute.xlu0 %1432
        %v1434 = vsel %vm981, %v1431, %v1433
        %v1438 = vmul.f32 %v1417, %v1431
        %v1439 = vmul.f32 %v1418, %v1434
        %v1440 = vmul.f32 %v1419, %v1433
        %1444 = vrot.lane.b32.xlu0 %v1438, 96
        %v1445 = vpop.permute.xlu0 %1444
        %1446 = vrot.lane.b32.xlu0 %v1439, 96
        %v1447 = vpop.permute.xlu0 %1446
        %1448 = vrot.lane.b32.xlu0 %v1440, 96
        %v1449 = vpop.permute.xlu0 %1448
        %v1450 = vsel %vm998, %v1445, %v1447
        %v1451 = vsel %vm998, %v1447, %v1449
        %1454 = vst [vmem:[#allocation5 + $0x60] sm:$0xff] %v1450
        %1455 = vst [vmem:[#allocation5 + $0x68] sm:$0xff] %v1451
        %v1456 = vld [vmem:[#allocation2] sm:$0xff]
        %v1457 = vld [vmem:[#allocation2 + $0x8] sm:$0xff]
        %v1458 = vld [vmem:[#allocation2 + $0x10] sm:$0xff]
        %v1459 = vld [vmem:[%s1008] ss:$8 sm:$0x3]
        %v1461 = vlaneseq
        %v1462 = vshrl.u32 %v1461, 7
        %v1463 = vsub.s32 0, %v1462
        %v1464 = vrot.slane %v1459, %v1463
        %v1465 = vlaneseq
        %v1466 = vshrl.u32 %v1465, 7
        %v1467 = vsub.s32 1, %v1466
        %v1468 = vrot.slane %v1459, %v1467
        %1469 = vrot.lane.b32.xlu0 %v1464, 33
        %v1470 = vpop.permute.xlu0 %1469
        %1471 = vrot.lane.b32.xlu0 %v1468, 33
        %v1472 = vpop.permute.xlu0 %1471
        %v1473 = vsel %vm1023, %v1470, %v1472
        %v1477 = vmul.f32 %v1456, %v1470
        %v1478 = vmul.f32 %v1457, %v1473
        %v1479 = vmul.f32 %v1458, %v1472
        %1483 = vrot.lane.b32.xlu0 %v1477, 95
        %v1484 = vpop.permute.xlu0 %1483
        %1485 = vrot.lane.b32.xlu0 %v1478, 95
        %v1486 = vpop.permute.xlu0 %1485
        %1487 = vrot.lane.b32.xlu0 %v1479, 95
        %v1488 = vpop.permute.xlu0 %1487
        %v1489 = vsel %vm1043, %v1484, %v1486
        %v1490 = vsel %vm1043, %v1486, %v1488
        %1493 = vst [vmem:[#allocation5 + $0x70] sm:$0xff] %v1489
        %1494 = vst [vmem:[#allocation5 + $0x78] sm:$0xff] %v1490
        %v1495 = vld [vmem:[#allocation2] sm:$0xff]
        %v1496 = vld [vmem:[#allocation2 + $0x8] sm:$0xff]
        %v1497 = vld [vmem:[#allocation2 + $0x10] sm:$0xff]
        %v1498 = vld [vmem:[%s1053] ss:$8 sm:$0x3]
        %v1500 = vlaneseq
        %v1501 = vshrl.u32 %v1500, 7
        %v1502 = vsub.s32 0, %v1501
        %v1503 = vrot.slane %v1498, %v1502
        %v1504 = vlaneseq
        %v1505 = vshrl.u32 %v1504, 7
        %v1506 = vsub.s32 1, %v1505
        %v1507 = vrot.slane %v1498, %v1506
        %1508 = vrot.lane.b32.xlu0 %v1503, 34
        %v1509 = vpop.permute.xlu0 %1508
        %1510 = vrot.lane.b32.xlu0 %v1507, 34
        %v1511 = vpop.permute.xlu0 %1510
        %v1512 = vsel %vm700, %v1509, %v1511
        %v1516 = vmul.f32 %v1495, %v1509
        %v1517 = vmul.f32 %v1496, %v1512
        %v1518 = vmul.f32 %v1497, %v1511
        %1522 = vrot.lane.b32.xlu0 %v1516, 94
        %v1523 = vpop.permute.xlu0 %1522
        %1524 = vrot.lane.b32.xlu0 %v1517, 94
        %v1525 = vpop.permute.xlu0 %1524
        %1526 = vrot.lane.b32.xlu0 %v1518, 94
        %v1527 = vpop.permute.xlu0 %1526
        %v1528 = vsel %vm1084, %v1523, %v1525
        %v1529 = vsel %vm1084, %v1525, %v1527
        %1532 = vst [vmem:[#allocation5 + $0x80] sm:$0xff] %v1528
        %1533 = vst [vmem:[#allocation5 + $0x88] sm:$0xff] %v1529
        %v1534 = vld [vmem:[%s9] sm:$0xff]
        %v1535 = vld [vmem:[%s9 + $0x8] sm:$0xff]
        %v1536 = vld [vmem:[#allocation5] sm:$0xff]
        %v1537 = vld [vmem:[#allocation5 + $0x8] sm:$0xff]
        %v1538 = vld [vmem:[#allocation5 + $0x10] sm:$0xff]
        %v1539 = vld [vmem:[#allocation5 + $0x18] sm:$0xff]
        %v1540 = vld [vmem:[#allocation5 + $0x20] sm:$0xff]
        %v1541 = vld [vmem:[#allocation5 + $0x28] sm:$0xff]
        %v1542 = vld [vmem:[#allocation5 + $0x30] sm:$0xff]
        %v1543 = vld [vmem:[#allocation5 + $0x38] sm:$0xff]
        %v1544 = vld [vmem:[#allocation5 + $0x40] sm:$0xff]
        %v1545 = vld [vmem:[#allocation5 + $0x48] sm:$0xff]
        %v1546 = vld [vmem:[#allocation5 + $0x50] sm:$0xff]
        %v1547 = vld [vmem:[#allocation5 + $0x58] sm:$0xff]
        %v1548 = vld [vmem:[#allocation5 + $0x60] sm:$0xff]
        %v1549 = vld [vmem:[#allocation5 + $0x68] sm:$0xff]
        %v1550 = vld [vmem:[#allocation5 + $0x70] sm:$0xff]
        %v1551 = vld [vmem:[#allocation5 + $0x78] sm:$0xff]
        %v1552 = vld [vmem:[#allocation5 + $0x80] sm:$0xff]
        %v1553 = vld [vmem:[#allocation5 + $0x88] sm:$0xff]
        %vm1554 = vcmask 588800
        %v1556 = vsel %vm1554, %v1534, 0
        %v1559 = vsel %vm1554, %v1535, 0
        %1561 = vmatprep.subr.mxu0 %v1537
        %1562 = vmatpush1.msra.mxu0 %v1536
        %1563 = vmatprep.subr.mxu0 %v1539
        %1564 = vmatpush1.msra.mxu0 %v1538
        %1565 = vmatprep.subr.mxu0 %v1541
        %1566 = vmatpush1.msra.mxu0 %v1540
        %1567 = vmatprep.subr.mxu0 %v1543
        %1568 = vmatpush1.msra.mxu0 %v1542
        %1569 = vmatprep.subr.mxu0 %v1545
        %1570 = vmatpush1.msra.mxu0 %v1544
        %1571 = vmatprep.subr.mxu0 %v1547
        %1572 = vmatpush1.msra.mxu0 %v1546
        %1573 = vmatprep.subr.mxu0 %v1549
        %1574 = vmatpush1.msra.mxu0 %v1548
        %1575 = vmatprep.subr.mxu0 %v1551
        %1576 = vmatpush1.msra.mxu0 %v1550
        %1577 = vmatprep.subr.mxu0 %v1553
        %1578 = vmatpush1.msra.mxu0 %v1552
        %1579 = vmatprep.subr.mxu0 0.0
        %1580 = vmatpush1.msra.mxu0 0.0
        %1581 = vmatprep.subr.mxu0 0.0
        %1582 = vmatpush1.msra.mxu0 0.0
        %1583 = vmatprep.subr.mxu0 0.0
        %1584 = vmatpush1.msra.mxu0 0.0
        %1585 = vmatprep.subr.mxu0 0.0
        %1586 = vmatpush1.msra.mxu0 0.0
        %1587 = vmatprep.subr.mxu0 0.0
        %1588 = vmatpush1.msra.mxu0 0.0
        %1589 = vmatprep.subr.mxu0 0.0
        %1590 = vmatpush1.msra.mxu0 0.0
        %1591 = vmatprep.subr.mxu0 0.0
        %1592 = vmatpush1.msra.mxu0 0.0
        %1593 = vmatprep.subr.mxu0 0.0
        %1594 = vmatpush1.msra.mxu0 0.0
        %1595 = vmatprep.subr.mxu0 0.0
        %1596 = vmatpush1.msra.mxu0 0.0
        %1597 = vmatprep.subr.mxu0 0.0
        %1598 = vmatpush1.msra.mxu0 0.0
        %1599 = vmatprep.subr.mxu0 0.0
        %1600 = vmatpush1.msra.mxu0 0.0
        %1601 = vmatprep.subr.mxu0 0.0
        %1602 = vmatpush1.msra.mxu0 0.0
        %1603 = vmatprep.subr.mxu0 0.0
        %1604 = vmatpush1.msra.mxu0 0.0
        %1605 = vmatprep.subr.mxu0 0.0
        %1606 = vmatpush1.msra.mxu0 0.0
        %1607 = vmatprep.subr.mxu0 0.0
        %1608 = vmatpush1.msra.mxu0 0.0
        %1609 = vmatprep.subr.mxu0 0.0
        %1610 = vmatpush1.msra.mxu0 0.0
        %1611 = vmatprep.subr.mxu0 0.0
        %1612 = vmatpush1.msra.mxu0 0.0
        %1613 = vmatprep.subr.mxu0 0.0
        %1614 = vmatpush1.msra.mxu0 0.0
        %1615 = vmatprep.subr.mxu0 0.0
        %1616 = vmatpush1.msra.mxu0 0.0
        %1617 = vmatprep.subr.mxu0 0.0
        %1618 = vmatpush1.msra.mxu0 0.0
        %1619 = vmatprep.subr.mxu0 0.0
        %1620 = vmatpush1.msra.mxu0 0.0
        %1621 = vmatprep.subr.mxu0 0.0
        %1622 = vmatpush1.msra.mxu0 0.0
        %1623 = vmatprep.subr.mxu0 0.0
        %1624 = vmatpush1.msra.mxu0 0.0
        %1625 = vmatprep.mubr.f32.mxu0 0.0
        %1626 = vmatmul.mubr.f32.gmra.mrb[0].mxu0 %v1556
        %v1627 = vpop.f32.mrb[0].mxu0
        %v1628 = vadd.f32 0.0, %v1627
        %v1629 = vpop.f32.mrb[0].mxu0
        %v1630 = vadd.f32 0.0, %v1629
        %1631 = vmatprep.mubr.f32.mxu0 0.0
        %1632 = vmatmul.mubr.f32.gmra.mrb[0].mxu0 %v1559
        %v1633 = vpop.f32.mrb[0].mxu0
        %v1634 = vadd.f32 0.0, %v1633
        %v1635 = vpop.f32.mrb[0].mxu0
        %v1636 = vadd.f32 0.0, %v1635
        %1637 = vdwg.mxu0
        %v1638 = vld [vmem:[%s3] sm:$0xff]
        %v1639 = vld [vmem:[%s3 + $0x8] sm:$0xff]
        %v1640 = vld [vmem:[%s3 + $0x10] sm:$0xff]
        %v1641 = vld [vmem:[%s3 + $0x18] sm:$0xff]
        %v1642 = vld [vmem:[%s3 + $0x20] sm:$0xff]
        %v1643 = vld [vmem:[%s3 + $0x28] sm:$0xff]
        %v1644 = vld [vmem:[%s3 + $0x30] sm:$0xff]
        %v1645 = vld [vmem:[%s3 + $0x38] sm:$0xff]
        %v1646 = vld [vmem:[%s3 + $0x40] sm:$0xff]
        %v1647 = vld [vmem:[%s3 + $0x48] sm:$0xff]
        %v1648 = vld [vmem:[%s3 + $0x50] sm:$0xff]
        %v1649 = vld [vmem:[%s3 + $0x58] sm:$0xff]
        %v1650 = vld [vmem:[%s3 + $0x60] sm:$0xff]
        %v1651 = vld [vmem:[%s3 + $0x68] sm:$0xff]
        %v1652 = vld [vmem:[%s3 + $0x70] sm:$0xff]
        %v1653 = vld [vmem:[%s3 + $0x78] sm:$0xff]
        %v1654 = vld [vmem:[%s3 + $0x80] sm:$0xff]
        %v1655 = vld [vmem:[%s3 + $0x88] sm:$0xff]
        %v1656 = vld [vmem:[%s3 + $0x90] sm:$0xff]
        %v1657 = vld [vmem:[%s3 + $0x98] sm:$0xff]
        %v1658 = vld [vmem:[%s3 + $0xa0] sm:$0xff]
        %v1659 = vld [vmem:[%s3 + $0xa8] sm:$0xff]
        %v1660 = vld [vmem:[%s3 + $0xb0] sm:$0xff]
        %v1661 = vld [vmem:[%s3 + $0xb8] sm:$0xff]
        %v1662 = vld [vmem:[%s3 + $0xc0] sm:$0xff]
        %v1663 = vld [vmem:[%s3 + $0xc8] sm:$0xff]
        %v1664 = vld [vmem:[%s3 + $0xd0] sm:$0xff]
        %v1665 = vld [vmem:[%s3 + $0xd8] sm:$0xff]
        %v1666 = vld [vmem:[%s3 + $0xe0] sm:$0xff]
        %v1667 = vld [vmem:[%s3 + $0xe8] sm:$0xff]
        %v1668 = vld [vmem:[%s3 + $0xf0] sm:$0xff]
        %v1669 = vld [vmem:[%s3 + $0xf8] sm:$0xff]
        %v1670 = vld [vmem:[%s10] sm:$0xff]
        %v1671 = vld [vmem:[%s10 + $0x8] sm:$0xff]
        %1673 = vset.pattern.permute.xlu0 0
        %1674 = vperm.xlu0 %1673, %v1670
        %v1675 = vpop.permute.xlu0 %1674
        %1678 = vset.pattern.permute.xlu0 0
        %1679 = vperm.xlu0 %1678, %v1671
        %v1680 = vpop.permute.xlu0 %1679
        %1682 = vmatprep.subr.mxu0 0.0
        %1683 = vmatpush1.msra.mxu0 %v1638
        %1684 = vmatprep.subr.mxu0 0.0
        %1685 = vmatpush1.msra.mxu0 %v1639
        %1686 = vmatprep.subr.mxu0 0.0
        %1687 = vmatpush1.msra.mxu0 %v1640
        %1688 = vmatprep.subr.mxu0 0.0
        %1689 = vmatpush1.msra.mxu0 %v1641
        %1690 = vmatprep.subr.mxu0 0.0
        %1691 = vmatpush1.msra.mxu0 %v1642
        %1692 = vmatprep.subr.mxu0 0.0
        %1693 = vmatpush1.msra.mxu0 %v1643
        %1694 = vmatprep.subr.mxu0 0.0
        %1695 = vmatpush1.msra.mxu0 %v1644
        %1696 = vmatprep.subr.mxu0 0.0
        %1697 = vmatpush1.msra.mxu0 %v1645
        %1698 = vmatprep.subr.mxu0 0.0
        %1699 = vmatpush1.msra.mxu0 %v1646
        %1700 = vmatprep.subr.mxu0 0.0
        %1701 = vmatpush1.msra.mxu0 %v1647
        %1702 = vmatprep.subr.mxu0 0.0
        %1703 = vmatpush1.msra.mxu0 %v1648
        %1704 = vmatprep.subr.mxu0 0.0
        %1705 = vmatpush1.msra.mxu0 %v1649
        %1706 = vmatprep.subr.mxu0 0.0
        %1707 = vmatpush1.msra.mxu0 %v1650
        %1708 = vmatprep.subr.mxu0 0.0
        %1709 = vmatpush1.msra.mxu0 %v1651
        %1710 = vmatprep.subr.mxu0 0.0
        %1711 = vmatpush1.msra.mxu0 %v1652
        %1712 = vmatprep.subr.mxu0 0.0
        %1713 = vmatpush1.msra.mxu0 %v1653
        %1714 = vmatprep.subr.mxu0 0.0
        %1715 = vmatpush1.msra.mxu0 %v1654
        %1716 = vmatprep.subr.mxu0 0.0
        %1717 = vmatpush1.msra.mxu0 %v1655
        %1718 = vmatprep.subr.mxu0 0.0
        %1719 = vmatpush1.msra.mxu0 %v1656
        %1720 = vmatprep.subr.mxu0 0.0
        %1721 = vmatpush1.msra.mxu0 %v1657
        %1722 = vmatprep.subr.mxu0 0.0
        %1723 = vmatpush1.msra.mxu0 %v1658
        %1724 = vmatprep.subr.mxu0 0.0
        %1725 = vmatpush1.msra.mxu0 %v1659
        %1726 = vmatprep.subr.mxu0 0.0
        %1727 = vmatpush1.msra.mxu0 %v1660
        %1728 = vmatprep.subr.mxu0 0.0
        %1729 = vmatpush1.msra.mxu0 %v1661
        %1730 = vmatprep.subr.mxu0 0.0
        %1731 = vmatpush1.msra.mxu0 %v1662
        %1732 = vmatprep.subr.mxu0 0.0
        %1733 = vmatpush1.msra.mxu0 %v1663
        %1734 = vmatprep.subr.mxu0 0.0
        %1735 = vmatpush1.msra.mxu0 %v1664
        %1736 = vmatprep.subr.mxu0 0.0
        %1737 = vmatpush1.msra.mxu0 %v1665
        %1738 = vmatprep.subr.mxu0 0.0
        %1739 = vmatpush1.msra.mxu0 %v1666
        %1740 = vmatprep.subr.mxu0 0.0
        %1741 = vmatpush1.msra.mxu0 %v1667
        %1742 = vmatprep.subr.mxu0 0.0
        %1743 = vmatpush1.msra.mxu0 %v1668
        %1744 = vmatprep.subr.mxu0 0.0
        %1745 = vmatpush1.msra.mxu0 %v1669
        %1746 = vmatprep.mubr.f32.mxu0 %v1630
        %1747 = vmatmul.mubr.f32.gmra.mrb[0].mxu0 %v1628
        %v1748 = vpop.f32.mrb[0].mxu0
        %v1749 = vadd.f32 %v1675, %v1748
        %v1750 = vpop.f32.mrb[0].mxu0
        %1751 = vmatprep.mubr.f32.mxu0 %v1636
        %1752 = vmatmul.mubr.f32.gmra.mrb[0].mxu0 %v1634
        %v1753 = vpop.f32.mrb[0].mxu0
        %v1754 = vadd.f32 %v1680, %v1753
        %v1755 = vpop.f32.mrb[0].mxu0
        %1756 = vdwg.mxu0
        %vm1757 = vcmask 523264
        %v1758 = vsel %vm1757, %v1749, 0.0
        %1759 = vadd.xlane.f32.xlu0 %v1758
        %v1760 = vpop.xlane.xlu0 %1759
        %v1761 = vmul.f32 %v1760, 0.015625
        %v1762 = vsub.f32 %v1749, %v1761
        %v1763 = vmul.f32 %v1762, %v1762
        %v1764 = vsel %vm1757, %v1763, 0.0
        %1765 = vadd.xlane.f32.xlu0 %v1764
        %v1766 = vpop.xlane.xlu0 %1765
        %v1767 = vmul.f32 %v1766, 0.015625
        %v1768 = vadd.f32 %v1767, 1e-05
        %v1769 = vrsqrt.pop %v1768
        %v1770 = vmul.f32 %v1762, %v1769
        %vm1771 = vcmp.ge.f32.partialorder %v1770, 0.0
        %v1772 = vstv %s705
        %v1773 = vmul.f32 %v1772, %v1770
        %v1774 = vsel %vm1771, %v1770, %v1773
        %v1775 = vadd.f32 %v1774, %v1754
        %1777 = vrot.lane.b32.xlu0 %v1775, 9
        %v1778 = vpop.permute.xlu0 %1777
        %vm1780 = vcmask 597064
        %1781 = vst.msk [vmem:[#allocation3] sm:$0xff] %vm1780, %v1778
        %v1782 = vld [vmem:[#allocation3] sm:$0xff]
        %v1783 = vld [vmem:[%s2] sm:$0x1]
        %v1784 = vlaneseq
        %v1785 = vshrl.u32 %v1784, 7
        %v1786 = vsub.s32 0, %v1785
        %v1787 = vrot.slane %v1783, %v1786
        %v1788 = vmul.f32 %v1782, %v1787
        %1789 = vst.msk [vmem:[#allocation6] sm:$0xff] %vm1757, %v1788
        %v1790 = vld [vmem:[#allocation3] sm:$0xff]
        %v1791 = vld [vmem:[%s2 + $0x1] sm:$0x1]
        %v1792 = vlaneseq
        %v1793 = vshrl.u32 %v1792, 7
        %v1794 = vsub.s32 0, %v1793
        %v1795 = vrot.slane %v1791, %v1794
        %1797 = vrot.lane.b32.xlu0 %v1795, 1
        %v1798 = vpop.permute.xlu0 %1797
        %v1800 = vmul.f32 %v1790, %v1798
        %1802 = vrot.lane.b32.xlu0 %v1800, 127
        %v1803 = vpop.permute.xlu0 %1802
        %1805 = vst.msk [vmem:[#allocation6 + $0x8] sm:$0xff] %vm1757, %v1803
        %v1806 = vld [vmem:[#allocation3] sm:$0xff]
        %v1807 = vld [vmem:[%s2 + $0x2] sm:$0x1]
        %v1808 = vlaneseq
        %v1809 = vshrl.u32 %v1808, 7
        %v1810 = vsub.s32 0, %v1809
        %v1811 = vrot.slane %v1807, %v1810
        %1813 = vrot.lane.b32.xlu0 %v1811, 2
        %v1814 = vpop.permute.xlu0 %1813
        %v1816 = vmul.f32 %v1806, %v1814
        %1818 = vrot.lane.b32.xlu0 %v1816, 126
        %v1819 = vpop.permute.xlu0 %1818
        %1821 = vst.msk [vmem:[#allocation6 + $0x10] sm:$0xff] %vm1757, %v1819
        %v1822 = vld [vmem:[#allocation3] sm:$0xff]
        %v1823 = vld [vmem:[%s2 + $0x3] sm:$0x1]
        %v1824 = vlaneseq
        %v1825 = vshrl.u32 %v1824, 7
        %v1826 = vsub.s32 0, %v1825
        %v1827 = vrot.slane %v1823, %v1826
        %1829 = vrot.lane.b32.xlu0 %v1827, 8
        %v1830 = vpop.permute.xlu0 %1829
        %v1832 = vmul.f32 %v1822, %v1830
        %1834 = vrot.lane.b32.xlu0 %v1832, 120
        %v1835 = vpop.permute.xlu0 %1834
        %1837 = vst.msk [vmem:[#allocation6 + $0x18] sm:$0xff] %vm1757, %v1835
        %v1838 = vld [vmem:[#allocation3] sm:$0xff]
        %v1839 = vld [vmem:[%s2 + $0x4] sm:$0x1]
        %v1840 = vlaneseq
        %v1841 = vshrl.u32 %v1840, 7
        %v1842 = vsub.s32 0, %v1841
        %v1843 = vrot.slane %v1839, %v1842
        %1845 = vrot.lane.b32.xlu0 %v1843, 9
        %v1846 = vpop.permute.xlu0 %1845
        %v1848 = vmul.f32 %v1838, %v1846
        %1850 = vrot.lane.b32.xlu0 %v1848, 119
        %v1851 = vpop.permute.xlu0 %1850
        %1853 = vst.msk [vmem:[#allocation6 + $0x20] sm:$0xff] %vm1757, %v1851
        %v1854 = vld [vmem:[#allocation3] sm:$0xff]
        %v1855 = vld [vmem:[%s2 + $0x5] sm:$0x1]
        %v1856 = vlaneseq
        %v1857 = vshrl.u32 %v1856, 7
        %v1858 = vsub.s32 0, %v1857
        %v1859 = vrot.slane %v1855, %v1858
        %1861 = vrot.lane.b32.xlu0 %v1859, 10
        %v1862 = vpop.permute.xlu0 %1861
        %v1864 = vmul.f32 %v1854, %v1862
        %1866 = vrot.lane.b32.xlu0 %v1864, 118
        %v1867 = vpop.permute.xlu0 %1866
        %1869 = vst.msk [vmem:[#allocation6 + $0x28] sm:$0xff] %vm1757, %v1867
        %v1870 = vld [vmem:[#allocation3] sm:$0xff]
        %v1871 = vld [vmem:[%s2 + $0x6] sm:$0x1]
        %v1872 = vlaneseq
        %v1873 = vshrl.u32 %v1872, 7
        %v1874 = vsub.s32 0, %v1873
        %v1875 = vrot.slane %v1871, %v1874
        %1877 = vrot.lane.b32.xlu0 %v1875, 16
        %v1878 = vpop.permute.xlu0 %1877
        %v1880 = vmul.f32 %v1870, %v1878
        %1882 = vrot.lane.b32.xlu0 %v1880, 112
        %v1883 = vpop.permute.xlu0 %1882
        %1885 = vst.msk [vmem:[#allocation6 + $0x30] sm:$0xff] %vm1757, %v1883
        %v1886 = vld [vmem:[#allocation3] sm:$0xff]
        %v1887 = vld [vmem:[%s2 + $0x7] sm:$0x1]
        %v1888 = vlaneseq
        %v1889 = vshrl.u32 %v1888, 7
        %v1890 = vsub.s32 0, %v1889
        %v1891 = vrot.slane %v1887, %v1890
        %1893 = vrot.lane.b32.xlu0 %v1891, 17
        %v1894 = vpop.permute.xlu0 %1893
        %v1896 = vmul.f32 %v1886, %v1894
        %1898 = vrot.lane.b32.xlu0 %v1896, 111
        %v1899 = vpop.permute.xlu0 %1898
        %1901 = vst.msk [vmem:[#allocation6 + $0x38] sm:$0xff] %vm1757, %v1899
        %v1902 = vld [vmem:[#allocation3] sm:$0xff]
        %v1903 = vld [vmem:[%s2 + $0x8] sm:$0x1]
        %v1904 = vlaneseq
        %v1905 = vshrl.u32 %v1904, 7
        %v1906 = vsub.s32 0, %v1905
        %v1907 = vrot.slane %v1903, %v1906
        %1909 = vrot.lane.b32.xlu0 %v1907, 18
        %v1910 = vpop.permute.xlu0 %1909
        %v1912 = vmul.f32 %v1902, %v1910
        %1914 = vrot.lane.b32.xlu0 %v1912, 110
        %v1915 = vpop.permute.xlu0 %1914
        %1917 = vst.msk [vmem:[#allocation6 + $0x40] sm:$0xff] %vm1757, %v1915
        %v1918 = vld [vmem:[%s11] sm:$0xff]
        %v1919 = vld [vmem:[%s11 + $0x8] sm:$0xff]
        %v1920 = vld [vmem:[%s11 + $0x10] sm:$0xff]
        %v1921 = vld [vmem:[%s11 + $0x18] sm:$0xff]
        %v1922 = vld [vmem:[#allocation6] sm:$0xff]
        %v1923 = vld [vmem:[#allocation6 + $0x8] sm:$0xff]
        %v1924 = vld [vmem:[#allocation6 + $0x10] sm:$0xff]
        %v1925 = vld [vmem:[#allocation6 + $0x18] sm:$0xff]
        %v1926 = vld [vmem:[#allocation6 + $0x20] sm:$0xff]
        %v1927 = vld [vmem:[#allocation6 + $0x28] sm:$0xff]
        %v1928 = vld [vmem:[#allocation6 + $0x30] sm:$0xff]
        %v1929 = vld [vmem:[#allocation6 + $0x38] sm:$0xff]
        %v1930 = vld [vmem:[#allocation6 + $0x40] sm:$0xff]
        %v1932 = vsel %vm1554, %v1918, 0
        %v1935 = vsel %vm1554, %v1919, 0
        %v1938 = vsel %vm1554, %v1920, 0
        %v1941 = vsel %vm1554, %v1921, 0
        %1943 = vmatprep.subr.mxu0 0.0
        %1944 = vmatpush1.msra.mxu0 %v1922
        %1945 = vmatprep.subr.mxu0 0.0
        %1946 = vmatpush1.msra.mxu0 %v1923
        %1947 = vmatprep.subr.mxu0 0.0
        %1948 = vmatpush1.msra.mxu0 %v1924
        %1949 = vmatprep.subr.mxu0 0.0
        %1950 = vmatpush1.msra.mxu0 %v1925
        %1951 = vmatprep.subr.mxu0 0.0
        %1952 = vmatpush1.msra.mxu0 %v1926
        %1953 = vmatprep.subr.mxu0 0.0
        %1954 = vmatpush1.msra.mxu0 %v1927
        %1955 = vmatprep.subr.mxu0 0.0
        %1956 = vmatpush1.msra.mxu0 %v1928
        %1957 = vmatprep.subr.mxu0 0.0
        %1958 = vmatpush1.msra.mxu0 %v1929
        %1959 = vmatprep.subr.mxu0 0.0
        %1960 = vmatpush1.msra.mxu0 %v1930
        %1961 = vmatprep.subr.mxu0 0.0
        %1962 = vmatpush1.msra.mxu0 0.0
        %1963 = vmatprep.subr.mxu0 0.0
        %1964 = vmatpush1.msra.mxu0 0.0
        %1965 = vmatprep.subr.mxu0 0.0
        %1966 = vmatpush1.msra.mxu0 0.0
        %1967 = vmatprep.subr.mxu0 0.0
        %1968 = vmatpush1.msra.mxu0 0.0
        %1969 = vmatprep.subr.mxu0 0.0
        %1970 = vmatpush1.msra.mxu0 0.0
        %1971 = vmatprep.subr.mxu0 0.0
        %1972 = vmatpush1.msra.mxu0 0.0
        %1973 = vmatprep.subr.mxu0 0.0
        %1974 = vmatpush1.msra.mxu0 0.0
        %1975 = vmatprep.subr.mxu0 0.0
        %1976 = vmatpush1.msra.mxu0 0.0
        %1977 = vmatprep.subr.mxu0 0.0
        %1978 = vmatpush1.msra.mxu0 0.0
        %1979 = vmatprep.subr.mxu0 0.0
        %1980 = vmatpush1.msra.mxu0 0.0
        %1981 = vmatprep.subr.mxu0 0.0
        %1982 = vmatpush1.msra.mxu0 0.0
        %1983 = vmatprep.subr.mxu0 0.0
        %1984 = vmatpush1.msra.mxu0 0.0
        %1985 = vmatprep.subr.mxu0 0.0
        %1986 = vmatpush1.msra.mxu0 0.0
        %1987 = vmatprep.subr.mxu0 0.0
        %1988 = vmatpush1.msra.mxu0 0.0
        %1989 = vmatprep.subr.mxu0 0.0
        %1990 = vmatpush1.msra.mxu0 0.0
        %1991 = vmatprep.subr.mxu0 0.0
        %1992 = vmatpush1.msra.mxu0 0.0
        %1993 = vmatprep.subr.mxu0 0.0
        %1994 = vmatpush1.msra.mxu0 0.0
        %1995 = vmatprep.subr.mxu0 0.0
        %1996 = vmatpush1.msra.mxu0 0.0
        %1997 = vmatprep.subr.mxu0 0.0
        %1998 = vmatpush1.msra.mxu0 0.0
        %1999 = vmatprep.subr.mxu0 0.0
        %2000 = vmatpush1.msra.mxu0 0.0
        %2001 = vmatprep.subr.mxu0 0.0
        %2002 = vmatpush1.msra.mxu0 0.0
        %2003 = vmatprep.subr.mxu0 0.0
        %2004 = vmatpush1.msra.mxu0 0.0
        %2005 = vmatprep.subr.mxu0 0.0
        %2006 = vmatpush1.msra.mxu0 0.0
        %2007 = vmatprep.mubr.f32.mxu0 0.0
        %2008 = vmatmul.mubr.f32.gmra.mrb[0].mxu0 %v1932
        %v2009 = vpop.f32.mrb[0].mxu0
        %v2010 = vadd.f32 0.0, %v2009
        %v2011 = vpop.f32.mrb[0].mxu0
        %2012 = vmatprep.mubr.f32.mxu0 0.0
        %2013 = vmatmul.mubr.f32.gmra.mrb[0].mxu0 %v1935
        %v2014 = vpop.f32.mrb[0].mxu0
        %v2015 = vadd.f32 0.0, %v2014
        %v2016 = vpop.f32.mrb[0].mxu0
        %2017 = vmatprep.mubr.f32.mxu0 0.0
        %2018 = vmatmul.mubr.f32.gmra.mrb[0].mxu0 %v1938
        %v2019 = vpop.f32.mrb[0].mxu0
        %v2020 = vadd.f32 0.0, %v2019
        %v2021 = vpop.f32.mrb[0].mxu0
        %2022 = vmatprep.mubr.f32.mxu0 0.0
        %2023 = vmatmul.mubr.f32.gmra.mrb[0].mxu0 %v1941
        %v2024 = vpop.f32.mrb[0].mxu0
        %v2025 = vadd.f32 0.0, %v2024
        %v2026 = vpop.f32.mrb[0].mxu0
        %2027 = vdwg.mxu0
        %v2028 = vld [vmem:[%s4] sm:$0xff]
        %v2029 = vld [vmem:[%s4 + $0x8] sm:$0xff]
        %v2030 = vld [vmem:[%s4 + $0x10] sm:$0xff]
        %v2031 = vld [vmem:[%s4 + $0x18] sm:$0xff]
        %v2032 = vld [vmem:[%s4 + $0x20] sm:$0xff]
        %v2033 = vld [vmem:[%s4 + $0x28] sm:$0xff]
        %v2034 = vld [vmem:[%s4 + $0x30] sm:$0xff]
        %v2035 = vld [vmem:[%s4 + $0x38] sm:$0xff]
        %v2036 = vld [vmem:[%s12] sm:$0xff]
        %v2037 = vld [vmem:[%s12 + $0x8] sm:$0xff]
        %v2038 = vld [vmem:[%s12 + $0x10] sm:$0xff]
        %v2039 = vld [vmem:[%s12 + $0x18] sm:$0xff]
        %2041 = vset.pattern.permute.xlu0 0
        %2042 = vperm.xlu0 %2041, %v2036
        %v2043 = vpop.permute.xlu0 %2042
        %2046 = vset.pattern.permute.xlu0 0
        %2047 = vperm.xlu0 %2046, %v2037
        %v2048 = vpop.permute.xlu0 %2047
        %2051 = vset.pattern.permute.xlu0 0
        %2052 = vperm.xlu0 %2051, %v2038
        %v2053 = vpop.permute.xlu0 %2052
        %2056 = vset.pattern.permute.xlu0 0
        %2057 = vperm.xlu0 %2056, %v2039
        %v2058 = vpop.permute.xlu0 %2057
        %v2061 = vsel %vm1757, %v2010, 0
        %v2064 = vsel %vm1757, %v2015, 0
        %v2067 = vsel %vm1757, %v2020, 0
        %v2070 = vsel %vm1757, %v2025, 0
        %2072 = vmatprep.subr.mxu0 0.0
        %2073 = vmatpush1.msra.mxu0 %v2028
        %2074 = vmatprep.subr.mxu0 0.0
        %2075 = vmatpush1.msra.mxu0 %v2029
        %2076 = vmatprep.subr.mxu0 0.0
        %2077 = vmatpush1.msra.mxu0 %v2030
        %2078 = vmatprep.subr.mxu0 0.0
        %2079 = vmatpush1.msra.mxu0 %v2031
        %2080 = vmatprep.subr.mxu0 0.0
        %2081 = vmatpush1.msra.mxu0 %v2032
        %2082 = vmatprep.subr.mxu0 0.0
        %2083 = vmatpush1.msra.mxu0 %v2033
        %2084 = vmatprep.subr.mxu0 0.0
        %2085 = vmatpush1.msra.mxu0 %v2034
        %2086 = vmatprep.subr.mxu0 0.0
        %2087 = vmatpush1.msra.mxu0 %v2035
        %2088 = vmatprep.subr.mxu0 0.0
        %2089 = vmatpush1.msra.mxu0 0.0
        %2090 = vmatprep.subr.mxu0 0.0
        %2091 = vmatpush1.msra.mxu0 0.0
        %2092 = vmatprep.subr.mxu0 0.0
        %2093 = vmatpush1.msra.mxu0 0.0
        %2094 = vmatprep.subr.mxu0 0.0
        %2095 = vmatpush1.msra.mxu0 0.0
        %2096 = vmatprep.subr.mxu0 0.0
        %2097 = vmatpush1.msra.mxu0 0.0
        %2098 = vmatprep.subr.mxu0 0.0
        %2099 = vmatpush1.msra.mxu0 0.0
        %2100 = vmatprep.subr.mxu0 0.0
        %2101 = vmatpush1.msra.mxu0 0.0
        %2102 = vmatprep.subr.mxu0 0.0
        %2103 = vmatpush1.msra.mxu0 0.0
        %2104 = vmatprep.subr.mxu0 0.0
        %2105 = vmatpush1.msra.mxu0 0.0
        %2106 = vmatprep.subr.mxu0 0.0
        %2107 = vmatpush1.msra.mxu0 0.0
        %2108 = vmatprep.subr.mxu0 0.0
        %2109 = vmatpush1.msra.mxu0 0.0
        %2110 = vmatprep.subr.mxu0 0.0
        %2111 = vmatpush1.msra.mxu0 0.0
        %2112 = vmatprep.subr.mxu0 0.0
        %2113 = vmatpush1.msra.mxu0 0.0
        %2114 = vmatprep.subr.mxu0 0.0
        %2115 = vmatpush1.msra.mxu0 0.0
        %2116 = vmatprep.subr.mxu0 0.0
        %2117 = vmatpush1.msra.mxu0 0.0
        %2118 = vmatprep.subr.mxu0 0.0
        %2119 = vmatpush1.msra.mxu0 0.0
        %2120 = vmatprep.subr.mxu0 0.0
        %2121 = vmatpush1.msra.mxu0 0.0
        %2122 = vmatprep.subr.mxu0 0.0
        %2123 = vmatpush1.msra.mxu0 0.0
        %2124 = vmatprep.subr.mxu0 0.0
        %2125 = vmatpush1.msra.mxu0 0.0
        %2126 = vmatprep.subr.mxu0 0.0
        %2127 = vmatpush1.msra.mxu0 0.0
        %2128 = vmatprep.subr.mxu0 0.0
        %2129 = vmatpush1.msra.mxu0 0.0
        %2130 = vmatprep.subr.mxu0 0.0
        %2131 = vmatpush1.msra.mxu0 0.0
        %2132 = vmatprep.subr.mxu0 0.0
        %2133 = vmatpush1.msra.mxu0 0.0
        %2134 = vmatprep.subr.mxu0 0.0
        %2135 = vmatpush1.msra.mxu0 0.0
        %2136 = vmatprep.mubr.f32.mxu0 0.0
        %2137 = vmatmul.mubr.f32.gmra.mrb[0].mxu0 %v2061
        %v2138 = vpop.f32.mrb[0].mxu0
        %v2139 = vadd.f32 %v2043, %v2138
        %v2140 = vpop.f32.mrb[0].mxu0
        %2141 = vmatprep.mubr.f32.mxu0 0.0
        %2142 = vmatmul.mubr.f32.gmra.mrb[0].mxu0 %v2064
        %v2143 = vpop.f32.mrb[0].mxu0
        %v2144 = vadd.f32 %v2048, %v2143
        %v2145 = vpop.f32.mrb[0].mxu0
        %2146 = vmatprep.mubr.f32.mxu0 0.0
        %2147 = vmatmul.mubr.f32.gmra.mrb[0].mxu0 %v2067
        %v2148 = vpop.f32.mrb[0].mxu0
        %v2149 = vadd.f32 %v2053, %v2148
        %v2150 = vpop.f32.mrb[0].mxu0
        %2151 = vmatprep.mubr.f32.mxu0 0.0
        %2152 = vmatmul.mubr.f32.gmra.mrb[0].mxu0 %v2070
        %v2153 = vpop.f32.mrb[0].mxu0
        %v2154 = vadd.f32 %v2058, %v2153
        %v2155 = vpop.f32.mrb[0].mxu0
        %2156 = vdwg.mxu0
        %v2157 = vsel %vm850, %v2139, 0.0
        %2158 = vadd.xlane.f32.xlu0 %v2157
        %v2159 = vpop.xlane.xlu0 %2158
        %v2160 = vsel %vm850, %v2144, 0.0
        %2161 = vadd.xlane.f32.xlu0 %v2160
        %v2162 = vpop.xlane.xlu0 %2161
        %v2163 = vmul.f32 %v2159, 0.0625
        %v2164 = vmul.f32 %v2162, 0.0625
        %v2165 = vsub.f32 %v2139, %v2163
        %v2166 = vsub.f32 %v2144, %v2164
        %v2167 = vmul.f32 %v2165, %v2165
        %v2168 = vmul.f32 %v2166, %v2166
        %v2169 = vsel %vm850, %v2167, 0.0
        %2170 = vadd.xlane.f32.xlu0 %v2169
        %v2171 = vpop.xlane.xlu0 %2170
        %v2172 = vsel %vm850, %v2168, 0.0
        %2173 = vadd.xlane.f32.xlu0 %v2172
        %v2174 = vpop.xlane.xlu0 %2173
        %v2175 = vmul.f32 %v2171, 0.0625
        %v2176 = vmul.f32 %v2174, 0.0625
        %v2177 = vadd.f32 %v2175, 1e-05
        %v2178 = vadd.f32 %v2176, 1e-05
        %v2179 = vrsqrt.pop %v2177
        %v2180 = vrsqrt.pop %v2178
        %v2181 = vmul.f32 %v2165, %v2179
        %v2182 = vmul.f32 %v2166, %v2180
        %vm2183 = vcmp.ge.f32.partialorder %v2181, 0.0
        %vm2184 = vcmp.ge.f32.partialorder %v2182, 0.0
        %v2185 = vstv %s706
        %v2186 = vmul.f32 %v2185, %v2181
        %v2187 = vmul.f32 %v2185, %v2182
        %v2188 = vsel %vm2183, %v2181, %v2186
        %v2189 = vsel %vm2184, %v2182, %v2187
        %v2190 = vadd.f32 %v2188, %v2149
        %v2191 = vadd.f32 %v2189, %v2154
        %v2192 = vld [vmem:[%s5] sm:$0xff]
        %v2193 = vld [vmem:[%s5 + $0x8] sm:$0xff]
        %v2195 = vsel %vm850, %v2190, 0
        %v2198 = vsel %vm850, %v2191, 0
        %2200 = vmatprep.subr.mxu0 0.0
        %2201 = vmatpush1.msra.mxu0 %v2192
        %2202 = vmatprep.subr.mxu0 0.0
        %2203 = vmatpush1.msra.mxu0 %v2193
        %2204 = vmatprep.subr.mxu0 0.0
        %2205 = vmatpush1.msra.mxu0 0.0
        %2206 = vmatprep.subr.mxu0 0.0
        %2207 = vmatpush1.msra.mxu0 0.0
        %2208 = vmatprep.subr.mxu0 0.0
        %2209 = vmatpush1.msra.mxu0 0.0
        %2210 = vmatprep.subr.mxu0 0.0
        %2211 = vmatpush1.msra.mxu0 0.0
        %2212 = vmatprep.subr.mxu0 0.0
        %2213 = vmatpush1.msra.mxu0 0.0
        %2214 = vmatprep.subr.mxu0 0.0
        %2215 = vmatpush1.msra.mxu0 0.0
        %2216 = vmatprep.subr.mxu0 0.0
        %2217 = vmatpush1.msra.mxu0 0.0
        %2218 = vmatprep.subr.mxu0 0.0
        %2219 = vmatpush1.msra.mxu0 0.0
        %2220 = vmatprep.subr.mxu0 0.0
        %2221 = vmatpush1.msra.mxu0 0.0
        %2222 = vmatprep.subr.mxu0 0.0
        %2223 = vmatpush1.msra.mxu0 0.0
        %2224 = vmatprep.subr.mxu0 0.0
        %2225 = vmatpush1.msra.mxu0 0.0
        %2226 = vmatprep.subr.mxu0 0.0
        %2227 = vmatpush1.msra.mxu0 0.0
        %2228 = vmatprep.subr.mxu0 0.0
        %2229 = vmatpush1.msra.mxu0 0.0
        %2230 = vmatprep.subr.mxu0 0.0
        %2231 = vmatpush1.msra.mxu0 0.0
        %2232 = vmatprep.subr.mxu0 0.0
        %2233 = vmatpush1.msra.mxu0 0.0
        %2234 = vmatprep.subr.mxu0 0.0
        %2235 = vmatpush1.msra.mxu0 0.0
        %2236 = vmatprep.subr.mxu0 0.0
        %2237 = vmatpush1.msra.mxu0 0.0
        %2238 = vmatprep.subr.mxu0 0.0
        %2239 = vmatpush1.msra.mxu0 0.0
        %2240 = vmatprep.subr.mxu0 0.0
        %2241 = vmatpush1.msra.mxu0 0.0
        %2242 = vmatprep.subr.mxu0 0.0
        %2243 = vmatpush1.msra.mxu0 0.0
        %2244 = vmatprep.subr.mxu0 0.0
        %2245 = vmatpush1.msra.mxu0 0.0
        %2246 = vmatprep.subr.mxu0 0.0
        %2247 = vmatpush1.msra.mxu0 0.0
        %2248 = vmatprep.subr.mxu0 0.0
        %2249 = vmatpush1.msra.mxu0 0.0
        %2250 = vmatprep.subr.mxu0 0.0
        %2251 = vmatpush1.msra.mxu0 0.0
        %2252 = vmatprep.subr.mxu0 0.0
        %2253 = vmatpush1.msra.mxu0 0.0
        %2254 = vmatprep.subr.mxu0 0.0
        %2255 = vmatpush1.msra.mxu0 0.0
        %2256 = vmatprep.subr.mxu0 0.0
        %2257 = vmatpush1.msra.mxu0 0.0
        %2258 = vmatprep.subr.mxu0 0.0
        %2259 = vmatpush1.msra.mxu0 0.0
        %2260 = vmatprep.subr.mxu0 0.0
        %2261 = vmatpush1.msra.mxu0 0.0
        %2262 = vmatprep.subr.mxu0 0.0
        %2263 = vmatpush1.msra.mxu0 0.0
        %2264 = vmatprep.mubr.f32.mxu0 0.0
        %2265 = vmatmul.mubr.f32.gmra.mrb[0].mxu0 %v2195
        %v2266 = vpop.f32.mrb[0].mxu0
        %v2267 = vadd.f32 0.0, %v2266
        %v2268 = vpop.f32.mrb[0].mxu0
        %2269 = vmatprep.mubr.f32.mxu0 0.0
        %2270 = vmatmul.mubr.f32.gmra.mrb[0].mxu0 %v2198
        %v2271 = vpop.f32.mrb[0].mxu0
        %v2272 = vadd.f32 0.0, %v2271
        %v2273 = vpop.f32.mrb[0].mxu0
        %2274 = vdwg.mxu0
        %2277 = vrot.lane.b32.xlu0 %v2267, 9
        %v2278 = vpop.permute.xlu0 %2277
        %2279 = vrot.lane.b32.xlu0 %v2272, 9
        %v2280 = vpop.permute.xlu0 %2279
        %2283 = vst.msk [vmem:[#allocation3] sm:$0xff] %vm1780, %v2278
        %2284 = vst.msk [vmem:[#allocation3 + $0x8] sm:$0xff] %vm1780, %v2280
        %v2285 = vld [vmem:[#allocation3] sm:$0xff]
        %v2286 = vld [vmem:[#allocation3 + $0x8] sm:$0xff]
        %v2287 = vld [vmem:[%s2] sm:$0x1]
        %v2288 = vlaneseq
        %v2289 = vshrl.u32 %v2288, 7
        %v2290 = vsub.s32 0, %v2289
        %v2291 = vrot.slane %v2287, %v2290
        %v2292 = vmul.f32 %v2285, %v2291
        %v2293 = vmul.f32 %v2286, %v2291
        %2294 = vst.msk [vmem:[#allocation7] sm:$0xff] %vm1757, %v2292
        %2295 = vst.msk [vmem:[#allocation7 + $0x8] sm:$0xff] %vm1757, %v2293
        %v2296 = vld [vmem:[#allocation3] sm:$0xff]
        %v2297 = vld [vmem:[#allocation3 + $0x8] sm:$0xff]
        %v2298 = vld [vmem:[%s2 + $0x1] sm:$0x1]
        %v2299 = vlaneseq
        %v2300 = vshrl.u32 %v2299, 7
        %v2301 = vsub.s32 0, %v2300
        %v2302 = vrot.slane %v2298, %v2301
        %2304 = vrot.lane.b32.xlu0 %v2302, 1
        %v2305 = vpop.permute.xlu0 %2304
        %v2307 = vmul.f32 %v2296, %v2305
        %v2308 = vmul.f32 %v2297, %v2305
        %2311 = vrot.lane.b32.xlu0 %v2307, 127
        %v2312 = vpop.permute.xlu0 %2311
        %2313 = vrot.lane.b32.xlu0 %v2308, 127
        %v2314 = vpop.permute.xlu0 %2313
        %2317 = vst.msk [vmem:[#allocation7 + $0x10] sm:$0xff] %vm1757, %v2312
        %2318 = vst.msk [vmem:[#allocation7 + $0x18] sm:$0xff] %vm1757, %v2314
        %v2319 = vld [vmem:[#allocation3] sm:$0xff]
        %v2320 = vld [vmem:[#allocation3 + $0x8] sm:$0xff]
        %v2321 = vld [vmem:[%s2 + $0x2] sm:$0x1]
        %v2322 = vlaneseq
        %v2323 = vshrl.u32 %v2322, 7
        %v2324 = vsub.s32 0, %v2323
        %v2325 = vrot.slane %v2321, %v2324
        %2327 = vrot.lane.b32.xlu0 %v2325, 2
        %v2328 = vpop.permute.xlu0 %2327
        %v2330 = vmul.f32 %v2319, %v2328
        %v2331 = vmul.f32 %v2320, %v2328
        %2334 = vrot.lane.b32.xlu0 %v2330, 126
        %v2335 = vpop.permute.xlu0 %2334
        %2336 = vrot.lane.b32.xlu0 %v2331, 126
        %v2337 = vpop.permute.xlu0 %2336
        %2340 = vst.msk [vmem:[#allocation7 + $0x20] sm:$0xff] %vm1757, %v2335
        %2341 = vst.msk [vmem:[#allocation7 + $0x28] sm:$0xff] %vm1757, %v2337
        %v2342 = vld [vmem:[#allocation3] sm:$0xff]
        %v2343 = vld [vmem:[#allocation3 + $0x8] sm:$0xff]
        %v2344 = vld [vmem:[%s2 + $0x3] sm:$0x1]
        %v2345 = vlaneseq
        %v2346 = vshrl.u32 %v2345, 7
        %v2347 = vsub.s32 0, %v2346
        %v2348 = vrot.slane %v2344, %v2347
        %2350 = vrot.lane.b32.xlu0 %v2348, 8
        %v2351 = vpop.permute.xlu0 %2350
        %v2353 = vmul.f32 %v2342, %v2351
        %v2354 = vmul.f32 %v2343, %v2351
        %2357 = vrot.lane.b32.xlu0 %v2353, 120
        %v2358 = vpop.permute.xlu0 %2357
        %2359 = vrot.lane.b32.xlu0 %v2354, 120
        %v2360 = vpop.permute.xlu0 %2359
        %2363 = vst.msk [vmem:[#allocation7 + $0x30] sm:$0xff] %vm1757, %v2358
        %2364 = vst.msk [vmem:[#allocation7 + $0x38] sm:$0xff] %vm1757, %v2360
        %v2365 = vld [vmem:[#allocation3] sm:$0xff]
        %v2366 = vld [vmem:[#allocation3 + $0x8] sm:$0xff]
        %v2367 = vld [vmem:[%s2 + $0x4] sm:$0x1]
        %v2368 = vlaneseq
        %v2369 = vshrl.u32 %v2368, 7
        %v2370 = vsub.s32 0, %v2369
        %v2371 = vrot.slane %v2367, %v2370
        %2373 = vrot.lane.b32.xlu0 %v2371, 9
        %v2374 = vpop.permute.xlu0 %2373
        %v2376 = vmul.f32 %v2365, %v2374
        %v2377 = vmul.f32 %v2366, %v2374
        %2380 = vrot.lane.b32.xlu0 %v2376, 119
        %v2381 = vpop.permute.xlu0 %2380
        %2382 = vrot.lane.b32.xlu0 %v2377, 119
        %v2383 = vpop.permute.xlu0 %2382
        %2386 = vst.msk [vmem:[#allocation7 + $0x40] sm:$0xff] %vm1757, %v2381
        %2387 = vst.msk [vmem:[#allocation7 + $0x48] sm:$0xff] %vm1757, %v2383
        %v2388 = vld [vmem:[#allocation3] sm:$0xff]
        %v2389 = vld [vmem:[#allocation3 + $0x8] sm:$0xff]
        %v2390 = vld [vmem:[%s2 + $0x5] sm:$0x1]
        %v2391 = vlaneseq
        %v2392 = vshrl.u32 %v2391, 7
        %v2393 = vsub.s32 0, %v2392
        %v2394 = vrot.slane %v2390, %v2393
        %2396 = vrot.lane.b32.xlu0 %v2394, 10
        %v2397 = vpop.permute.xlu0 %2396
        %v2399 = vmul.f32 %v2388, %v2397
        %v2400 = vmul.f32 %v2389, %v2397
        %2403 = vrot.lane.b32.xlu0 %v2399, 118
        %v2404 = vpop.permute.xlu0 %2403
        %2405 = vrot.lane.b32.xlu0 %v2400, 118
        %v2406 = vpop.permute.xlu0 %2405
        %2409 = vst.msk [vmem:[#allocation7 + $0x50] sm:$0xff] %vm1757, %v2404
        %2410 = vst.msk [vmem:[#allocation7 + $0x58] sm:$0xff] %vm1757, %v2406
        %v2411 = vld [vmem:[#allocation3] sm:$0xff]
        %v2412 = vld [vmem:[#allocation3 + $0x8] sm:$0xff]
        %v2413 = vld [vmem:[%s2 + $0x6] sm:$0x1]
        %v2414 = vlaneseq
        %v2415 = vshrl.u32 %v2414, 7
        %v2416 = vsub.s32 0, %v2415
        %v2417 = vrot.slane %v2413, %v2416
        %2419 = vrot.lane.b32.xlu0 %v2417, 16
        %v2420 = vpop.permute.xlu0 %2419
        %v2422 = vmul.f32 %v2411, %v2420
        %v2423 = vmul.f32 %v2412, %v2420
        %2426 = vrot.lane.b32.xlu0 %v2422, 112
        %v2427 = vpop.permute.xlu0 %2426
        %2428 = vrot.lane.b32.xlu0 %v2423, 112
        %v2429 = vpop.permute.xlu0 %2428
        %2432 = vst.msk [vmem:[#allocation7 + $0x60] sm:$0xff] %vm1757, %v2427
        %2433 = vst.msk [vmem:[#allocation7 + $0x68] sm:$0xff] %vm1757, %v2429
        %v2434 = vld [vmem:[#allocation3] sm:$0xff]
        %v2435 = vld [vmem:[#allocation3 + $0x8] sm:$0xff]
        %v2436 = vld [vmem:[%s2 + $0x7] sm:$0x1]
        %v2437 = vlaneseq
        %v2438 = vshrl.u32 %v2437, 7
        %v2439 = vsub.s32 0, %v2438
        %v2440 = vrot.slane %v2436, %v2439
        %2442 = vrot.lane.b32.xlu0 %v2440, 17
        %v2443 = vpop.permute.xlu0 %2442
        %v2445 = vmul.f32 %v2434, %v2443
        %v2446 = vmul.f32 %v2435, %v2443
        %2449 = vrot.lane.b32.xlu0 %v2445, 111
        %v2450 = vpop.permute.xlu0 %2449
        %2451 = vrot.lane.b32.xlu0 %v2446, 111
        %v2452 = vpop.permute.xlu0 %2451
        %2455 = vst.msk [vmem:[#allocation7 + $0x70] sm:$0xff] %vm1757, %v2450
        %2456 = vst.msk [vmem:[#allocation7 + $0x78] sm:$0xff] %vm1757, %v2452
        %v2457 = vld [vmem:[#allocation3] sm:$0xff]
        %v2458 = vld [vmem:[#allocation3 + $0x8] sm:$0xff]
        %v2459 = vld [vmem:[%s2 + $0x8] sm:$0x1]
        %v2460 = vlaneseq
        %v2461 = vshrl.u32 %v2460, 7
        %v2462 = vsub.s32 0, %v2461
        %v2463 = vrot.slane %v2459, %v2462
        %2465 = vrot.lane.b32.xlu0 %v2463, 18
        %v2466 = vpop.permute.xlu0 %2465
        %v2468 = vmul.f32 %v2457, %v2466
        %v2469 = vmul.f32 %v2458, %v2466
        %2472 = vrot.lane.b32.xlu0 %v2468, 110
        %v2473 = vpop.permute.xlu0 %2472
        %2474 = vrot.lane.b32.xlu0 %v2469, 110
        %v2475 = vpop.permute.xlu0 %2474
        %2478 = vst.msk [vmem:[#allocation7 + $0x80] sm:$0xff] %vm1757, %v2473
        %2479 = vst.msk [vmem:[#allocation7 + $0x88] sm:$0xff] %vm1757, %v2475
        %v2480 = vld [vmem:[%s13] sm:$0xff]
        %v2481 = vld [vmem:[%s13 + $0x8] sm:$0xff]
        %v2482 = vld [vmem:[#allocation7] sm:$0xff]
        %v2483 = vld [vmem:[#allocation7 + $0x8] sm:$0xff]
        %v2484 = vld [vmem:[#allocation7 + $0x10] sm:$0xff]
        %v2485 = vld [vmem:[#allocation7 + $0x18] sm:$0xff]
        %v2486 = vld [vmem:[#allocation7 + $0x20] sm:$0xff]
        %v2487 = vld [vmem:[#allocation7 + $0x28] sm:$0xff]
        %v2488 = vld [vmem:[#allocation7 + $0x30] sm:$0xff]
        %v2489 = vld [vmem:[#allocation7 + $0x38] sm:$0xff]
        %v2490 = vld [vmem:[#allocation7 + $0x40] sm:$0xff]
        %v2491 = vld [vmem:[#allocation7 + $0x48] sm:$0xff]
        %v2492 = vld [vmem:[#allocation7 + $0x50] sm:$0xff]
        %v2493 = vld [vmem:[#allocation7 + $0x58] sm:$0xff]
        %v2494 = vld [vmem:[#allocation7 + $0x60] sm:$0xff]
        %v2495 = vld [vmem:[#allocation7 + $0x68] sm:$0xff]
        %v2496 = vld [vmem:[#allocation7 + $0x70] sm:$0xff]
        %v2497 = vld [vmem:[#allocation7 + $0x78] sm:$0xff]
        %v2498 = vld [vmem:[#allocation7 + $0x80] sm:$0xff]
        %v2499 = vld [vmem:[#allocation7 + $0x88] sm:$0xff]
        %v2500 = vld [vmem:[%s14] sm:$0xff]
        %2502 = vset.pattern.permute.xlu0 0
        %2503 = vperm.xlu0 %2502, %v2500
        %v2504 = vpop.permute.xlu0 %2503
        %v2507 = vsel %vm850, %v2481, 0
        %2509 = vmatprep.subr.mxu0 0.0
        %2510 = vmatpush1.msra.mxu0 %v2482
        %2511 = vmatprep.subr.mxu0 0.0
        %2512 = vmatpush1.msra.mxu0 %v2483
        %2513 = vmatprep.subr.mxu0 0.0
        %2514 = vmatpush1.msra.mxu0 %v2484
        %2515 = vmatprep.subr.mxu0 0.0
        %2516 = vmatpush1.msra.mxu0 %v2485
        %2517 = vmatprep.subr.mxu0 0.0
        %2518 = vmatpush1.msra.mxu0 %v2486
        %2519 = vmatprep.subr.mxu0 0.0
        %2520 = vmatpush1.msra.mxu0 %v2487
        %2521 = vmatprep.subr.mxu0 0.0
        %2522 = vmatpush1.msra.mxu0 %v2488
        %2523 = vmatprep.subr.mxu0 0.0
        %2524 = vmatpush1.msra.mxu0 %v2489
        %2525 = vmatprep.subr.mxu0 0.0
        %2526 = vmatpush1.msra.mxu0 %v2490
        %2527 = vmatprep.subr.mxu0 0.0
        %2528 = vmatpush1.msra.mxu0 %v2491
        %2529 = vmatprep.subr.mxu0 0.0
        %2530 = vmatpush1.msra.mxu0 %v2492
        %2531 = vmatprep.subr.mxu0 0.0
        %2532 = vmatpush1.msra.mxu0 %v2493
        %2533 = vmatprep.subr.mxu0 0.0
        %2534 = vmatpush1.msra.mxu0 %v2494
        %2535 = vmatprep.subr.mxu0 0.0
        %2536 = vmatpush1.msra.mxu0 %v2495
        %2537 = vmatprep.subr.mxu0 0.0
        %2538 = vmatpush1.msra.mxu0 %v2496
        %2539 = vmatprep.subr.mxu0 0.0
        %2540 = vmatpush1.msra.mxu0 %v2497
        %2541 = vmatprep.subr.mxu0 0.0
        %2542 = vmatpush1.msra.mxu0 %v2498
        %2543 = vmatprep.subr.mxu0 0.0
        %2544 = vmatpush1.msra.mxu0 %v2499
        %2545 = vmatprep.subr.mxu0 0.0
        %2546 = vmatpush1.msra.mxu0 0.0
        %2547 = vmatprep.subr.mxu0 0.0
        %2548 = vmatpush1.msra.mxu0 0.0
        %2549 = vmatprep.subr.mxu0 0.0
        %2550 = vmatpush1.msra.mxu0 0.0
        %2551 = vmatprep.subr.mxu0 0.0
        %2552 = vmatpush1.msra.mxu0 0.0
        %2553 = vmatprep.subr.mxu0 0.0
        %2554 = vmatpush1.msra.mxu0 0.0
        %2555 = vmatprep.subr.mxu0 0.0
        %2556 = vmatpush1.msra.mxu0 0.0
        %2557 = vmatprep.subr.mxu0 0.0
        %2558 = vmatpush1.msra.mxu0 0.0
        %2559 = vmatprep.subr.mxu0 0.0
        %2560 = vmatpush1.msra.mxu0 0.0
        %2561 = vmatprep.subr.mxu0 0.0
        %2562 = vmatpush1.msra.mxu0 0.0
        %2563 = vmatprep.subr.mxu0 0.0
        %2564 = vmatpush1.msra.mxu0 0.0
        %2565 = vmatprep.subr.mxu0 0.0
        %2566 = vmatpush1.msra.mxu0 0.0
        %2567 = vmatprep.subr.mxu0 0.0
        %2568 = vmatpush1.msra.mxu0 0.0
        %2569 = vmatprep.subr.mxu0 0.0
        %2570 = vmatpush1.msra.mxu0 0.0
        %2571 = vmatprep.subr.mxu0 0.0
        %2572 = vmatpush1.msra.mxu0 0.0
        %2573 = vmatprep.mubr.f32.mxu0 %v2507
        %2574 = vmatmul.mubr.f32.gmra.mrb[0].mxu0 %v2480
        %v2575 = vpop.f32.mrb[0].mxu0
        %v2576 = vadd.f32 %v2504, %v2575
        %v2577 = vpop.f32.mrb[0].mxu0
        %2578 = vdwg.mxu0
        %v2579 = vsel %vm1757, %v2576, 0.0
        %2580 = vadd.xlane.f32.xlu0 %v2579
        %v2581 = vpop.xlane.xlu0 %2580
        %v2582 = vmul.f32 %v2581, 0.015625
        %v2583 = vsub.f32 %v2576, %v2582
        %v2584 = vmul.f32 %v2583, %v2583
        %v2585 = vsel %vm1757, %v2584, 0.0
        %2586 = vadd.xlane.f32.xlu0 %v2585
        %v2587 = vpop.xlane.xlu0 %2586
        %v2588 = vmul.f32 %v2587, 0.015625
        %v2589 = vadd.f32 %v2588, 1e-05
        %v2590 = vrsqrt.pop %v2589
        %v2591 = vmul.f32 %v2583, %v2590
        %vm2592 = vcmp.ge.f32.partialorder %v2591, 0.0
        %v2593 = vstv %s707
        %v2594 = vmul.f32 %v2593, %v2591
        %v2595 = vsel %vm2592, %v2591, %v2594
        %2597 = vrot.lane.b32.xlu0 %v2595, 9
        %v2598 = vpop.permute.xlu0 %2597
        %2600 = vst.msk [vmem:[#allocation3] sm:$0xff] %vm1780, %v2598
        %v2601 = vld [vmem:[#allocation3] sm:$0xff]
        %v2602 = vld [vmem:[%s2] sm:$0x1]
        %v2603 = vlaneseq
        %v2604 = vshrl.u32 %v2603, 7
        %v2605 = vsub.s32 0, %v2604
        %v2606 = vrot.slane %v2602, %v2605
        %v2607 = vmul.f32 %v2601, %v2606
        %2608 = vst.msk [vmem:[#allocation6] sm:$0xff] %vm1757, %v2607
        %v2609 = vld [vmem:[#allocation3] sm:$0xff]
        %v2610 = vld [vmem:[%s2 + $0x1] sm:$0x1]
        %v2611 = vlaneseq
        %v2612 = vshrl.u32 %v2611, 7
        %v2613 = vsub.s32 0, %v2612
        %v2614 = vrot.slane %v2610, %v2613
        %2616 = vrot.lane.b32.xlu0 %v2614, 1
        %v2617 = vpop.permute.xlu0 %2616
        %v2619 = vmul.f32 %v2609, %v2617
        %2621 = vrot.lane.b32.xlu0 %v2619, 127
        %v2622 = vpop.permute.xlu0 %2621
        %2624 = vst.msk [vmem:[#allocation6 + $0x8] sm:$0xff] %vm1757, %v2622
        %v2625 = vld [vmem:[#allocation3] sm:$0xff]
        %v2626 = vld [vmem:[%s2 + $0x2] sm:$0x1]
        %v2627 = vlaneseq
        %v2628 = vshrl.u32 %v2627, 7
        %v2629 = vsub.s32 0, %v2628
        %v2630 = vrot.slane %v2626, %v2629
        %2632 = vrot.lane.b32.xlu0 %v2630, 2
        %v2633 = vpop.permute.xlu0 %2632
        %v2635 = vmul.f32 %v2625, %v2633
        %2637 = vrot.lane.b32.xlu0 %v2635, 126
        %v2638 = vpop.permute.xlu0 %2637
        %2640 = vst.msk [vmem:[#allocation6 + $0x10] sm:$0xff] %vm1757, %v2638
        %v2641 = vld [vmem:[#allocation3] sm:$0xff]
        %v2642 = vld [vmem:[%s2 + $0x3] sm:$0x1]
        %v2643 = vlaneseq
        %v2644 = vshrl.u32 %v2643, 7
        %v2645 = vsub.s32 0, %v2644
        %v2646 = vrot.slane %v2642, %v2645
        %2648 = vrot.lane.b32.xlu0 %v2646, 8
        %v2649 = vpop.permute.xlu0 %2648
        %v2651 = vmul.f32 %v2641, %v2649
        %2653 = vrot.lane.b32.xlu0 %v2651, 120
        %v2654 = vpop.permute.xlu0 %2653
        %2656 = vst.msk [vmem:[#allocation6 + $0x18] sm:$0xff] %vm1757, %v2654
        %v2657 = vld [vmem:[#allocation3] sm:$0xff]
        %v2658 = vld [vmem:[%s2 + $0x4] sm:$0x1]
        %v2659 = vlaneseq
        %v2660 = vshrl.u32 %v2659, 7
        %v2661 = vsub.s32 0, %v2660
        %v2662 = vrot.slane %v2658, %v2661
        %2664 = vrot.lane.b32.xlu0 %v2662, 9
        %v2665 = vpop.permute.xlu0 %2664
        %v2667 = vmul.f32 %v2657, %v2665
        %2669 = vrot.lane.b32.xlu0 %v2667, 119
        %v2670 = vpop.permute.xlu0 %2669
        %2672 = vst.msk [vmem:[#allocation6 + $0x20] sm:$0xff] %vm1757, %v2670
        %v2673 = vld [vmem:[#allocation3] sm:$0xff]
        %v2674 = vld [vmem:[%s2 + $0x5] sm:$0x1]
        %v2675 = vlaneseq
        %v2676 = vshrl.u32 %v2675, 7
        %v2677 = vsub.s32 0, %v2676
        %v2678 = vrot.slane %v2674, %v2677
        %2680 = vrot.lane.b32.xlu0 %v2678, 10
        %v2681 = vpop.permute.xlu0 %2680
        %v2683 = vmul.f32 %v2673, %v2681
        %2685 = vrot.lane.b32.xlu0 %v2683, 118
        %v2686 = vpop.permute.xlu0 %2685
        %2688 = vst.msk [vmem:[#allocation6 + $0x28] sm:$0xff] %vm1757, %v2686
        %v2689 = vld [vmem:[#allocation3] sm:$0xff]
        %v2690 = vld [vmem:[%s2 + $0x6] sm:$0x1]
        %v2691 = vlaneseq
        %v2692 = vshrl.u32 %v2691, 7
        %v2693 = vsub.s32 0, %v2692
        %v2694 = vrot.slane %v2690, %v2693
        %2696 = vrot.lane.b32.xlu0 %v2694, 16
        %v2697 = vpop.permute.xlu0 %2696
        %v2699 = vmul.f32 %v2689, %v2697
        %2701 = vrot.lane.b32.xlu0 %v2699, 112
        %v2702 = vpop.permute.xlu0 %2701
        %2704 = vst.msk [vmem:[#allocation6 + $0x30] sm:$0xff] %vm1757, %v2702
        %v2705 = vld [vmem:[#allocation3] sm:$0xff]
        %v2706 = vld [vmem:[%s2 + $0x7] sm:$0x1]
        %v2707 = vlaneseq
        %v2708 = vshrl.u32 %v2707, 7
        %v2709 = vsub.s32 0, %v2708
        %v2710 = vrot.slane %v2706, %v2709
        %2712 = vrot.lane.b32.xlu0 %v2710, 17
        %v2713 = vpop.permute.xlu0 %2712
        %v2715 = vmul.f32 %v2705, %v2713
        %2717 = vrot.lane.b32.xlu0 %v2715, 111
        %v2718 = vpop.permute.xlu0 %2717
        %2720 = vst.msk [vmem:[#allocation6 + $0x38] sm:$0xff] %vm1757, %v2718
        %v2721 = vld [vmem:[#allocation3] sm:$0xff]
        %v2722 = vld [vmem:[%s2 + $0x8] sm:$0x1]
        %v2723 = vlaneseq
        %v2724 = vshrl.u32 %v2723, 7
        %v2725 = vsub.s32 0, %v2724
        %v2726 = vrot.slane %v2722, %v2725
        %2728 = vrot.lane.b32.xlu0 %v2726, 18
        %v2729 = vpop.permute.xlu0 %2728
        %v2731 = vmul.f32 %v2721, %v2729
        %2733 = vrot.lane.b32.xlu0 %v2731, 110
        %v2734 = vpop.permute.xlu0 %2733
        %2736 = vst.msk [vmem:[#allocation6 + $0x40] sm:$0xff] %vm1757, %v2734
        %v2737 = vld [vmem:[%s15] sm:$0xff]
        %v2738 = vld [vmem:[#allocation6] sm:$0xff]
        %v2739 = vld [vmem:[#allocation6 + $0x8] sm:$0xff]
        %v2740 = vld [vmem:[#allocation6 + $0x10] sm:$0xff]
        %v2741 = vld [vmem:[#allocation6 + $0x18] sm:$0xff]
        %v2742 = vld [vmem:[#allocation6 + $0x20] sm:$0xff]
        %v2743 = vld [vmem:[#allocation6 + $0x28] sm:$0xff]
        %v2744 = vld [vmem:[#allocation6 + $0x30] sm:$0xff]
        %v2745 = vld [vmem:[#allocation6 + $0x38] sm:$0xff]
        %v2746 = vld [vmem:[#allocation6 + $0x40] sm:$0xff]
        %v2747 = vld [vmem:[%s16] sm:$0xff]
        %2749 = vset.pattern.permute.xlu0 0
        %2750 = vperm.xlu0 %2749, %v2747
        %v2751 = vpop.permute.xlu0 %2750
        %v2754 = vsel %vm1554, %v2737, 0
        %2756 = vmatprep.subr.mxu0 0.0
        %2757 = vmatpush1.msra.mxu0 %v2738
        %2758 = vmatprep.subr.mxu0 0.0
        %2759 = vmatpush1.msra.mxu0 %v2739
        %2760 = vmatprep.subr.mxu0 0.0
        %2761 = vmatpush1.msra.mxu0 %v2740
        %2762 = vmatprep.subr.mxu0 0.0
        %2763 = vmatpush1.msra.mxu0 %v2741
        %2764 = vmatprep.subr.mxu0 0.0
        %2765 = vmatpush1.msra.mxu0 %v2742
        %2766 = vmatprep.subr.mxu0 0.0
        %2767 = vmatpush1.msra.mxu0 %v2743
        %2768 = vmatprep.subr.mxu0 0.0
        %2769 = vmatpush1.msra.mxu0 %v2744
        %2770 = vmatprep.subr.mxu0 0.0
        %2771 = vmatpush1.msra.mxu0 %v2745
        %2772 = vmatprep.subr.mxu0 0.0
        %2773 = vmatpush1.msra.mxu0 %v2746
        %2774 = vmatprep.subr.mxu0 0.0
        %2775 = vmatpush1.msra.mxu0 0.0
        %2776 = vmatprep.subr.mxu0 0.0
        %2777 = vmatpush1.msra.mxu0 0.0
        %2778 = vmatprep.subr.mxu0 0.0
        %2779 = vmatpush1.msra.mxu0 0.0
        %2780 = vmatprep.subr.mxu0 0.0
        %2781 = vmatpush1.msra.mxu0 0.0
        %2782 = vmatprep.subr.mxu0 0.0
        %2783 = vmatpush1.msra.mxu0 0.0
        %2784 = vmatprep.subr.mxu0 0.0
        %2785 = vmatpush1.msra.mxu0 0.0
        %2786 = vmatprep.subr.mxu0 0.0
        %2787 = vmatpush1.msra.mxu0 0.0
        %2788 = vmatprep.subr.mxu0 0.0
        %2789 = vmatpush1.msra.mxu0 0.0
        %2790 = vmatprep.subr.mxu0 0.0
        %2791 = vmatpush1.msra.mxu0 0.0
        %2792 = vmatprep.subr.mxu0 0.0
        %2793 = vmatpush1.msra.mxu0 0.0
        %2794 = vmatprep.subr.mxu0 0.0
        %2795 = vmatpush1.msra.mxu0 0.0
        %2796 = vmatprep.subr.mxu0 0.0
        %2797 = vmatpush1.msra.mxu0 0.0
        %2798 = vmatprep.subr.mxu0 0.0
        %2799 = vmatpush1.msra.mxu0 0.0
        %2800 = vmatprep.subr.mxu0 0.0
        %2801 = vmatpush1.msra.mxu0 0.0
        %2802 = vmatprep.subr.mxu0 0.0
        %2803 = vmatpush1.msra.mxu0 0.0
        %2804 = vmatprep.subr.mxu0 0.0
        %2805 = vmatpush1.msra.mxu0 0.0
        %2806 = vmatprep.subr.mxu0 0.0
        %2807 = vmatpush1.msra.mxu0 0.0
        %2808 = vmatprep.subr.mxu0 0.0
        %2809 = vmatpush1.msra.mxu0 0.0
        %2810 = vmatprep.subr.mxu0 0.0
        %2811 = vmatpush1.msra.mxu0 0.0
        %2812 = vmatprep.subr.mxu0 0.0
        %2813 = vmatpush1.msra.mxu0 0.0
        %2814 = vmatprep.subr.mxu0 0.0
        %2815 = vmatpush1.msra.mxu0 0.0
        %2816 = vmatprep.subr.mxu0 0.0
        %2817 = vmatpush1.msra.mxu0 0.0
        %2818 = vmatprep.subr.mxu0 0.0
        %2819 = vmatpush1.msra.mxu0 0.0
        %2820 = vmatprep.mubr.f32.mxu0 0.0
        %2821 = vmatmul.mubr.f32.gmra.mrb[0].mxu0 %v2754
        %v2822 = vpop.f32.mrb[0].mxu0
        %v2823 = vadd.f32 %v2751, %v2822
        %v2824 = vpop.f32.mrb[0].mxu0
        %2825 = vdwg.mxu0
        %v2826 = vsel %vm1757, %v2823, 0.0
        %2827 = vadd.xlane.f32.xlu0 %v2826
        %v2828 = vpop.xlane.xlu0 %2827
        %v2829 = vmul.f32 %v2828, 0.015625
        %v2830 = vsub.f32 %v2823, %v2829
        %v2831 = vmul.f32 %v2830, %v2830
        %v2832 = vsel %vm1757, %v2831, 0.0
        %2833 = vadd.xlane.f32.xlu0 %v2832
        %v2834 = vpop.xlane.xlu0 %2833
        %v2835 = vmul.f32 %v2834, 0.015625
        %v2836 = vadd.f32 %v2835, 1e-05
        %v2837 = vrsqrt.pop %v2836
        %v2838 = vmul.f32 %v2830, %v2837
        %vm2839 = vcmp.ge.f32.partialorder %v2838, 0.0
        %v2840 = vstv %s708
        %v2841 = vmul.f32 %v2840, %v2838
        %v2842 = vsel %vm2839, %v2838, %v2841
        %v2843 = vadd.f32 %v2842, %v2595
        %v2844 = vld [vmem:[%s6] sm:$0xff]
        %v2845 = vld [vmem:[%s6 + $0x8] sm:$0xff]
        %v2846 = vld [vmem:[%s6 + $0x10] sm:$0xff]
        %v2847 = vld [vmem:[%s6 + $0x18] sm:$0xff]
        %v2848 = vld [vmem:[%s6 + $0x20] sm:$0xff]
        %v2849 = vld [vmem:[%s6 + $0x28] sm:$0xff]
        %v2850 = vld [vmem:[%s6 + $0x30] sm:$0xff]
        %v2851 = vld [vmem:[%s6 + $0x38] sm:$0xff]
        %v2852 = vld [vmem:[%s6 + $0x40] sm:$0xff]
        %v2853 = vld [vmem:[%s6 + $0x48] sm:$0xff]
        %v2854 = vld [vmem:[%s6 + $0x50] sm:$0xff]
        %v2855 = vld [vmem:[%s6 + $0x58] sm:$0xff]
        %v2856 = vld [vmem:[%s6 + $0x60] sm:$0xff]
        %v2857 = vld [vmem:[%s6 + $0x68] sm:$0xff]
        %v2858 = vld [vmem:[%s6 + $0x70] sm:$0xff]
        %v2859 = vld [vmem:[%s6 + $0x78] sm:$0xff]
        %v2861 = vsel %vm1757, %v2843, 0
        %2863 = vmatprep.subr.mxu0 %v2845
        %2864 = vmatpush1.msra.mxu0 %v2844
        %2865 = vmatprep.subr.mxu0 %v2847
        %2866 = vmatpush1.msra.mxu0 %v2846
        %2867 = vmatprep.subr.mxu0 %v2849
        %2868 = vmatpush1.msra.mxu0 %v2848
        %2869 = vmatprep.subr.mxu0 %v2851
        %2870 = vmatpush1.msra.mxu0 %v2850
        %2871 = vmatprep.subr.mxu0 %v2853
        %2872 = vmatpush1.msra.mxu0 %v2852
        %2873 = vmatprep.subr.mxu0 %v2855
        %2874 = vmatpush1.msra.mxu0 %v2854
        %2875 = vmatprep.subr.mxu0 %v2857
        %2876 = vmatpush1.msra.mxu0 %v2856
        %2877 = vmatprep.subr.mxu0 %v2859
        %2878 = vmatpush1.msra.mxu0 %v2858
        %2879 = vmatprep.subr.mxu0 0.0
        %2880 = vmatpush1.msra.mxu0 0.0
        %2881 = vmatprep.subr.mxu0 0.0
        %2882 = vmatpush1.msra.mxu0 0.0
        %2883 = vmatprep.subr.mxu0 0.0
        %2884 = vmatpush1.msra.mxu0 0.0
        %2885 = vmatprep.subr.mxu0 0.0
        %2886 = vmatpush1.msra.mxu0 0.0
        %2887 = vmatprep.subr.mxu0 0.0
        %2888 = vmatpush1.msra.mxu0 0.0
        %2889 = vmatprep.subr.mxu0 0.0
        %2890 = vmatpush1.msra.mxu0 0.0
        %2891 = vmatprep.subr.mxu0 0.0
        %2892 = vmatpush1.msra.mxu0 0.0
        %2893 = vmatprep.subr.mxu0 0.0
        %2894 = vmatpush1.msra.mxu0 0.0
        %2895 = vmatprep.subr.mxu0 0.0
        %2896 = vmatpush1.msra.mxu0 0.0
        %2897 = vmatprep.subr.mxu0 0.0
        %2898 = vmatpush1.msra.mxu0 0.0
        %2899 = vmatprep.subr.mxu0 0.0
        %2900 = vmatpush1.msra.mxu0 0.0
        %2901 = vmatprep.subr.mxu0 0.0
        %2902 = vmatpush1.msra.mxu0 0.0
        %2903 = vmatprep.subr.mxu0 0.0
        %2904 = vmatpush1.msra.mxu0 0.0
        %2905 = vmatprep.subr.mxu0 0.0
        %2906 = vmatpush1.msra.mxu0 0.0
        %2907 = vmatprep.subr.mxu0 0.0
        %2908 = vmatpush1.msra.mxu0 0.0
        %2909 = vmatprep.subr.mxu0 0.0
        %2910 = vmatpush1.msra.mxu0 0.0
        %2911 = vmatprep.subr.mxu0 0.0
        %2912 = vmatpush1.msra.mxu0 0.0
        %2913 = vmatprep.subr.mxu0 0.0
        %2914 = vmatpush1.msra.mxu0 0.0
        %2915 = vmatprep.subr.mxu0 0.0
        %2916 = vmatpush1.msra.mxu0 0.0
        %2917 = vmatprep.subr.mxu0 0.0
        %2918 = vmatpush1.msra.mxu0 0.0
        %2919 = vmatprep.subr.mxu0 0.0
        %2920 = vmatpush1.msra.mxu0 0.0
        %2921 = vmatprep.subr.mxu0 0.0
        %2922 = vmatpush1.msra.mxu0 0.0
        %2923 = vmatprep.subr.mxu0 0.0
        %2924 = vmatpush1.msra.mxu0 0.0
        %2925 = vmatprep.subr.mxu0 0.0
        %2926 = vmatpush1.msra.mxu0 0.0
        %2927 = vmatprep.mubr.f32.mxu0 0.0
        %2928 = vmatmul.mubr.f32.gmra.mrb[0].mxu0 %v2861
        %v2929 = vpop.f32.mrb[0].mxu0
        %v2930 = vadd.f32 0.0, %v2929
        %v2931 = vpop.f32.mrb[0].mxu0
        %v2932 = vadd.f32 0.0, %v2931
        %2933 = vdwg.mxu0
        %2936 = vrot.lane.b32.xlu0 %v2930, 17
        %v2937 = vpop.permute.xlu0 %2936
        %2938 = vrot.lane.b32.xlu0 %v2932, 17
        %v2939 = vpop.permute.xlu0 %2938
        %v2940 = vsel %vm717, %v2937, %v2939
        %2944 = vst.msk [vmem:[#allocation2] sm:$0xff] %vm1200, %v2937
        %2945 = vst [vmem:[#allocation2 + $0x8] sm:$0xff] %v2940
        %2946 = vst.msk [vmem:[#allocation2 + $0x10] sm:$0xff] %vm717, %v2939
        %v2947 = vld [vmem:[#allocation2] sm:$0xff]
        %v2948 = vld [vmem:[#allocation2 + $0x8] sm:$0xff]
        %v2949 = vld [vmem:[%s1] ss:$8 sm:$0x3]
        %v2951 = vlaneseq
        %v2952 = vshrl.u32 %v2951, 7
        %v2953 = vsub.s32 0, %v2952
        %v2954 = vrot.slane %v2949, %v2953
        %v2955 = vlaneseq
        %v2956 = vshrl.u32 %v2955, 7
        %v2957 = vsub.s32 1, %v2956
        %v2958 = vrot.slane %v2949, %v2957
        %v2961 = vmul.f32 %v2947, %v2954
        %v2962 = vmul.f32 %v2948, %v2958
        %2963 = vst [vmem:[#allocation5] sm:$0xff] %v2961
        %2964 = vst [vmem:[#allocation5 + $0x8] sm:$0xff] %v2962
        %v2965 = vld [vmem:[#allocation2] sm:$0xff]
        %v2966 = vld [vmem:[#allocation2 + $0x8] sm:$0xff]
        %v2967 = vld [vmem:[#allocation2 + $0x10] sm:$0xff]
        %v2968 = vld [vmem:[%s748] ss:$8 sm:$0x3]
        %v2970 = vlaneseq
        %v2971 = vshrl.u32 %v2970, 7
        %v2972 = vsub.s32 0, %v2971
        %v2973 = vrot.slane %v2968, %v2972
        %v2974 = vlaneseq
        %v2975 = vshrl.u32 %v2974, 7
        %v2976 = vsub.s32 1, %v2975
        %v2977 = vrot.slane %v2968, %v2976
        %2978 = vrot.lane.b32.xlu0 %v2973, 1
        %v2979 = vpop.permute.xlu0 %2978
        %2980 = vrot.lane.b32.xlu0 %v2977, 1
        %v2981 = vpop.permute.xlu0 %2980
        %v2982 = vsel %vm763, %v2979, %v2981
        %v2986 = vmul.f32 %v2965, %v2979
        %v2987 = vmul.f32 %v2966, %v2982
        %v2988 = vmul.f32 %v2967, %v2981
        %2992 = vrot.lane.b32.xlu0 %v2986, 127
        %v2993 = vpop.permute.xlu0 %2992
        %2994 = vrot.lane.b32.xlu0 %v2987, 127
        %v2995 = vpop.permute.xlu0 %2994
        %2996 = vrot.lane.b32.xlu0 %v2988, 127
        %v2997 = vpop.permute.xlu0 %2996
        %v2998 = vsel %vm783, %v2993, %v2995
        %v2999 = vsel %vm783, %v2995, %v2997
        %3002 = vst [vmem:[#allocation5 + $0x10] sm:$0xff] %v2998
        %3003 = vst [vmem:[#allocation5 + $0x18] sm:$0xff] %v2999
        %v3004 = vld [vmem:[#allocation2] sm:$0xff]
        %v3005 = vld [vmem:[#allocation2 + $0x8] sm:$0xff]
        %v3006 = vld [vmem:[#allocation2 + $0x10] sm:$0xff]
        %v3007 = vld [vmem:[%s793] ss:$8 sm:$0x3]
        %v3009 = vlaneseq
        %v3010 = vshrl.u32 %v3009, 7
        %v3011 = vsub.s32 0, %v3010
        %v3012 = vrot.slane %v3007, %v3011
        %v3013 = vlaneseq
        %v3014 = vshrl.u32 %v3013, 7
        %v3015 = vsub.s32 1, %v3014
        %v3016 = vrot.slane %v3007, %v3015
        %3017 = vrot.lane.b32.xlu0 %v3012, 2
        %v3018 = vpop.permute.xlu0 %3017
        %3019 = vrot.lane.b32.xlu0 %v3016, 2
        %v3020 = vpop.permute.xlu0 %3019
        %v3021 = vsel %vm808, %v3018, %v3020
        %v3025 = vmul.f32 %v3004, %v3018
        %v3026 = vmul.f32 %v3005, %v3021
        %v3027 = vmul.f32 %v3006, %v3020
        %3031 = vrot.lane.b32.xlu0 %v3025, 126
        %v3032 = vpop.permute.xlu0 %3031
        %3033 = vrot.lane.b32.xlu0 %v3026, 126
        %v3034 = vpop.permute.xlu0 %3033
        %3035 = vrot.lane.b32.xlu0 %v3027, 126
        %v3036 = vpop.permute.xlu0 %3035
        %v3037 = vsel %vm825, %v3032, %v3034
        %v3038 = vsel %vm825, %v3034, %v3036
        %3041 = vst [vmem:[#allocation5 + $0x20] sm:$0xff] %v3037
        %3042 = vst [vmem:[#allocation5 + $0x28] sm:$0xff] %v3038
        %v3043 = vld [vmem:[#allocation2] sm:$0xff]
        %v3044 = vld [vmem:[#allocation2 + $0x8] sm:$0xff]
        %v3045 = vld [vmem:[#allocation2 + $0x10] sm:$0xff]
        %v3046 = vld [vmem:[%s835] ss:$8 sm:$0x3]
        %v3048 = vlaneseq
        %v3049 = vshrl.u32 %v3048, 7
        %v3050 = vsub.s32 0, %v3049
        %v3051 = vrot.slane %v3046, %v3050
        %v3052 = vlaneseq
        %v3053 = vshrl.u32 %v3052, 7
        %v3054 = vsub.s32 1, %v3053
        %v3055 = vrot.slane %v3046, %v3054
        %3056 = vrot.lane.b32.xlu0 %v3051, 16
        %v3057 = vpop.permute.xlu0 %3056
        %3058 = vrot.lane.b32.xlu0 %v3055, 16
        %v3059 = vpop.permute.xlu0 %3058
        %v3060 = vsel %vm850, %v3057, %v3059
        %v3064 = vmul.f32 %v3043, %v3057
        %v3065 = vmul.f32 %v3044, %v3060
        %v3066 = vmul.f32 %v3045, %v3059
        %3070 = vrot.lane.b32.xlu0 %v3064, 112
        %v3071 = vpop.permute.xlu0 %3070
        %3072 = vrot.lane.b32.xlu0 %v3065, 112
        %v3073 = vpop.permute.xlu0 %3072
        %3074 = vrot.lane.b32.xlu0 %v3066, 112
        %v3075 = vpop.permute.xlu0 %3074
        %v3076 = vsel %vm870, %v3071, %v3073
        %v3077 = vsel %vm870, %v3073, %v3075
        %3080 = vst [vmem:[#allocation5 + $0x30] sm:$0xff] %v3076
        %3081 = vst [vmem:[#allocation5 + $0x38] sm:$0xff] %v3077
        %v3082 = vld [vmem:[#allocation2] sm:$0xff]
        %v3083 = vld [vmem:[#allocation2 + $0x8] sm:$0xff]
        %v3084 = vld [vmem:[#allocation2 + $0x10] sm:$0xff]
        %v3085 = vld [vmem:[%s880] ss:$8 sm:$0x3]
        %v3087 = vlaneseq
        %v3088 = vshrl.u32 %v3087, 7
        %v3089 = vsub.s32 0, %v3088
        %v3090 = vrot.slane %v3085, %v3089
        %v3091 = vlaneseq
        %v3092 = vshrl.u32 %v3091, 7
        %v3093 = vsub.s32 1, %v3092
        %v3094 = vrot.slane %v3085, %v3093
        %3095 = vrot.lane.b32.xlu0 %v3090, 17
        %v3096 = vpop.permute.xlu0 %3095
        %3097 = vrot.lane.b32.xlu0 %v3094, 17
        %v3098 = vpop.permute.xlu0 %3097
        %v3099 = vsel %vm717, %v3096, %v3098
        %v3103 = vmul.f32 %v3082, %v3096
        %v3104 = vmul.f32 %v3083, %v3099
        %v3105 = vmul.f32 %v3084, %v3098
        %3109 = vrot.lane.b32.xlu0 %v3103, 111
        %v3110 = vpop.permute.xlu0 %3109
        %3111 = vrot.lane.b32.xlu0 %v3104, 111
        %v3112 = vpop.permute.xlu0 %3111
        %3113 = vrot.lane.b32.xlu0 %v3105, 111
        %v3114 = vpop.permute.xlu0 %3113
        %v3115 = vsel %vm911, %v3110, %v3112
        %v3116 = vsel %vm911, %v3112, %v3114
        %3119 = vst [vmem:[#allocation5 + $0x40] sm:$0xff] %v3115
        %3120 = vst [vmem:[#allocation5 + $0x48] sm:$0xff] %v3116
        %v3121 = vld [vmem:[#allocation2] sm:$0xff]
        %v3122 = vld [vmem:[#allocation2 + $0x8] sm:$0xff]
        %v3123 = vld [vmem:[#allocation2 + $0x10] sm:$0xff]
        %v3124 = vld [vmem:[%s921] ss:$8 sm:$0x3]
        %v3126 = vlaneseq
        %v3127 = vshrl.u32 %v3126, 7
        %v3128 = vsub.s32 0, %v3127
        %v3129 = vrot.slane %v3124, %v3128
        %v3130 = vlaneseq
        %v3131 = vshrl.u32 %v3130, 7
        %v3132 = vsub.s32 1, %v3131
        %v3133 = vrot.slane %v3124, %v3132
        %3134 = vrot.lane.b32.xlu0 %v3129, 18
        %v3135 = vpop.permute.xlu0 %3134
        %3136 = vrot.lane.b32.xlu0 %v3133, 18
        %v3137 = vpop.permute.xlu0 %3136
        %v3138 = vsel %vm936, %v3135, %v3137
        %v3142 = vmul.f32 %v3121, %v3135
        %v3143 = vmul.f32 %v3122, %v3138
        %v3144 = vmul.f32 %v3123, %v3137
        %3148 = vrot.lane.b32.xlu0 %v3142, 110
        %v3149 = vpop.permute.xlu0 %3148
        %3150 = vrot.lane.b32.xlu0 %v3143, 110
        %v3151 = vpop.permute.xlu0 %3150
        %3152 = vrot.lane.b32.xlu0 %v3144, 110
        %v3153 = vpop.permute.xlu0 %3152
        %v3154 = vsel %vm956, %v3149, %v3151
        %v3155 = vsel %vm956, %v3151, %v3153
        %3158 = vst [vmem:[#allocation5 + $0x50] sm:$0xff] %v3154
        %3159 = vst [vmem:[#allocation5 + $0x58] sm:$0xff] %v3155
        %v3160 = vld [vmem:[#allocation2] sm:$0xff]
        %v3161 = vld [vmem:[#allocation2 + $0x8] sm:$0xff]
        %v3162 = vld [vmem:[#allocation2 + $0x10] sm:$0xff]
        %v3163 = vld [vmem:[%s966] ss:$8 sm:$0x3]
        %v3165 = vlaneseq
        %v3166 = vshrl.u32 %v3165, 7
        %v3167 = vsub.s32 0, %v3166
        %v3168 = vrot.slane %v3163, %v3167
        %v3169 = vlaneseq
        %v3170 = vshrl.u32 %v3169, 7
        %v3171 = vsub.s32 1, %v3170
        %v3172 = vrot.slane %v3163, %v3171
        %3173 = vrot.lane.b32.xlu0 %v3168, 32
        %v3174 = vpop.permute.xlu0 %3173
        %3175 = vrot.lane.b32.xlu0 %v3172, 32
        %v3176 = vpop.permute.xlu0 %3175
        %v3177 = vsel %vm981, %v3174, %v3176
        %v3181 = vmul.f32 %v3160, %v3174
        %v3182 = vmul.f32 %v3161, %v3177
        %v3183 = vmul.f32 %v3162, %v3176
        %3187 = vrot.lane.b32.xlu0 %v3181, 96
        %v3188 = vpop.permute.xlu0 %3187
        %3189 = vrot.lane.b32.xlu0 %v3182, 96
        %v3190 = vpop.permute.xlu0 %3189
        %3191 = vrot.lane.b32.xlu0 %v3183, 96
        %v3192 = vpop.permute.xlu0 %3191
        %v3193 = vsel %vm998, %v3188, %v3190
        %v3194 = vsel %vm998, %v3190, %v3192
        %3197 = vst [vmem:[#allocation5 + $0x60] sm:$0xff] %v3193
        %3198 = vst [vmem:[#allocation5 + $0x68] sm:$0xff] %v3194
        %v3199 = vld [vmem:[#allocation2] sm:$0xff]
        %v3200 = vld [vmem:[#allocation2 + $0x8] sm:$0xff]
        %v3201 = vld [vmem:[#allocation2 + $0x10] sm:$0xff]
        %v3202 = vld [vmem:[%s1008] ss:$8 sm:$0x3]
        %v3204 = vlaneseq
        %v3205 = vshrl.u32 %v3204, 7
        %v3206 = vsub.s32 0, %v3205
        %v3207 = vrot.slane %v3202, %v3206
        %v3208 = vlaneseq
        %v3209 = vshrl.u32 %v3208, 7
        %v3210 = vsub.s32 1, %v3209
        %v3211 = vrot.slane %v3202, %v3210
        %3212 = vrot.lane.b32.xlu0 %v3207, 33
        %v3213 = vpop.permute.xlu0 %3212
        %3214 = vrot.lane.b32.xlu0 %v3211, 33
        %v3215 = vpop.permute.xlu0 %3214
        %v3216 = vsel %vm1023, %v3213, %v3215
        %v3220 = vmul.f32 %v3199, %v3213
        %v3221 = vmul.f32 %v3200, %v3216
        %v3222 = vmul.f32 %v3201, %v3215
        %3226 = vrot.lane.b32.xlu0 %v3220, 95
        %v3227 = vpop.permute.xlu0 %3226
        %3228 = vrot.lane.b32.xlu0 %v3221, 95
        %v3229 = vpop.permute.xlu0 %3228
        %3230 = vrot.lane.b32.xlu0 %v3222, 95
        %v3231 = vpop.permute.xlu0 %3230
        %v3232 = vsel %vm1043, %v3227, %v3229
        %v3233 = vsel %vm1043, %v3229, %v3231
        %3236 = vst [vmem:[#allocation5 + $0x70] sm:$0xff] %v3232
        %3237 = vst [vmem:[#allocation5 + $0x78] sm:$0xff] %v3233
        %v3238 = vld [vmem:[#allocation2] sm:$0xff]
        %v3239 = vld [vmem:[#allocation2 + $0x8] sm:$0xff]
        %v3240 = vld [vmem:[#allocation2 + $0x10] sm:$0xff]
        %v3241 = vld [vmem:[%s1053] ss:$8 sm:$0x3]
        %v3243 = vlaneseq
        %v3244 = vshrl.u32 %v3243, 7
        %v3245 = vsub.s32 0, %v3244
        %v3246 = vrot.slane %v3241, %v3245
        %v3247 = vlaneseq
        %v3248 = vshrl.u32 %v3247, 7
        %v3249 = vsub.s32 1, %v3248
        %v3250 = vrot.slane %v3241, %v3249
        %3251 = vrot.lane.b32.xlu0 %v3246, 34
        %v3252 = vpop.permute.xlu0 %3251
        %3253 = vrot.lane.b32.xlu0 %v3250, 34
        %v3254 = vpop.permute.xlu0 %3253
        %v3255 = vsel %vm700, %v3252, %v3254
        %v3259 = vmul.f32 %v3238, %v3252
        %v3260 = vmul.f32 %v3239, %v3255
        %v3261 = vmul.f32 %v3240, %v3254
        %3265 = vrot.lane.b32.xlu0 %v3259, 94
        %v3266 = vpop.permute.xlu0 %3265
        %3267 = vrot.lane.b32.xlu0 %v3260, 94
        %v3268 = vpop.permute.xlu0 %3267
        %3269 = vrot.lane.b32.xlu0 %v3261, 94
        %v3270 = vpop.permute.xlu0 %3269
        %v3271 = vsel %vm1084, %v3266, %v3268
        %v3272 = vsel %vm1084, %v3268, %v3270
        %3275 = vst [vmem:[#allocation5 + $0x80] sm:$0xff] %v3271
        %3276 = vst [vmem:[#allocation5 + $0x88] sm:$0xff] %v3272
        %v3277 = vld [vmem:[%s17] sm:$0xf]
        %v3278 = vld [vmem:[#allocation5] sm:$0xff]
        %v3279 = vld [vmem:[#allocation5 + $0x8] sm:$0xff]
        %v3280 = vld [vmem:[#allocation5 + $0x10] sm:$0xff]
        %v3281 = vld [vmem:[#allocation5 + $0x18] sm:$0xff]
        %v3282 = vld [vmem:[#allocation5 + $0x20] sm:$0xff]
        %v3283 = vld [vmem:[#allocation5 + $0x28] sm:$0xff]
        %v3284 = vld [vmem:[#allocation5 + $0x30] sm:$0xff]
        %v3285 = vld [vmem:[#allocation5 + $0x38] sm:$0xff]
        %v3286 = vld [vmem:[#allocation5 + $0x40] sm:$0xff]
        %v3287 = vld [vmem:[#allocation5 + $0x48] sm:$0xff]
        %v3288 = vld [vmem:[#allocation5 + $0x50] sm:$0xff]
        %v3289 = vld [vmem:[#allocation5 + $0x58] sm:$0xff]
        %v3290 = vld [vmem:[#allocation5 + $0x60] sm:$0xff]
        %v3291 = vld [vmem:[#allocation5 + $0x68] sm:$0xff]
        %v3292 = vld [vmem:[#allocation5 + $0x70] sm:$0xff]
        %v3293 = vld [vmem:[#allocation5 + $0x78] sm:$0xff]
        %v3294 = vld [vmem:[#allocation5 + $0x80] sm:$0xff]
        %v3295 = vld [vmem:[#allocation5 + $0x88] sm:$0xff]
        %v3296 = vld [vmem:[%s18] sm:$0xf]
        %3298 = vset.pattern.permute.xlu0 0
        %3299 = vperm.xlu0 %3298, %v3296
        %v3300 = vpop.permute.xlu0 %3299
        %v3303 = vsel %vm1554, %v3277, 0
        %3305 = vmatprep.subr.mxu0 %v3279
        %3306 = vmatpush1.msra.mxu0 %v3278
        %3307 = vmatprep.subr.mxu0 %v3281
        %3308 = vmatpush1.msra.mxu0 %v3280
        %3309 = vmatprep.subr.mxu0 %v3283
        %3310 = vmatpush1.msra.mxu0 %v3282
        %3311 = vmatprep.subr.mxu0 %v3285
        %3312 = vmatpush1.msra.mxu0 %v3284
        %3313 = vmatprep.subr.mxu0 %v3287
        %3314 = vmatpush1.msra.mxu0 %v3286
        %3315 = vmatprep.subr.mxu0 %v3289
        %3316 = vmatpush1.msra.mxu0 %v3288
        %3317 = vmatprep.subr.mxu0 %v3291
        %3318 = vmatpush1.msra.mxu0 %v3290
        %3319 = vmatprep.subr.mxu0 %v3293
        %3320 = vmatpush1.msra.mxu0 %v3292
        %3321 = vmatprep.subr.mxu0 %v3295
        %3322 = vmatpush1.msra.mxu0 %v3294
        %3323 = vmatprep.subr.mxu0 0.0
        %3324 = vmatpush1.msra.mxu0 0.0
        %3325 = vmatprep.subr.mxu0 0.0
        %3326 = vmatpush1.msra.mxu0 0.0
        %3327 = vmatprep.subr.mxu0 0.0
        %3328 = vmatpush1.msra.mxu0 0.0
        %3329 = vmatprep.subr.mxu0 0.0
        %3330 = vmatpush1.msra.mxu0 0.0
        %3331 = vmatprep.subr.mxu0 0.0
        %3332 = vmatpush1.msra.mxu0 0.0
        %3333 = vmatprep.subr.mxu0 0.0
        %3334 = vmatpush1.msra.mxu0 0.0
        %3335 = vmatprep.subr.mxu0 0.0
        %3336 = vmatpush1.msra.mxu0 0.0
        %3337 = vmatprep.subr.mxu0 0.0
        %3338 = vmatpush1.msra.mxu0 0.0
        %3339 = vmatprep.subr.mxu0 0.0
        %3340 = vmatpush1.msra.mxu0 0.0
        %3341 = vmatprep.subr.mxu0 0.0
        %3342 = vmatpush1.msra.mxu0 0.0
        %3343 = vmatprep.subr.mxu0 0.0
        %3344 = vmatpush1.msra.mxu0 0.0
        %3345 = vmatprep.subr.mxu0 0.0
        %3346 = vmatpush1.msra.mxu0 0.0
        %3347 = vmatprep.subr.mxu0 0.0
        %3348 = vmatpush1.msra.mxu0 0.0
        %3349 = vmatprep.subr.mxu0 0.0
        %3350 = vmatpush1.msra.mxu0 0.0
        %3351 = vmatprep.subr.mxu0 0.0
        %3352 = vmatpush1.msra.mxu0 0.0
        %3353 = vmatprep.subr.mxu0 0.0
        %3354 = vmatpush1.msra.mxu0 0.0
        %3355 = vmatprep.subr.mxu0 0.0
        %3356 = vmatpush1.msra.mxu0 0.0
        %3357 = vmatprep.subr.mxu0 0.0
        %3358 = vmatpush1.msra.mxu0 0.0
        %3359 = vmatprep.subr.mxu0 0.0
        %3360 = vmatpush1.msra.mxu0 0.0
        %3361 = vmatprep.subr.mxu0 0.0
        %3362 = vmatpush1.msra.mxu0 0.0
        %3363 = vmatprep.subr.mxu0 0.0
        %3364 = vmatpush1.msra.mxu0 0.0
        %3365 = vmatprep.subr.mxu0 0.0
        %3366 = vmatpush1.msra.mxu0 0.0
        %3367 = vmatprep.subr.mxu0 0.0
        %3368 = vmatpush1.msra.mxu0 0.0
        %3369 = vmatprep.mubr.f32.mxu0 0.0
        %3370 = vmatmul.mubr.f32.gmra.mrb[0].mxu0 %v3303
        %v3371 = vpop.f32.mrb[0].mxu0
        %v3372 = vadd.f32 %v3300, %v3371
        %v3373 = vpop.f32.mrb[0].mxu0
        %v3374 = vadd.f32 %v3300, %v3373
        %3375 = vdwg.mxu0
        %v3376 = vsel %vm1112, %v3372, 0.0
        %v3377 = vsel %vm1112, %v3374, 0.0
        %v3378 = vadd.f32 %v3376, %v3377
        %3379 = vadd.xlane.f32.xlu0 %v3378
        %v3380 = vpop.xlane.xlu0 %3379
        %v3381 = vmul.f32 %v3380, 0.00390625
        %v3382 = vsub.f32 %v3372, %v3381
        %v3383 = vsub.f32 %v3374, %v3381
        %v3384 = vmul.f32 %v3382, %v3382
        %v3385 = vmul.f32 %v3383, %v3383
        %v3386 = vsel %vm1112, %v3384, 0.0
        %v3387 = vsel %vm1112, %v3385, 0.0
        %v3388 = vadd.f32 %v3386, %v3387
        %3389 = vadd.xlane.f32.xlu0 %v3388
        %v3390 = vpop.xlane.xlu0 %3389
        %v3391 = vmul.f32 %v3390, 0.00390625
        %v3392 = vadd.f32 %v3391, 1e-05
        %v3393 = vrsqrt.pop %v3392
        %v3394 = vmul.f32 %v3382, %v3393
        %v3395 = vmul.f32 %v3383, %v3393
        %vm3396 = vcmp.ge.f32.partialorder %v3394, 0.0
        %vm3397 = vcmp.ge.f32.partialorder %v3395, 0.0
        %v3398 = vstv %s709
        %v3399 = vmul.f32 %v3398, %v3394
        %v3400 = vmul.f32 %v3398, %v3395
        %v3401 = vsel %vm3396, %v3394, %v3399
        %v3402 = vsel %vm3397, %v3395, %v3400
        %3405 = vrot.lane.b32.xlu0 %v3401, 17
        %v3406 = vpop.permute.xlu0 %3405
        %3407 = vrot.lane.b32.xlu0 %v3402, 17
        %v3408 = vpop.permute.xlu0 %3407
        %v3409 = vsel %vm717, %v3406, %v3408
        %3413 = vst.msk [vmem:[#allocation2] sm:$0xf] %vm722, %v3406
        %3414 = vst [vmem:[#allocation2 + $0x8] sm:$0xf] %v3409
        %3415 = vst.msk [vmem:[#allocation2 + $0x10] sm:$0xf] %vm725, %v3408
        %v3416 = vld [vmem:[#allocation2] sm:$0xf]
        %v3417 = vld [vmem:[#allocation2 + $0x8] sm:$0xf]
        %v3418 = vld [vmem:[%s1] ss:$8 sm:$0x3]
        %v3420 = vlaneseq
        %v3421 = vshrl.u32 %v3420, 7
        %v3422 = vsub.s32 0, %v3421
        %v3423 = vrot.slane %v3418, %v3422
        %v3424 = vlaneseq
        %v3425 = vshrl.u32 %v3424, 7
        %v3426 = vsub.s32 1, %v3425
        %v3427 = vrot.slane %v3418, %v3426
        %v3430 = vmul.f32 %v3416, %v3423
        %v3431 = vmul.f32 %v3417, %v3427
        %3432 = vst [vmem:[#allocation4] sm:$0xf] %v3430
        %3433 = vst [vmem:[#allocation4 + $0x8] sm:$0xf] %v3431
        %v3434 = vld [vmem:[#allocation2] sm:$0xf]
        %v3435 = vld [vmem:[#allocation2 + $0x8] sm:$0xf]
        %v3436 = vld [vmem:[#allocation2 + $0x10] sm:$0xf]
        %v3437 = vld [vmem:[%s748] ss:$8 sm:$0x3]
        %v3439 = vlaneseq
        %v3440 = vshrl.u32 %v3439, 7
        %v3441 = vsub.s32 0, %v3440
        %v3442 = vrot.slane %v3437, %v3441
        %v3443 = vlaneseq
        %v3444 = vshrl.u32 %v3443, 7
        %v3445 = vsub.s32 1, %v3444
        %v3446 = vrot.slane %v3437, %v3445
        %3447 = vrot.lane.b32.xlu0 %v3442, 1
        %v3448 = vpop.permute.xlu0 %3447
        %3449 = vrot.lane.b32.xlu0 %v3446, 1
        %v3450 = vpop.permute.xlu0 %3449
        %v3451 = vsel %vm763, %v3448, %v3450
        %v3455 = vmul.f32 %v3434, %v3448
        %v3456 = vmul.f32 %v3435, %v3451
        %v3457 = vmul.f32 %v3436, %v3450
        %v3461 = vrot.slane %v3455, 4
        %v3462 = vrot.slane %v3456, 4
        %v3463 = vrot.slane %v3457, 4
        %3464 = vrot.lane.b32.xlu0 %v3461, 127
        %v3465 = vpop.permute.xlu0 %3464
        %3466 = vrot.lane.b32.xlu0 %v3462, 127
        %v3467 = vpop.permute.xlu0 %3466
        %3468 = vrot.lane.b32.xlu0 %v3463, 127
        %v3469 = vpop.permute.xlu0 %3468
        %v3470 = vsel %vm783, %v3465, %v3467
        %v3471 = vsel %vm783, %v3467, %v3469
        %3474 = vst [vmem:[#allocation4] sm:$0xf0] %v3470
        %3475 = vst [vmem:[#allocation4 + $0x8] sm:$0xf0] %v3471
        %v3476 = vld [vmem:[#allocation2] sm:$0xf]
        %v3477 = vld [vmem:[#allocation2 + $0x8] sm:$0xf]
        %v3478 = vld [vmem:[#allocation2 + $0x10] sm:$0xf]
        %v3479 = vld [vmem:[%s793] ss:$8 sm:$0x3]
        %v3481 = vlaneseq
        %v3482 = vshrl.u32 %v3481, 7
        %v3483 = vsub.s32 0, %v3482
        %v3484 = vrot.slane %v3479, %v3483
        %v3485 = vlaneseq
        %v3486 = vshrl.u32 %v3485, 7
        %v3487 = vsub.s32 1, %v3486
        %v3488 = vrot.slane %v3479, %v3487
        %3489 = vrot.lane.b32.xlu0 %v3484, 2
        %v3490 = vpop.permute.xlu0 %3489
        %3491 = vrot.lane.b32.xlu0 %v3488, 2
        %v3492 = vpop.permute.xlu0 %3491
        %v3493 = vsel %vm808, %v3490, %v3492
        %v3497 = vmul.f32 %v3476, %v3490
        %v3498 = vmul.f32 %v3477, %v3493
        %v3499 = vmul.f32 %v3478, %v3492
        %3503 = vrot.lane.b32.xlu0 %v3497, 126
        %v3504 = vpop.permute.xlu0 %3503
        %3505 = vrot.lane.b32.xlu0 %v3498, 126
        %v3506 = vpop.permute.xlu0 %3505
        %3507 = vrot.lane.b32.xlu0 %v3499, 126
        %v3508 = vpop.permute.xlu0 %3507
        %v3509 = vsel %vm825, %v3504, %v3506
        %v3510 = vsel %vm825, %v3506, %v3508
        %3513 = vst [vmem:[#allocation4 + $0x10] sm:$0xf] %v3509
        %3514 = vst [vmem:[#allocation4 + $0x18] sm:$0xf] %v3510
        %v3515 = vld [vmem:[#allocation2] sm:$0xf]
        %v3516 = vld [vmem:[#allocation2 + $0x8] sm:$0xf]
        %v3517 = vld [vmem:[#allocation2 + $0x10] sm:$0xf]
        %v3518 = vld [vmem:[%s835] ss:$8 sm:$0x3]
        %v3520 = vlaneseq
        %v3521 = vshrl.u32 %v3520, 7
        %v3522 = vsub.s32 0, %v3521
        %v3523 = vrot.slane %v3518, %v3522
        %v3524 = vlaneseq
        %v3525 = vshrl.u32 %v3524, 7
        %v3526 = vsub.s32 1, %v3525
        %v3527 = vrot.slane %v3518, %v3526
        %3528 = vrot.lane.b32.xlu0 %v3523, 16
        %v3529 = vpop.permute.xlu0 %3528
        %3530 = vrot.lane.b32.xlu0 %v3527, 16
        %v3531 = vpop.permute.xlu0 %3530
        %v3532 = vsel %vm850, %v3529, %v3531
        %v3536 = vmul.f32 %v3515, %v3529
        %v3537 = vmul.f32 %v3516, %v3532
        %v3538 = vmul.f32 %v3517, %v3531
        %v3542 = vrot.slane %v3536, 4
        %v3543 = vrot.slane %v3537, 4
        %v3544 = vrot.slane %v3538, 4
        %3545 = vrot.lane.b32.xlu0 %v3542, 112
        %v3546 = vpop.permute.xlu0 %3545
        %3547 = vrot.lane.b32.xlu0 %v3543, 112
        %v3548 = vpop.permute.xlu0 %3547
        %3549 = vrot.lane.b32.xlu0 %v3544, 112
        %v3550 = vpop.permute.xlu0 %3549
        %v3551 = vsel %vm870, %v3546, %v3548
        %v3552 = vsel %vm870, %v3548, %v3550
        %3555 = vst [vmem:[#allocation4 + $0x10] sm:$0xf0] %v3551
        %3556 = vst [vmem:[#allocation4 + $0x18] sm:$0xf0] %v3552
        %v3557 = vld [vmem:[#allocation2] sm:$0xf]
        %v3558 = vld [vmem:[#allocation2 + $0x8] sm:$0xf]
        %v3559 = vld [vmem:[#allocation2 + $0x10] sm:$0xf]
        %v3560 = vld [vmem:[%s880] ss:$8 sm:$0x3]
        %v3562 = vlaneseq
        %v3563 = vshrl.u32 %v3562, 7
        %v3564 = vsub.s32 0, %v3563
        %v3565 = vrot.slane %v3560, %v3564
        %v3566 = vlaneseq
        %v3567 = vshrl.u32 %v3566, 7
        %v3568 = vsub.s32 1, %v3567
        %v3569 = vrot.slane %v3560, %v3568
        %3570 = vrot.lane.b32.xlu0 %v3565, 17
        %v3571 = vpop.permute.xlu0 %3570
        %3572 = vrot.lane.b32.xlu0 %v3569, 17
        %v3573 = vpop.permute.xlu0 %3572
        %v3574 = vsel %vm717, %v3571, %v3573
        %v3578 = vmul.f32 %v3557, %v3571
        %v3579 = vmul.f32 %v3558, %v3574
        %v3580 = vmul.f32 %v3559, %v3573
        %3584 = vrot.lane.b32.xlu0 %v3578, 111
        %v3585 = vpop.permute.xlu0 %3584
        %3586 = vrot.lane.b32.xlu0 %v3579, 111
        %v3587 = vpop.permute.xlu0 %3586
        %3588 = vrot.lane.b32.xlu0 %v3580, 111
        %v3589 = vpop.permute.xlu0 %3588
        %v3590 = vsel %vm911, %v3585, %v3587
        %v3591 = vsel %vm911, %v3587, %v3589
        %3594 = vst [vmem:[#allocation4 + $0x20] sm:$0xf] %v3590
        %3595 = vst [vmem:[#allocation4 + $0x28] sm:$0xf] %v3591
        %v3596 = vld [vmem:[#allocation2] sm:$0xf]
        %v3597 = vld [vmem:[#allocation2 + $0x8] sm:$0xf]
        %v3598 = vld [vmem:[#allocation2 + $0x10] sm:$0xf]
        %v3599 = vld [vmem:[%s921] ss:$8 sm:$0x3]
        %v3601 = vlaneseq
        %v3602 = vshrl.u32 %v3601, 7
        %v3603 = vsub.s32 0, %v3602
        %v3604 = vrot.slane %v3599, %v3603
        %v3605 = vlaneseq
        %v3606 = vshrl.u32 %v3605, 7
        %v3607 = vsub.s32 1, %v3606
        %v3608 = vrot.slane %v3599, %v3607
        %3609 = vrot.lane.b32.xlu0 %v3604, 18
        %v3610 = vpop.permute.xlu0 %3609
        %3611 = vrot.lane.b32.xlu0 %v3608, 18
        %v3612 = vpop.permute.xlu0 %3611
        %v3613 = vsel %vm936, %v3610, %v3612
        %v3617 = vmul.f32 %v3596, %v3610
        %v3618 = vmul.f32 %v3597, %v3613
        %v3619 = vmul.f32 %v3598, %v3612
        %v3623 = vrot.slane %v3617, 4
        %v3624 = vrot.slane %v3618, 4
        %v3625 = vrot.slane %v3619, 4
        %3626 = vrot.lane.b32.xlu0 %v3623, 110
        %v3627 = vpop.permute.xlu0 %3626
        %3628 = vrot.lane.b32.xlu0 %v3624, 110
        %v3629 = vpop.permute.xlu0 %3628
        %3630 = vrot.lane.b32.xlu0 %v3625, 110
        %v3631 = vpop.permute.xlu0 %3630
        %v3632 = vsel %vm956, %v3627, %v3629
        %v3633 = vsel %vm956, %v3629, %v3631
        %3636 = vst [vmem:[#allocation4 + $0x20] sm:$0xf0] %v3632
        %3637 = vst [vmem:[#allocation4 + $0x28] sm:$0xf0] %v3633
        %v3638 = vld [vmem:[#allocation2] sm:$0xf]
        %v3639 = vld [vmem:[#allocation2 + $0x8] sm:$0xf]
        %v3640 = vld [vmem:[#allocation2 + $0x10] sm:$0xf]
        %v3641 = vld [vmem:[%s966] ss:$8 sm:$0x3]
        %v3643 = vlaneseq
        %v3644 = vshrl.u32 %v3643, 7
        %v3645 = vsub.s32 0, %v3644
        %v3646 = vrot.slane %v3641, %v3645
        %v3647 = vlaneseq
        %v3648 = vshrl.u32 %v3647, 7
        %v3649 = vsub.s32 1, %v3648
        %v3650 = vrot.slane %v3641, %v3649
        %3651 = vrot.lane.b32.xlu0 %v3646, 32
        %v3652 = vpop.permute.xlu0 %3651
        %3653 = vrot.lane.b32.xlu0 %v3650, 32
        %v3654 = vpop.permute.xlu0 %3653
        %v3655 = vsel %vm981, %v3652, %v3654
        %v3659 = vmul.f32 %v3638, %v3652
        %v3660 = vmul.f32 %v3639, %v3655
        %v3661 = vmul.f32 %v3640, %v3654
        %3665 = vrot.lane.b32.xlu0 %v3659, 96
        %v3666 = vpop.permute.xlu0 %3665
        %3667 = vrot.lane.b32.xlu0 %v3660, 96
        %v3668 = vpop.permute.xlu0 %3667
        %3669 = vrot.lane.b32.xlu0 %v3661, 96
        %v3670 = vpop.permute.xlu0 %3669
        %v3671 = vsel %vm998, %v3666, %v3668
        %v3672 = vsel %vm998, %v3668, %v3670
        %3675 = vst [vmem:[#allocation4 + $0x30] sm:$0xf] %v3671
        %3676 = vst [vmem:[#allocation4 + $0x38] sm:$0xf] %v3672
        %v3677 = vld [vmem:[#allocation2] sm:$0xf]
        %v3678 = vld [vmem:[#allocation2 + $0x8] sm:$0xf]
        %v3679 = vld [vmem:[#allocation2 + $0x10] sm:$0xf]
        %v3680 = vld [vmem:[%s1008] ss:$8 sm:$0x3]
        %v3682 = vlaneseq
        %v3683 = vshrl.u32 %v3682, 7
        %v3684 = vsub.s32 0, %v3683
        %v3685 = vrot.slane %v3680, %v3684
        %v3686 = vlaneseq
        %v3687 = vshrl.u32 %v3686, 7
        %v3688 = vsub.s32 1, %v3687
        %v3689 = vrot.slane %v3680, %v3688
        %3690 = vrot.lane.b32.xlu0 %v3685, 33
        %v3691 = vpop.permute.xlu0 %3690
        %3692 = vrot.lane.b32.xlu0 %v3689, 33
        %v3693 = vpop.permute.xlu0 %3692
        %v3694 = vsel %vm1023, %v3691, %v3693
        %v3698 = vmul.f32 %v3677, %v3691
        %v3699 = vmul.f32 %v3678, %v3694
        %v3700 = vmul.f32 %v3679, %v3693
        %v3704 = vrot.slane %v3698, 4
        %v3705 = vrot.slane %v3699, 4
        %v3706 = vrot.slane %v3700, 4
        %3707 = vrot.lane.b32.xlu0 %v3704, 95
        %v3708 = vpop.permute.xlu0 %3707
        %3709 = vrot.lane.b32.xlu0 %v3705, 95
        %v3710 = vpop.permute.xlu0 %3709
        %3711 = vrot.lane.b32.xlu0 %v3706, 95
        %v3712 = vpop.permute.xlu0 %3711
        %v3713 = vsel %vm1043, %v3708, %v3710
        %v3714 = vsel %vm1043, %v3710, %v3712
        %3717 = vst [vmem:[#allocation4 + $0x30] sm:$0xf0] %v3713
        %3718 = vst [vmem:[#allocation4 + $0x38] sm:$0xf0] %v3714
        %v3719 = vld [vmem:[#allocation2] sm:$0xf]
        %v3720 = vld [vmem:[#allocation2 + $0x8] sm:$0xf]
        %v3721 = vld [vmem:[#allocation2 + $0x10] sm:$0xf]
        %v3722 = vld [vmem:[%s1053] ss:$8 sm:$0x3]
        %v3724 = vlaneseq
        %v3725 = vshrl.u32 %v3724, 7
        %v3726 = vsub.s32 0, %v3725
        %v3727 = vrot.slane %v3722, %v3726
        %v3728 = vlaneseq
        %v3729 = vshrl.u32 %v3728, 7
        %v3730 = vsub.s32 1, %v3729
        %v3731 = vrot.slane %v3722, %v3730
        %3732 = vrot.lane.b32.xlu0 %v3727, 34
        %v3733 = vpop.permute.xlu0 %3732
        %3734 = vrot.lane.b32.xlu0 %v3731, 34
        %v3735 = vpop.permute.xlu0 %3734
        %v3736 = vsel %vm700, %v3733, %v3735
        %v3740 = vmul.f32 %v3719, %v3733
        %v3741 = vmul.f32 %v3720, %v3736
        %v3742 = vmul.f32 %v3721, %v3735
        %3746 = vrot.lane.b32.xlu0 %v3740, 94
        %v3747 = vpop.permute.xlu0 %3746
        %3748 = vrot.lane.b32.xlu0 %v3741, 94
        %v3749 = vpop.permute.xlu0 %3748
        %3750 = vrot.lane.b32.xlu0 %v3742, 94
        %v3751 = vpop.permute.xlu0 %3750
        %v3752 = vsel %vm1084, %v3747, %v3749
        %v3753 = vsel %vm1084, %v3749, %v3751
        %3756 = vst [vmem:[#allocation4 + $0x40] sm:$0xf] %v3752
        %3757 = vst [vmem:[#allocation4 + $0x48] sm:$0xf] %v3753
        %v3758 = vld [vmem:[%s19] sm:$0xf]
        %v3759 = vld [vmem:[#allocation4] sm:$0xff]
        %v3760 = vld [vmem:[#allocation4 + $0x8] sm:$0xff]
        %v3761 = vld [vmem:[#allocation4 + $0x10] sm:$0xff]
        %v3762 = vld [vmem:[#allocation4 + $0x18] sm:$0xff]
        %v3763 = vld [vmem:[#allocation4 + $0x20] sm:$0xff]
        %v3764 = vld [vmem:[#allocation4 + $0x28] sm:$0xff]
        %v3765 = vld [vmem:[#allocation4 + $0x30] sm:$0xff]
        %v3766 = vld [vmem:[#allocation4 + $0x38] sm:$0xff]
        %v3767 = vld [vmem:[#allocation4 + $0x40] sm:$0xf]
        %v3768 = vld [vmem:[#allocation4 + $0x48] sm:$0xf]
        %v3769 = vld [vmem:[%s20] sm:$0xf]
        %3771 = vset.pattern.permute.xlu0 0
        %3772 = vperm.xlu0 %3771, %v3769
        %v3773 = vpop.permute.xlu0 %3772
        %v3776 = vsel %vm1108, %v3758, 0
        %v3779 = vsel %vm1112, %v3767, 0
        %v3782 = vsel %vm1112, %v3768, 0
        %3784 = vmatprep.subr.mxu0 %v3760
        %3785 = vmatpush1.msra.mxu0 %v3759
        %3786 = vmatprep.subr.mxu0 %v3762
        %3787 = vmatpush1.msra.mxu0 %v3761
        %3788 = vmatprep.subr.mxu0 %v3764
        %3789 = vmatpush1.msra.mxu0 %v3763
        %3790 = vmatprep.subr.mxu0 %v3766
        %3791 = vmatpush1.msra.mxu0 %v3765
        %3792 = vmatprep.subr.mxu0 %v3782
        %3793 = vmatpush1.msra.mxu0 %v3779
        %3794 = vmatprep.subr.mxu0 0.0
        %3795 = vmatpush1.msra.mxu0 0.0
        %3796 = vmatprep.subr.mxu0 0.0
        %3797 = vmatpush1.msra.mxu0 0.0
        %3798 = vmatprep.subr.mxu0 0.0
        %3799 = vmatpush1.msra.mxu0 0.0
        %3800 = vmatprep.subr.mxu0 0.0
        %3801 = vmatpush1.msra.mxu0 0.0
        %3802 = vmatprep.subr.mxu0 0.0
        %3803 = vmatpush1.msra.mxu0 0.0
        %3804 = vmatprep.subr.mxu0 0.0
        %3805 = vmatpush1.msra.mxu0 0.0
        %3806 = vmatprep.subr.mxu0 0.0
        %3807 = vmatpush1.msra.mxu0 0.0
        %3808 = vmatprep.subr.mxu0 0.0
        %3809 = vmatpush1.msra.mxu0 0.0
        %3810 = vmatprep.subr.mxu0 0.0
        %3811 = vmatpush1.msra.mxu0 0.0
        %3812 = vmatprep.subr.mxu0 0.0
        %3813 = vmatpush1.msra.mxu0 0.0
        %3814 = vmatprep.subr.mxu0 0.0
        %3815 = vmatpush1.msra.mxu0 0.0
        %3816 = vmatprep.subr.mxu0 0.0
        %3817 = vmatpush1.msra.mxu0 0.0
        %3818 = vmatprep.subr.mxu0 0.0
        %3819 = vmatpush1.msra.mxu0 0.0
        %3820 = vmatprep.subr.mxu0 0.0
        %3821 = vmatpush1.msra.mxu0 0.0
        %3822 = vmatprep.subr.mxu0 0.0
        %3823 = vmatpush1.msra.mxu0 0.0
        %3824 = vmatprep.subr.mxu0 0.0
        %3825 = vmatpush1.msra.mxu0 0.0
        %3826 = vmatprep.subr.mxu0 0.0
        %3827 = vmatpush1.msra.mxu0 0.0
        %3828 = vmatprep.subr.mxu0 0.0
        %3829 = vmatpush1.msra.mxu0 0.0
        %3830 = vmatprep.subr.mxu0 0.0
        %3831 = vmatpush1.msra.mxu0 0.0
        %3832 = vmatprep.subr.mxu0 0.0
        %3833 = vmatpush1.msra.mxu0 0.0
        %3834 = vmatprep.subr.mxu0 0.0
        %3835 = vmatpush1.msra.mxu0 0.0
        %3836 = vmatprep.subr.mxu0 0.0
        %3837 = vmatpush1.msra.mxu0 0.0
        %3838 = vmatprep.subr.mxu0 0.0
        %3839 = vmatpush1.msra.mxu0 0.0
        %3840 = vmatprep.subr.mxu0 0.0
        %3841 = vmatpush1.msra.mxu0 0.0
        %3842 = vmatprep.subr.mxu0 0.0
        %3843 = vmatpush1.msra.mxu0 0.0
        %3844 = vmatprep.subr.mxu0 0.0
        %3845 = vmatpush1.msra.mxu0 0.0
        %3846 = vmatprep.subr.mxu0 0.0
        %3847 = vmatpush1.msra.mxu0 0.0
        %3848 = vmatprep.mubr.f32.mxu0 0.0
        %3849 = vmatmul.mubr.f32.gmra.mrb[0].mxu0 %v3776
        %v3850 = vpop.f32.mrb[0].mxu0
        %v3851 = vadd.f32 %v3773, %v3850
        %v3852 = vpop.f32.mrb[0].mxu0
        %v3853 = vadd.f32 %v3773, %v3852
        %3854 = vdwg.mxu0
        %v3855 = vadd.f32 %v3851, %v3401
        %v3856 = vadd.f32 %v3853, %v3402
        %v3859 = vcombine.low %v3855, %v3856
        %3861 = vst [vmem:[%s697] sm:$0xff] %v3859
        %p3862 = scmp.lt.s32.totalorder %s34, 1
        %s3863 = scalar_select %p3862, %s34, 1
        %s3864 = smul.addr %s3863, 2
        %s3865 = smul.addr %s3864, 4
        %s3866 = scalar_lea.vmem %s22, %s3865
        // Predicated region
        $region113: #{custom_autoencoder_forward.1} parent=107 // pred_check
          %p3867 = pneg %p519
        $region114: #{custom_autoencoder_forward.1} parent=107 // pred_check_branch
          %3869 = sbr.rel (%p3867) target = $region116
        $region115: #{custom_autoencoder_forward.1} parent=107 // pred_region
          _
        $region116: #{custom_autoencoder_forward.1} parent=107 // pred_fallthru
          _
      $region108: #{custom_autoencoder_forward.1} parent=5 // pred_fallthru
        _
      %p3870 = scmp.le.s32.totalorder 2, %s29
      // Predicated region
      $region117: #{custom_autoencoder_forward.1} parent=5 // pred_check
        %p3871 = pneg %p3870
      $region118: #{custom_autoencoder_forward.1} parent=5 // pred_check_branch
        %3873 = sbr.rel (%p3871) target = $region120
      $region119: #{custom_autoencoder_forward.1} parent=5 // pred_region
        %s3874 = ssub.s32 %s29, 2
        // Predicated region
        $region121: #{custom_autoencoder_forward.1} parent=119 // pred_check
          %p3875 = pneg %p525
        $region122: #{custom_autoencoder_forward.1} parent=119 // pred_check_branch
          %3877 = sbr.rel (%p3875) target = $region124
        $region123: #{custom_autoencoder_forward.1} parent=119 // pred_region
          %p3878 = scmp.lt.s32.totalorder %s35, 1
          %s3879 = scalar_select %p3878, %s35, 1
          %s3880 = smul.addr %s3879, 2
          %s3881 = smul.addr %s3880, 4
          %s3882 = scalar_lea.vmem %s22, %s3881
        $region124: #{custom_autoencoder_forward.1} parent=119 // pred_fallthru
          _
      $region120: #{custom_autoencoder_forward.1} parent=5 // pred_fallthru
        _
    $region6: #{custom_autoencoder_forward.1} parent=1 // loop_footer
      %s33 = sadd.s32 1, %s29
    $region7: #{custom_autoencoder_forward.1} parent=1 // loop_footer_branch
      %28 = sbr.rel target = $region3
    $region8: #{custom_autoencoder_forward.1} parent=1 // loop_exit
      _
    %3883 = vsyncpa [#allocation9], 1
    %s3884 = scalar_lea.sflag [#allocation9], 1
    %3885 = vsyncpa %s3884, 1

</llo_original>
